<compile_context>
chip_gen: v7x
topology: tpu7x:2x2x1
jax: 0.10.0
libtpu: 0.0.40
codegen_flags: <defaults>
</compile_context>

<pallas_src>
import math

import jax
import jax.numpy as jnp
from jax.experimental import pallas as pl
from jax.experimental.pallas import tpu as pltpu


def _cdiv(a, b):
    return -(-a // b)


def _vmem_block_bytes(rows, cols, itemsize):
    """VMEM footprint of a (rows, cols) block under (sublane, 128)-lane tiling."""
    sublane = 8 if itemsize >= 4 else (16 if itemsize == 2 else 32)
    return (_cdiv(max(rows, 1), sublane) * sublane
            * _cdiv(max(cols, 1), 128) * 128 * itemsize)


def _vmem_cap_bytes():
    """~80% of physical VMEM: ~51 MiB on v7x (64 MiB), ~102 MiB on v5e/v6e (128 MiB)."""
    phys = 64 * 1024 * 1024
    try:
        info = pltpu.get_tpu_info()
        v = getattr(info, "vmem_capacity_bytes", None)
        if v:
            phys = int(v)
    except Exception:
        pass
    return (phys * 4) // 5


def init_params(channel, key):
    """Parameters matching EFM(channel) in inference mode."""
    k1, k2, k3, k4, k5, k6 = jax.random.split(key, 6)

    # Conv2d(channel, channel, 3, padding=1, bias=False): weight (Cout, Cin, 3, 3)
    w2d = 0.1 * jax.random.normal(k1, (channel, channel, 3, 3), jnp.float32)
    # tap layout: taps[dy*3+dx, cin, cout]
    taps = jnp.transpose(w2d, (2, 3, 1, 0)).reshape(9, channel, channel)

    # BatchNorm2d(channel): fold running stats + affine into per-channel scale/bias.
    # TODO(synk): train-mode batch statistics (cross-batch reduction) are not reproduced.
    gamma = 1.0 + 0.1 * jax.random.normal(k2, (channel,), jnp.float32)
    beta = 0.1 * jax.random.normal(k3, (channel,), jnp.float32)
    running_mean = 0.1 * jax.random.normal(k4, (channel,), jnp.float32)
    running_var = 1.0 + 0.1 * jax.random.uniform(k5, (channel,), jnp.float32)
    eps = 1e-5
    scale = gamma / jnp.sqrt(running_var + eps)
    bias = beta - running_mean * scale

    # Conv1d(1, 1, k, padding=(k-1)//2, bias=False), ECA-style kernel size.
    t = int(abs((math.log(channel, 2) + 1) / 2))
    k_size = t if t % 2 else t + 1
    pad = (k_size - 1) // 2
    w1d = 0.5 * jax.random.normal(k6, (k_size,), jnp.float32)
    # banded (C, C) matrix so that wei = pooled @ m1d reproduces the 1-D conv.
    idx_p = jnp.arange(channel)[:, None]
    idx_c = jnp.arange(channel)[None, :]
    j = idx_p - idx_c + pad
    valid = (j >= 0) & (j < k_size)
    m1d = jnp.where(valid, w1d[jnp.clip(j, 0, k_size - 1)], 0.0).astype(jnp.float32)

    # Kernel-ready weights: fold BN scale into the taps along cout *before* the
    # bf16 cast; only the bias remains a separate kernel input.
    taps_folded = (taps * scale[None, None, :]).astype(jnp.bfloat16)

    return {
        "wconv_taps": taps,                          # (9, Cin, Cout) f32 (reference)
        "wconv_folded": taps_folded,                 # (9, Cin, Cout) bf16 (kernel)
        "bn_scale": scale.reshape(1, channel),       # (1, C) f32 (reference)
        "bn_bias": bias.reshape(1, channel),         # (1, C) f32
        "m1d": m1d,                                  # (C, C) f32
    }


def efm_forward(c, att, params, tile_rows=None):
    """c: (B, C, H, W) f32; att: (B, 1 or C, H', W') f32. Returns (B, C, H, W) f32."""
    B, C, H, W = c.shape
    if att.shape[2:] != (H, W):
        # F.interpolate(att, (H, W), mode='bilinear', align_corners=False)
        # TODO(synk): jax.image.resize matches align_corners=False only for upsampling.
        att = jax.image.resize(att, (att.shape[0], att.shape[1], H, W),
                               method="bilinear")
    if att.shape[1] not in (1, C):
        raise ValueError("att channels must be 1 or match c")

    Wp = W + 2                              # zero-padded row width
    if tile_rows is None:                   # ~2 MiB bf16 x-tiles (lane-padded)
        lane_c = _cdiv(C, 128) * 128
        tile_rows = max(1, min(H, (2 * 1024 * 1024) // max(Wp * lane_c * 2, 1)))
    TH = int(tile_rows)
    n_ht = _cdiv(H, TH)
    H_pad = n_ht * TH
    Mt = TH * Wp                            # conv-output rows per tile (flat, padded width)
    Rt = (TH + 3) * Wp                      # input rows per tile (1 top halo + 2 bottom halo/overrun)

    # ---- wrapper: x = c*att + c fused with pad / NHWC transpose / bf16 cast / tiling ----
    x = c * att + c                         # att broadcasts over channels if 1-channel
    xp = jnp.pad(x, ((0, 0), (0, 0), (1, (H_pad - H) + 2), (1, 1)))   # (B, C, H_pad+3, Wp)
    xp = jnp.transpose(xp, (0, 2, 3, 1)).astype(jnp.bfloat16)         # (B, H_pad+3, Wp, C)
    x_tiles = jnp.stack([xp[:, t * TH:t * TH + TH + 3] for t in range(n_ht)], axis=1)
    x_tiles = x_tiles.reshape(B, n_ht, Rt, C)    # single bf16 input; halo already zero in HBM

    inv_hw = 1.0 / float(H * W)

    # -------- pass 1: 3x3 conv + folded BN + ReLU + masked partial pool --------
    def conv_kernel(x_ref, w_ref, bias_ref, y_ref, pool_ref):
        t = pl.program_id(1)
        # 9 row-shifted flat taps, each a (Mt, C) @ (C, C) bf16 MXU matmul, f32 accumulate.
        acc = jnp.zeros((Mt, C), jnp.float32)
        for dy in range(3):
            for dx in range(3):
                tap = x_ref[pl.ds(dy * Wp + dx, Mt), :]          # bf16, straight to MXU
                acc = acc + jnp.dot(tap, w_ref[dy * 3 + dx],
                                    preferred_element_type=jnp.float32)
        # BN scale already folded into w_ref; add bias + ReLU.
        y = jnp.maximum(acc + bias_ref[...], 0.0)
        # In-kernel valid-pixel mask (no DMA'd mask array), applied only to the
        # pooled path: stored pad-column / pad-row outputs are garbage and are
        # sliced off by the wrapper.
        q = jax.lax.broadcasted_iota(jnp.int32, (1, Mt), 1)
        col_ok = (q % Wp) < W
        row_ok = q < (H - t * TH) * Wp
        mask_row = (col_ok & row_ok).astype(jnp.float32)
        # Masked pool as an MXU reduction instead of a cross-sublane XLU sum.
        pool_ref[...] = jnp.dot(mask_row, y, preferred_element_type=jnp.float32)
        y_ref[...] = y.astype(y_ref.dtype)

    cap = _vmem_cap_bytes()
    need_a = (2 * (_vmem_block_bytes(Rt, C, 2)           # x tile (double buffered)
                   + _vmem_block_bytes(Mt, C, 2)         # y tile out
                   + _vmem_block_bytes(1, C, 4)          # partial pool out
                   + 9 * _vmem_block_bytes(C, C, 2)      # folded taps
                   + _vmem_block_bytes(1, C, 4))         # bias
              + 4 * _vmem_block_bytes(Mt, C, 4))         # acc / y / temporaries
    vmem_a = int(min(max((need_a * 5) // 4, 32 * 1024 * 1024), cap))

    y_tiles, pool_part = pl.pallas_call(
        conv_kernel,
        out_shape=(jax.ShapeDtypeStruct((B, n_ht, Mt, C), jnp.bfloat16),
                   jax.ShapeDtypeStruct((B, n_ht, 1, C), jnp.float32)),
        grid_spec=pltpu.PrefetchScalarGridSpec(
            num_scalar_prefetch=0,
            grid=(B, n_ht),
            in_specs=[
                pl.BlockSpec((None, None, Rt, C), lambda b, t: (b, t, 0, 0)),  # x tile (bf16)
                pl.BlockSpec((9, C, C), lambda b, t: (0, 0, 0)),               # folded taps
                pl.BlockSpec((1, C), lambda b, t: (0, 0)),                     # bn bias
            ],
            out_specs=[
                pl.BlockSpec((None, None, Mt, C), lambda b, t: (b, t, 0, 0)),  # y tile (bf16)
                pl.BlockSpec((None, None, 1, C), lambda b, t: (b, t, 0, 0)),   # partial pool
            ],
        ),
        compiler_params=pltpu.CompilerParams(
            dimension_semantics=("parallel", "parallel"),
            vmem_limit_bytes=vmem_a),
    )(x_tiles, params["wconv_folded"], params["bn_bias"])

    # ---- tiny glue in XLA: finish pool, ECA Conv1d(1,1,k) as banded matmul, sigmoid ----
    pooled = jnp.sum(pool_part[:, :, 0, :], axis=1) * inv_hw      # (B, C)
    wei = jax.nn.sigmoid(pooled @ params["m1d"])                  # (B, C)
    wei = wei[:, None, :]                                         # (B, 1, C)

    # -------- pass 2: per-(batch, channel) rescale of the ConvBNR output --------
    def scale_kernel(y_ref, wei_ref, out_ref):
        out_ref[...] = (y_ref[...].astype(jnp.float32) * wei_ref[...]).astype(out_ref.dtype)

    need_b = (2 * (_vmem_block_bytes(Mt, C, 2) + _vmem_block_bytes(1, C, 4)
                   + _vmem_block_bytes(Mt, C, 4))
              + 2 * _vmem_block_bytes(Mt, C, 4))
    vmem_b = int(min(max((need_b * 5) // 4, 32 * 1024 * 1024), cap))

    out_tiles = pl.pallas_call(
        scale_kernel,
        out_shape=jax.ShapeDtypeStruct((B, n_ht, Mt, C), jnp.float32),
        grid_spec=pltpu.PrefetchScalarGridSpec(
            num_scalar_prefetch=0,
            grid=(B, n_ht),
            in_specs=[
                pl.BlockSpec((None, None, Mt, C), lambda b, t: (b, t, 0, 0)),  # y tile (bf16)
                pl.BlockSpec((None, 1, C), lambda b, t: (b, 0, 0)),            # wei (per batch)
            ],
            out_specs=pl.BlockSpec((None, None, Mt, C), lambda b, t: (b, t, 0, 0)),
        ),
        compiler_params=pltpu.CompilerParams(
            dimension_semantics=("parallel", "parallel"),
            vmem_limit_bytes=vmem_b),
    )(y_tiles, wei)

    # drop pad rows/columns, back to NCHW
    out = out_tiles.reshape(B, H_pad, Wp, C)[:, :H, :W, :]
    return jnp.transpose(out, (0, 3, 1, 2))


def efm_reference(c, att, params):
    """Pure-JAX NCHW reference (inference-mode BN) for validation."""
    B, C, H, W = c.shape
    if att.shape[2:] != (H, W):
        att = jax.image.resize(att, (att.shape[0], att.shape[1], H, W),
                               method="bilinear")
    x = c * att + c
    xpad = jnp.pad(x, ((0, 0), (0, 0), (1, 1), (1, 1)))
    taps = params["wconv_taps"]                       # (9, Cin, Cout) f32
    y = jnp.zeros((B, C, H, W), jnp.float32)
    for dy in range(3):
        for dx in range(3):
            win = xpad[:, :, dy:dy + H, dx:dx + W]    # (B, Cin, H, W)
            y = y + jnp.einsum("bihw,io->bohw", win, taps[dy * 3 + dx],
                               precision="highest")
    y = y * params["bn_scale"].reshape(1, C, 1, 1) + params["bn_bias"].reshape(1, C, 1, 1)
    y = jnp.maximum(y, 0.0)
    pooled = jnp.mean(y, axis=(2, 3))                 # (B, C)
    wei = jax.nn.sigmoid(pooled @ params["m1d"])      # (B, C)
    return y * wei[:, :, None, None]


if __name__ == "__main__":
    key = jax.random.PRNGKey(0)
    kc, ka, kp = jax.random.split(key, 3)

    B, C, H, W = 2, 16, 16, 16
    c = jax.random.normal(kc, (B, C, H, W), jnp.float32)
    # coarser 1-channel attention map -> exercises the bilinear-resize branch
    att = jax.random.uniform(ka, (B, 1, 8, 8), jnp.float32)

    params = init_params(C, kp)
    out = jax.jit(efm_forward)(c, att, params)
    jax.block_until_ready(out)

    assert out.shape == (B, C, H, W)
    assert out.dtype == jnp.float32

    ref = efm_reference(c, att, params)
    max_err = float(jnp.max(jnp.abs(out - ref)))
    assert jnp.allclose(out, ref, rtol=3e-2, atol=3e-2), max_err

    print("KERNEL_OK")
</pallas_src>

<mosaic_0001>
module attributes {stable_mosaic.version = 11 : i64} {
  func.func @conv_kernel(%arg0: i32, %arg1: i32, %arg2: memref<1x1x342x16xbf16, #tpu.memory_space<vmem>>, %arg3: memref<9x16x16xbf16, #tpu.memory_space<vmem>>, %arg4: memref<1x16xf32, #tpu.memory_space<vmem>>, %arg5: memref<1x1x288x16xbf16, #tpu.memory_space<vmem>>, %arg6: memref<1x1x1x16xf32, #tpu.memory_space<vmem>>) attributes {dimension_semantics = [#tpu.dimension_semantics<parallel>, #tpu.dimension_semantics<parallel>], iteration_bounds = array<i64: 2, 1>, scalar_prefetch = 0 : i64, scratch_operands = 0 : i64, tpu.core_type = #tpu.core_type<tc>, window_params = [{transform_indices = @transform_0, window_bounds = array<i64: 1, 1, 342, 16>}, {pipeline_mode = #tpu.pipeline_mode<synchronous>, transform_indices = @transform_1, window_bounds = array<i64: 9, 16, 16>}, {pipeline_mode = #tpu.pipeline_mode<synchronous>, transform_indices = @transform_2, window_bounds = array<i64: 1, 16>}, {transform_indices = @transform_3, window_bounds = array<i64: 1, 1, 288, 16>}, {transform_indices = @transform_4, window_bounds = array<i64: 1, 1, 1, 16>}]} {
    %cst = arith.constant 0.000000e+00 : f32
    %0 = vector.broadcast %cst : f32 to vector<288x16xf32>
    %c0 = arith.constant 0 : index
    %c0_0 = arith.constant 0 : index
    %c0_1 = arith.constant 0 : index
    %c0_2 = arith.constant 0 : index
    %1 = vector.load %arg2[%c0, %c0_0, %c0_1, %c0_2] : memref<1x1x342x16xbf16, #tpu.memory_space<vmem>>, vector<1x1x288x16xbf16>
    %2 = vector.shape_cast %1 : vector<1x1x288x16xbf16> to vector<288x16xbf16>
    %c0_3 = arith.constant 0 : index
    %c0_4 = arith.constant 0 : index
    %c0_5 = arith.constant 0 : index
    %3 = vector.load %arg3[%c0_3, %c0_4, %c0_5] : memref<9x16x16xbf16, #tpu.memory_space<vmem>>, vector<1x16x16xbf16>
    %4 = vector.shape_cast %3 : vector<1x16x16xbf16> to vector<16x16xbf16>
    %cst_6 = arith.constant dense<0.000000e+00> : vector<288x16xf32>
    %5 = tpu.matmul %2, %4, %cst_6 {dimension_numbers = #tpu.dot_dimension_numbers<[1], [0], [0], [1], [0, 0, 1, 1], [], []>} : vector<288x16xbf16>, vector<16x16xbf16>, vector<288x16xf32> -> vector<288x16xf32>
    %6 = arith.addf %0, %5 : vector<288x16xf32>
    %c0_7 = arith.constant 0 : index
    %c0_8 = arith.constant 0 : index
    %c1 = arith.constant 1 : index
    %c0_9 = arith.constant 0 : index
    %7 = vector.load %arg2[%c0_7, %c0_8, %c1, %c0_9] : memref<1x1x342x16xbf16, #tpu.memory_space<vmem>>, vector<1x1x288x16xbf16>
    %8 = vector.shape_cast %7 : vector<1x1x288x16xbf16> to vector<288x16xbf16>
    %c1_10 = arith.constant 1 : index
    %c0_11 = arith.constant 0 : index
    %c0_12 = arith.constant 0 : index
    %9 = vector.load %arg3[%c1_10, %c0_11, %c0_12] : memref<9x16x16xbf16, #tpu.memory_space<vmem>>, vector<1x16x16xbf16>
    %10 = vector.shape_cast %9 : vector<1x16x16xbf16> to vector<16x16xbf16>
    %cst_13 = arith.constant dense<0.000000e+00> : vector<288x16xf32>
    %11 = tpu.matmul %8, %10, %cst_13 {dimension_numbers = #tpu.dot_dimension_numbers<[1], [0], [0], [1], [0, 0, 1, 1], [], []>} : vector<288x16xbf16>, vector<16x16xbf16>, vector<288x16xf32> -> vector<288x16xf32>
    %12 = arith.addf %6, %11 : vector<288x16xf32>
    %c0_14 = arith.constant 0 : index
    %c0_15 = arith.constant 0 : index
    %c2 = arith.constant 2 : index
    %c0_16 = arith.constant 0 : index
    %13 = vector.load %arg2[%c0_14, %c0_15, %c2, %c0_16] : memref<1x1x342x16xbf16, #tpu.memory_space<vmem>>, vector<1x1x288x16xbf16>
    %14 = vector.shape_cast %13 : vector<1x1x288x16xbf16> to vector<288x16xbf16>
    %c2_17 = arith.constant 2 : index
    %c0_18 = arith.constant 0 : index
    %c0_19 = arith.constant 0 : index
    %15 = vector.load %arg3[%c2_17, %c0_18, %c0_19] : memref<9x16x16xbf16, #tpu.memory_space<vmem>>, vector<1x16x16xbf16>
    %16 = vector.shape_cast %15 : vector<1x16x16xbf16> to vector<16x16xbf16>
    %cst_20 = arith.constant dense<0.000000e+00> : vector<288x16xf32>
    %17 = tpu.matmul %14, %16, %cst_20 {dimension_numbers = #tpu.dot_dimension_numbers<[1], [0], [0], [1], [0, 0, 1, 1], [], []>} : vector<288x16xbf16>, vector<16x16xbf16>, vector<288x16xf32> -> vector<288x16xf32>
    %18 = arith.addf %12, %17 : vector<288x16xf32>
    %c0_21 = arith.constant 0 : index
    %c0_22 = arith.constant 0 : index
    %c18 = arith.constant 18 : index
    %c0_23 = arith.constant 0 : index
    %19 = vector.load %arg2[%c0_21, %c0_22, %c18, %c0_23] : memref<1x1x342x16xbf16, #tpu.memory_space<vmem>>, vector<1x1x288x16xbf16>
    %20 = vector.shape_cast %19 : vector<1x1x288x16xbf16> to vector<288x16xbf16>
    %c3 = arith.constant 3 : index
    %c0_24 = arith.constant 0 : index
    %c0_25 = arith.constant 0 : index
    %21 = vector.load %arg3[%c3, %c0_24, %c0_25] : memref<9x16x16xbf16, #tpu.memory_space<vmem>>, vector<1x16x16xbf16>
    %22 = vector.shape_cast %21 : vector<1x16x16xbf16> to vector<16x16xbf16>
    %cst_26 = arith.constant dense<0.000000e+00> : vector<288x16xf32>
    %23 = tpu.matmul %20, %22, %cst_26 {dimension_numbers = #tpu.dot_dimension_numbers<[1], [0], [0], [1], [0, 0, 1, 1], [], []>} : vector<288x16xbf16>, vector<16x16xbf16>, vector<288x16xf32> -> vector<288x16xf32>
    %24 = arith.addf %18, %23 : vector<288x16xf32>
    %c0_27 = arith.constant 0 : index
    %c0_28 = arith.constant 0 : index
    %c19 = arith.constant 19 : index
    %c0_29 = arith.constant 0 : index
    %25 = vector.load %arg2[%c0_27, %c0_28, %c19, %c0_29] : memref<1x1x342x16xbf16, #tpu.memory_space<vmem>>, vector<1x1x288x16xbf16>
    %26 = vector.shape_cast %25 : vector<1x1x288x16xbf16> to vector<288x16xbf16>
    %c4 = arith.constant 4 : index
    %c0_30 = arith.constant 0 : index
    %c0_31 = arith.constant 0 : index
    %27 = vector.load %arg3[%c4, %c0_30, %c0_31] : memref<9x16x16xbf16, #tpu.memory_space<vmem>>, vector<1x16x16xbf16>
    %28 = vector.shape_cast %27 : vector<1x16x16xbf16> to vector<16x16xbf16>
    %cst_32 = arith.constant dense<0.000000e+00> : vector<288x16xf32>
    %29 = tpu.matmul %26, %28, %cst_32 {dimension_numbers = #tpu.dot_dimension_numbers<[1], [0], [0], [1], [0, 0, 1, 1], [], []>} : vector<288x16xbf16>, vector<16x16xbf16>, vector<288x16xf32> -> vector<288x16xf32>
    %30 = arith.addf %24, %29 : vector<288x16xf32>
    %c0_33 = arith.constant 0 : index
    %c0_34 = arith.constant 0 : index
    %c20 = arith.constant 20 : index
    %c0_35 = arith.constant 0 : index
    %31 = vector.load %arg2[%c0_33, %c0_34, %c20, %c0_35] : memref<1x1x342x16xbf16, #tpu.memory_space<vmem>>, vector<1x1x288x16xbf16>
    %32 = vector.shape_cast %31 : vector<1x1x288x16xbf16> to vector<288x16xbf16>
    %c5 = arith.constant 5 : index
    %c0_36 = arith.constant 0 : index
    %c0_37 = arith.constant 0 : index
    %33 = vector.load %arg3[%c5, %c0_36, %c0_37] : memref<9x16x16xbf16, #tpu.memory_space<vmem>>, vector<1x16x16xbf16>
    %34 = vector.shape_cast %33 : vector<1x16x16xbf16> to vector<16x16xbf16>
    %cst_38 = arith.constant dense<0.000000e+00> : vector<288x16xf32>
    %35 = tpu.matmul %32, %34, %cst_38 {dimension_numbers = #tpu.dot_dimension_numbers<[1], [0], [0], [1], [0, 0, 1, 1], [], []>} : vector<288x16xbf16>, vector<16x16xbf16>, vector<288x16xf32> -> vector<288x16xf32>
    %36 = arith.addf %30, %35 : vector<288x16xf32>
    %c0_39 = arith.constant 0 : index
    %c0_40 = arith.constant 0 : index
    %c36 = arith.constant 36 : index
    %c0_41 = arith.constant 0 : index
    %37 = vector.load %arg2[%c0_39, %c0_40, %c36, %c0_41] : memref<1x1x342x16xbf16, #tpu.memory_space<vmem>>, vector<1x1x288x16xbf16>
    %38 = vector.shape_cast %37 : vector<1x1x288x16xbf16> to vector<288x16xbf16>
    %c6 = arith.constant 6 : index
    %c0_42 = arith.constant 0 : index
    %c0_43 = arith.constant 0 : index
    %39 = vector.load %arg3[%c6, %c0_42, %c0_43] : memref<9x16x16xbf16, #tpu.memory_space<vmem>>, vector<1x16x16xbf16>
    %40 = vector.shape_cast %39 : vector<1x16x16xbf16> to vector<16x16xbf16>
    %cst_44 = arith.constant dense<0.000000e+00> : vector<288x16xf32>
    %41 = tpu.matmul %38, %40, %cst_44 {dimension_numbers = #tpu.dot_dimension_numbers<[1], [0], [0], [1], [0, 0, 1, 1], [], []>} : vector<288x16xbf16>, vector<16x16xbf16>, vector<288x16xf32> -> vector<288x16xf32>
    %42 = arith.addf %36, %41 : vector<288x16xf32>
    %c0_45 = arith.constant 0 : index
    %c0_46 = arith.constant 0 : index
    %c37 = arith.constant 37 : index
    %c0_47 = arith.constant 0 : index
    %43 = vector.load %arg2[%c0_45, %c0_46, %c37, %c0_47] : memref<1x1x342x16xbf16, #tpu.memory_space<vmem>>, vector<1x1x288x16xbf16>
    %44 = vector.shape_cast %43 : vector<1x1x288x16xbf16> to vector<288x16xbf16>
    %c7 = arith.constant 7 : index
    %c0_48 = arith.constant 0 : index
    %c0_49 = arith.constant 0 : index
    %45 = vector.load %arg3[%c7, %c0_48, %c0_49] : memref<9x16x16xbf16, #tpu.memory_space<vmem>>, vector<1x16x16xbf16>
    %46 = vector.shape_cast %45 : vector<1x16x16xbf16> to vector<16x16xbf16>
    %cst_50 = arith.constant dense<0.000000e+00> : vector<288x16xf32>
    %47 = tpu.matmul %44, %46, %cst_50 {dimension_numbers = #tpu.dot_dimension_numbers<[1], [0], [0], [1], [0, 0, 1, 1], [], []>} : vector<288x16xbf16>, vector<16x16xbf16>, vector<288x16xf32> -> vector<288x16xf32>
    %48 = arith.addf %42, %47 : vector<288x16xf32>
    %c0_51 = arith.constant 0 : index
    %c0_52 = arith.constant 0 : index
    %c38 = arith.constant 38 : index
    %c0_53 = arith.constant 0 : index
    %49 = vector.load %arg2[%c0_51, %c0_52, %c38, %c0_53] : memref<1x1x342x16xbf16, #tpu.memory_space<vmem>>, vector<1x1x288x16xbf16>
    %50 = vector.shape_cast %49 : vector<1x1x288x16xbf16> to vector<288x16xbf16>
    %c8 = arith.constant 8 : index
    %c0_54 = arith.constant 0 : index
    %c0_55 = arith.constant 0 : index
    %51 = vector.load %arg3[%c8, %c0_54, %c0_55] : memref<9x16x16xbf16, #tpu.memory_space<vmem>>, vector<1x16x16xbf16>
    %52 = vector.shape_cast %51 : vector<1x16x16xbf16> to vector<16x16xbf16>
    %cst_56 = arith.constant dense<0.000000e+00> : vector<288x16xf32>
    %53 = tpu.matmul %50, %52, %cst_56 {dimension_numbers = #tpu.dot_dimension_numbers<[1], [0], [0], [1], [0, 0, 1, 1], [], []>} : vector<288x16xbf16>, vector<16x16xbf16>, vector<288x16xf32> -> vector<288x16xf32>
    %54 = arith.addf %48, %53 : vector<288x16xf32>
    %c0_57 = arith.constant 0 : index
    %c0_58 = arith.constant 0 : index
    %55 = vector.load %arg4[%c0_57, %c0_58] : memref<1x16xf32, #tpu.memory_space<vmem>>, vector<1x16xf32>
    %56 = vector.broadcast %55 : vector<1x16xf32> to vector<288x16xf32>
    %57 = arith.addf %54, %56 : vector<288x16xf32>
    %cst_59 = arith.constant 0.000000e+00 : f32
    %58 = vector.broadcast %cst_59 : f32 to vector<288x16xf32>
    %59 = arith.maximumf %57, %58 : vector<288x16xf32>
    %60 = tpu.iota {dimensions = array<i32: 1>} : vector<1x288xi32>
    %c18_i32 = arith.constant 18 : i32
    %c0_i32 = arith.constant 0 : i32
    %61 = arith.cmpi eq, %c18_i32, %c0_i32 : i32
    %c1_i32 = arith.constant 1 : i32
    %62 = arith.select %61, %c1_i32, %c18_i32 : i32
    %63 = vector.broadcast %62 : i32 to vector<1x288xi32>
    %64 = arith.remsi %60, %63 : vector<1x288xi32>
    %c0_i32_60 = arith.constant 0 : i32
    %65 = vector.broadcast %c0_i32_60 : i32 to vector<1x288xi32>
    %66 = arith.cmpi ne, %64, %65 : vector<1x288xi32>
    %c0_i32_61 = arith.constant 0 : i32
    %67 = vector.broadcast %c0_i32_61 : i32 to vector<1x288xi32>
    %68 = arith.cmpi slt, %64, %67 : vector<1x288xi32>
    %c0_i32_62 = arith.constant 0 : i32
    %69 = arith.cmpi slt, %62, %c0_i32_62 : i32
    %70 = vector.broadcast %69 : i1 to vector<1x288xi1>
    %71 = vector.broadcast %70 : vector<1x288xi1> to vector<1x288xi1>
    %72 = arith.xori %68, %71 : vector<1x288xi1>
    %73 = arith.andi %72, %66 : vector<1x288xi1>
    %74 = vector.broadcast %62 : i32 to vector<1x288xi32>
    %75 = arith.addi %64, %74 : vector<1x288xi32>
    %76 = arith.select %73, %75, %64 : vector<1x288xi1>, vector<1x288xi32>
    %c16_i32 = arith.constant 16 : i32
    %77 = vector.broadcast %c16_i32 : i32 to vector<1x288xi32>
    %78 = arith.cmpi slt, %76, %77 : vector<1x288xi32>
    %c16_i32_63 = arith.constant 16 : i32
    %79 = arith.muli %arg1, %c16_i32_63 : i32
    %c16_i32_64 = arith.constant 16 : i32
    %80 = arith.subi %c16_i32_64, %79 : i32
    %c18_i32_65 = arith.constant 18 : i32
    %81 = arith.muli %80, %c18_i32_65 : i32
    %82 = vector.broadcast %81 : i32 to vector<1x288xi32>
    %83 = arith.cmpi slt, %60, %82 : vector<1x288xi32>
    %84 = arith.andi %78, %83 : vector<1x288xi1>
    %85 = arith.extui %84 : vector<1x288xi1> to vector<1x288xi32>
    %86 = arith.sitofp %85 : vector<1x288xi32> to vector<1x288xf32>
    %cst_66 = arith.constant dense<0.000000e+00> : vector<1x16xf32>
    %87 = tpu.matmul %86, %59, %cst_66 {dimension_numbers = #tpu.dot_dimension_numbers<[1], [0], [0], [1], [0, 0, 1, 1], [], []>} : vector<1x288xf32>, vector<288x16xf32>, vector<1x16xf32> -> vector<1x16xf32>
    %c0_67 = arith.constant 0 : index
    %c0_68 = arith.constant 0 : index
    %c0_69 = arith.constant 0 : index
    %c0_70 = arith.constant 0 : index
    %88 = vector.load %arg6[%c0_67, %c0_68, %c0_69, %c0_70] : memref<1x1x1x16xf32, #tpu.memory_space<vmem>>, vector<1x1x1x16xf32>
    %89 = vector.shape_cast %88 : vector<1x1x1x16xf32> to vector<1x16xf32>
    %90 = vector.shape_cast %87 : vector<1x16xf32> to vector<1x1x1x16xf32>
    tpu.vector_store %arg6[%c0_67, %c0_68, %c0_69, %c0_70], %90 {strides = array<i32>} : memref<1x1x1x16xf32, #tpu.memory_space<vmem>>, vector<1x1x1x16xf32>,
    %91 = arith.truncf %59 : vector<288x16xf32> to vector<288x16xbf16>
    %c0_71 = arith.constant 0 : index
    %c0_72 = arith.constant 0 : index
    %c0_73 = arith.constant 0 : index
    %c0_74 = arith.constant 0 : index
    %92 = vector.load %arg5[%c0_71, %c0_72, %c0_73, %c0_74] : memref<1x1x288x16xbf16, #tpu.memory_space<vmem>>, vector<1x1x288x16xbf16>
    %93 = vector.shape_cast %92 : vector<1x1x288x16xbf16> to vector<288x16xbf16>
    %94 = vector.shape_cast %91 : vector<288x16xbf16> to vector<1x1x288x16xbf16>
    tpu.vector_store %arg5[%c0_71, %c0_72, %c0_73, %c0_74], %94 {strides = array<i32>} : memref<1x1x288x16xbf16, #tpu.memory_space<vmem>>, vector<1x1x288x16xbf16>,
    return
  }
  func.func @transform_0(%arg0: i32, %arg1: i32) -> (i32, i32, i32, i32) {
    %c0_i32 = arith.constant 0 : i32
    %c0_i32_0 = arith.constant 0 : i32
    %c0_i32_1 = arith.constant 0 : i32
    return %arg0, %arg1, %c0_i32, %c0_i32_0 : i32, i32, i32, i32
  }
  func.func @transform_1(%arg0: i32, %arg1: i32) -> (i32, i32, i32) {
    %c0_i32 = arith.constant 0 : i32
    %c0_i32_0 = arith.constant 0 : i32
    %c0_i32_1 = arith.constant 0 : i32
    %c0_i32_2 = arith.constant 0 : i32
    return %c0_i32, %c0_i32_0, %c0_i32_1 : i32, i32, i32
  }
  func.func @transform_2(%arg0: i32, %arg1: i32) -> (i32, i32) {
    %c0_i32 = arith.constant 0 : i32
    %c0_i32_0 = arith.constant 0 : i32
    %c0_i32_1 = arith.constant 0 : i32
    return %c0_i32, %c0_i32_0 : i32, i32
  }
  func.func @transform_3(%arg0: i32, %arg1: i32) -> (i32, i32, i32, i32) {
    %c0_i32 = arith.constant 0 : i32
    %c0_i32_0 = arith.constant 0 : i32
    %c0_i32_1 = arith.constant 0 : i32
    return %arg0, %arg1, %c0_i32, %c0_i32_0 : i32, i32, i32, i32
  }
  func.func @transform_4(%arg0: i32, %arg1: i32) -> (i32, i32, i32, i32) {
    %c0_i32 = arith.constant 0 : i32
    %c0_i32_0 = arith.constant 0 : i32
    %c0_i32_1 = arith.constant 0 : i32
    return %arg0, %arg1, %c0_i32, %c0_i32_0 : i32, i32, i32, i32
  }
}

module attributes {stable_mosaic.version = 11 : i64} {
  func.func @scale_kernel(%arg0: i32, %arg1: i32, %arg2: memref<1x1x288x16xbf16, #tpu.memory_space<vmem>>, %arg3: memref<1x1x16xf32, #tpu.memory_space<vmem>>, %arg4: memref<1x1x288x16xf32, #tpu.memory_space<vmem>>) attributes {dimension_semantics = [#tpu.dimension_semantics<parallel>, #tpu.dimension_semantics<parallel>], iteration_bounds = array<i64: 2, 1>, scalar_prefetch = 0 : i64, scratch_operands = 0 : i64, tpu.core_type = #tpu.core_type<tc>, window_params = [{transform_indices = @transform_0, window_bounds = array<i64: 1, 1, 288, 16>}, {transform_indices = @transform_1, window_bounds = array<i64: 1, 1, 16>}, {transform_indices = @transform_2, window_bounds = array<i64: 1, 1, 288, 16>}]} {
    %c0 = arith.constant 0 : index
    %c0_0 = arith.constant 0 : index
    %c0_1 = arith.constant 0 : index
    %c0_2 = arith.constant 0 : index
    %0 = vector.load %arg2[%c0, %c0_0, %c0_1, %c0_2] : memref<1x1x288x16xbf16, #tpu.memory_space<vmem>>, vector<1x1x288x16xbf16>
    %1 = vector.shape_cast %0 : vector<1x1x288x16xbf16> to vector<288x16xbf16>
    %2 = arith.extf %1 : vector<288x16xbf16> to vector<288x16xf32>
    %c0_3 = arith.constant 0 : index
    %c0_4 = arith.constant 0 : index
    %c0_5 = arith.constant 0 : index
    %3 = vector.load %arg3[%c0_3, %c0_4, %c0_5] : memref<1x1x16xf32, #tpu.memory_space<vmem>>, vector<1x1x16xf32>
    %4 = vector.shape_cast %3 : vector<1x1x16xf32> to vector<1x16xf32>
    %5 = vector.broadcast %4 : vector<1x16xf32> to vector<288x16xf32>
    %6 = arith.mulf %2, %5 : vector<288x16xf32>
    %c0_6 = arith.constant 0 : index
    %c0_7 = arith.constant 0 : index
    %c0_8 = arith.constant 0 : index
    %c0_9 = arith.constant 0 : index
    %7 = vector.load %arg4[%c0_6, %c0_7, %c0_8, %c0_9] : memref<1x1x288x16xf32, #tpu.memory_space<vmem>>, vector<1x1x288x16xf32>
    %8 = vector.shape_cast %7 : vector<1x1x288x16xf32> to vector<288x16xf32>
    %9 = vector.shape_cast %6 : vector<288x16xf32> to vector<1x1x288x16xf32>
    tpu.vector_store %arg4[%c0_6, %c0_7, %c0_8, %c0_9], %9 {strides = array<i32>} : memref<1x1x288x16xf32, #tpu.memory_space<vmem>>, vector<1x1x288x16xf32>,
    return
  }
  func.func @transform_0(%arg0: i32, %arg1: i32) -> (i32, i32, i32, i32) {
    %c0_i32 = arith.constant 0 : i32
    %c0_i32_0 = arith.constant 0 : i32
    %c0_i32_1 = arith.constant 0 : i32
    return %arg0, %arg1, %c0_i32, %c0_i32_0 : i32, i32, i32, i32
  }
  func.func @transform_1(%arg0: i32, %arg1: i32) -> (i32, i32, i32) {
    %c0_i32 = arith.constant 0 : i32
    %c0_i32_0 = arith.constant 0 : i32
    %c0_i32_1 = arith.constant 0 : i32
    return %arg0, %c0_i32, %c0_i32_0 : i32, i32, i32
  }
  func.func @transform_2(%arg0: i32, %arg1: i32) -> (i32, i32, i32, i32) {
    %c0_i32 = arith.constant 0 : i32
    %c0_i32_0 = arith.constant 0 : i32
    %c0_i32_1 = arith.constant 0 : i32
    return %arg0, %arg1, %c0_i32, %c0_i32_0 : i32, i32, i32, i32
  }
}

</mosaic_0001>

<llo_original>
// kernel: efm_forward.3
$region0: #{efm_forward.3}
  #allocation0 [shape = 'u32[]', space=smem, size = 0x4, offset = 0x4, fixed_abs, tag = 'smem constant byte address 0x4 - core index']
  #allocation1 [shape = 'u32[144,128]{1,0:T(1,128)}', space=vmem, size = 0x12000, scoped, tag = 'internal scratch']
  %s0 = inlined_call_operand.vmem [shape: bf16[2,1,288,16], index: 0, kind: input, shape index: {}]
  %s1 = inlined_call_operand.vmem [shape: f32[2,1,16], index: 1, kind: input, shape index: {}]
  %s2 = inlined_call_operand.vmem [shape: f32[2,1,288,16], index: 2, kind: output, shape index: {}]
  %s3 = sld [smem:[#allocation0]]
  $region41: #{efm_forward.3} parent=0
    _
  %s5 = ssub.s32 1, %s3
  %s6 = scalar_select 0, %s5, %s3
  loop: start=0, step=1, limit=4
  $region2: #{efm_forward.3} parent=0 // loop_pre_header
    _
  $region3: #{efm_forward.3} parent=0 // loop_header
    %s8 = sphi 0, %s12
    %p9 = scmp.ge.s32.totalorder %s8, 4
    %s15 = sphi 0, %s27
    %s16 = sphi 0, %s23
    %s17 = sphi 0, %s15
    %s18 = sphi 0, %s16
    %s19 = sphi 0, %s17
    %s20 = sphi 0, %s18
    %s32 = sphi 0, %s34
    %s35 = sphi 0, %s32
    %s36 = sphi 0, %s35
    %s52 = sphi 0, %s36
    %s58 = sphi 0, %s60
    %s61 = sphi 0, %s58
    %s62 = sphi 0, %s61
    %s78 = sphi 0, %s62
    %s86 = sphi 0, %s88
    %s89 = sphi 0, %s86
    %s90 = sphi 0, %s89
    %s106 = sphi 0, %s90
  $region4: #{efm_forward.3} parent=0 // loop_header_branch
    %11 = sbr.rel (%p9) target = $region8
  $region5: #{efm_forward.3} parent=0 // loop_body
    %s13 = ssub.s32 %s8, 1
    %s14 = ssub.s32 %s8, 2
    %s21 = sadd.s32 1, %s16
    %p22 = scmp.ge.s32.totalorder %s21, 1
    %s23 = scalar_select %p22, 0, %s21
    %s24 = sadd.s32 1, %s15
    %s25 = scalar_select %p22, %s24, %s15
    %p26 = scmp.ge.s32.totalorder %s25, 2
    %s27 = scalar_select %p26, 0, %s25
    %s28 = ssub.s32 %s15, %s27
    %s29 = ssub.s32 %s16, %s23
    %s30 = sor.u32 %s28, %s29
    %p31 = scmp.eq.s32.totalorder %s30, 0
    %s33 = sadd.s32 %s32, 1
    %s34 = scalar_select %p31, %s32, %s33
    %p37 = pneg %p31
    %p38 = scmp.eq.s32.totalorder %s8, 1
    %p39 = por %p37, %p38
    %p40 = scmp.ne.s32.totalorder %s32, %s35
    %p41 = scmp.eq.s32.totalorder %s8, 0
    %p42 = por %p40, %p41
    %p43 = scmp.ne.s32.totalorder %s32, %s35
    %p44 = scmp.eq.s32.totalorder %s13, 1
    %p45 = por %p43, %p44
    %p46 = scmp.ne.s32.totalorder %s35, %s36
    %p47 = scmp.eq.s32.totalorder %s13, 0
    %p48 = por %p46, %p47
    %p49 = scmp.ne.s32.totalorder %s35, %s36
    %p50 = scmp.eq.s32.totalorder %s14, 1
    %p51 = por %p49, %p50
    %p53 = scmp.ne.s32.totalorder %s36, %s52
    %p54 = scmp.eq.s32.totalorder %s14, 0
    %p55 = por %p53, %p54
    %s56 = ssub.s32 %s15, %s27
    %p57 = scmp.eq.s32.totalorder %s56, 0
    %s59 = sadd.s32 %s58, 1
    %s60 = scalar_select %p57, %s58, %s59
    %p63 = pneg %p57
    %p64 = scmp.eq.s32.totalorder %s8, 1
    %p65 = por %p63, %p64
    %p66 = scmp.ne.s32.totalorder %s58, %s61
    %p67 = scmp.eq.s32.totalorder %s8, 0
    %p68 = por %p66, %p67
    %p69 = scmp.ne.s32.totalorder %s58, %s61
    %p70 = scmp.eq.s32.totalorder %s13, 1
    %p71 = por %p69, %p70
    %p72 = scmp.ne.s32.totalorder %s61, %s62
    %p73 = scmp.eq.s32.totalorder %s13, 0
    %p74 = por %p72, %p73
    %p75 = scmp.ne.s32.totalorder %s61, %s62
    %p76 = scmp.eq.s32.totalorder %s14, 1
    %p77 = por %p75, %p76
    %p79 = scmp.ne.s32.totalorder %s62, %s78
    %p80 = scmp.eq.s32.totalorder %s14, 0
    %p81 = por %p79, %p80
    %s82 = ssub.s32 %s15, %s27
    %s83 = ssub.s32 %s16, %s23
    %s84 = sor.u32 %s82, %s83
    %p85 = scmp.eq.s32.totalorder %s84, 0
    %s87 = sadd.s32 %s86, 1
    %s88 = scalar_select %p85, %s86, %s87
    %p91 = pneg %p85
    %p92 = scmp.eq.s32.totalorder %s8, 1
    %p93 = por %p91, %p92
    %p94 = scmp.ne.s32.totalorder %s86, %s89
    %p95 = scmp.eq.s32.totalorder %s8, 0
    %p96 = por %p94, %p95
    %p97 = scmp.ne.s32.totalorder %s86, %s89
    %p98 = scmp.eq.s32.totalorder %s13, 1
    %p99 = por %p97, %p98
    %p100 = scmp.ne.s32.totalorder %s89, %s90
    %p101 = scmp.eq.s32.totalorder %s13, 0
    %p102 = por %p100, %p101
    %p103 = scmp.ne.s32.totalorder %s89, %s90
    %p104 = scmp.eq.s32.totalorder %s14, 1
    %p105 = por %p103, %p104
    %p107 = scmp.ne.s32.totalorder %s90, %s106
    %p108 = scmp.eq.s32.totalorder %s14, 0
    %p109 = por %p107, %p108
    %p110 = scmp.le.s32.totalorder 1, %s8
    %p111 = scmp.lt.s32.totalorder %s8, 3
    %p112 = pnand %p110, %p111
    %p113 = pneg %p112
    // Predicated region
    $region9: #{efm_forward.3} parent=5 // pred_check
      _
    $region10: #{efm_forward.3} parent=5 // pred_check_branch
      %115 = sbr.rel (%p112) target = $region12
    $region11: #{efm_forward.3} parent=5 // pred_region
      %s116 = ssub.s32 %s8, 1
    $region12: #{efm_forward.3} parent=5 // pred_fallthru
      _
    %p117 = scmp.lt.s32.totalorder %s8, 2
    // Predicated region
    $region13: #{efm_forward.3} parent=5 // pred_check
      %p118 = pneg %p117
    $region14: #{efm_forward.3} parent=5 // pred_check_branch
      %120 = sbr.rel (%p118) target = $region16
    $region15: #{efm_forward.3} parent=5 // pred_region
      // Predicated region
      $region17: #{efm_forward.3} parent=15 // pred_check
        %p121 = pneg %p42
      $region18: #{efm_forward.3} parent=15 // pred_check_branch
        %123 = sbr.rel (%p121) target = $region20
      $region19: #{efm_forward.3} parent=15 // pred_region
        %p124 = scmp.lt.s32.totalorder %s15, 1
        %s125 = scalar_select %p124, %s15, 1
        %p126 = scmp.lt.s32.totalorder %s16, 0
        %s127 = scalar_select %p126, %s16, 0
        %s128 = smul.addr %s127, 36
        %s129 = smul.addr %s125, 36
        %s130 = sadd.s32 %s128, %s129
        %s131 = smul.addr %s130, 4
        %s132 = scalar_lea.vmem %s0, %s131
      $region20: #{efm_forward.3} parent=15 // pred_fallthru
        _
      // Predicated region
      $region21: #{efm_forward.3} parent=15 // pred_check
        %p133 = pneg %p68
      $region22: #{efm_forward.3} parent=15 // pred_check_branch
        %135 = sbr.rel (%p133) target = $region24
      $region23: #{efm_forward.3} parent=15 // pred_region
        %p136 = scmp.lt.s32.totalorder %s15, 1
        %s137 = scalar_select %p136, %s15, 1
        %s138 = scalar_lea.vmem %s1, %s137
      $region24: #{efm_forward.3} parent=15 // pred_fallthru
        _
    $region16: #{efm_forward.3} parent=5 // pred_fallthru
      _
    %p139 = scmp.le.s32.totalorder 1, %s8
    %p140 = scmp.lt.s32.totalorder %s8, 3
    %p141 = pnand %p139, %p140
    %p142 = pneg %p141
    // Predicated region
    $region25: #{efm_forward.3} parent=5 // pred_check
      _
    $region26: #{efm_forward.3} parent=5 // pred_check_branch
      %144 = sbr.rel (%p141) target = $region28
    $region27: #{efm_forward.3} parent=5 // pred_region
      %s145 = ssub.s32 %s8, 1
      %p146 = scmp.lt.s32.totalorder %s17, 1
      %s147 = scalar_select %p146, %s17, 1
      %p148 = scmp.lt.s32.totalorder %s18, 0
      %s149 = scalar_select %p148, %s18, 0
      %s150 = smul.addr %s149, 36
      %s151 = smul.addr %s147, 36
      %s152 = sadd.s32 %s150, %s151
      %s153 = smul.addr %s152, 4
      %s154 = scalar_lea.vmem %s0, %s153
      %p155 = pneg %p48
      %p156 = pneg %p45
      %p157 = scmp.lt.s32.totalorder %s17, 1
      %s158 = scalar_select %p157, %s17, 1
      %s159 = scalar_lea.vmem %s1, %s158
      %p160 = pneg %p74
      %p161 = pneg %p71
      %p162 = pneg %p102
      %p163 = pneg %p99
      %p164 = scmp.lt.s32.totalorder %s17, 1
      %s165 = scalar_select %p164, %s17, 1
      %p166 = scmp.lt.s32.totalorder %s18, 0
      %s167 = scalar_select %p166, %s18, 0
      %s168 = smul.addr %s167, 36
      %s169 = smul.addr %s165, 36
      %s170 = sadd.s32 %s168, %s169
      %s171 = smul.addr %s170, 8
      %s172 = scalar_lea.vmem %s2, %s171
      %p173 = scmp.lt.s32.totalorder %s17, 1
      %s174 = scalar_select %p173, %s17, 1
      %p175 = scmp.lt.s32.totalorder %s18, 0
      %s176 = scalar_select %p175, %s18, 0
      %s177 = smul.addr %s176, 36
      %s178 = smul.addr %s174, 36
      %s179 = sadd.s32 %s177, %s178
      %s180 = smul.addr %s179, 4
      %s181 = scalar_lea.vmem %s0, %s180
      %p182 = scmp.lt.s32.totalorder %s17, 1
      %s183 = scalar_select %p182, %s17, 1
      %s184 = scalar_lea.vmem %s1, %s183
      %p185 = scmp.lt.s32.totalorder %s17, 1
      %s186 = scalar_select %p185, %s17, 1
      %p187 = scmp.lt.s32.totalorder %s18, 0
      %s188 = scalar_select %p187, %s18, 0
      %s189 = smul.addr %s188, 36
      %s190 = smul.addr %s186, 36
      %s191 = sadd.s32 %s189, %s190
      %s192 = smul.addr %s191, 8
      %s193 = scalar_lea.vmem %s2, %s192
      %v194 = vld [vmem:[%s181] sm:$0xf]
      %v195 = vld [vmem:[%s181 + $0x4] sm:$0xf]
      %v196 = vld [vmem:[%s181 + $0x8] sm:$0xf]
      %v197 = vld [vmem:[%s181 + $0xc] sm:$0xf]
      %v198 = vld [vmem:[%s181 + $0x10] sm:$0xf]
      %v199 = vld [vmem:[%s181 + $0x14] sm:$0xf]
      %v200 = vld [vmem:[%s181 + $0x18] sm:$0xf]
      %v201 = vld [vmem:[%s181 + $0x1c] sm:$0xf]
      %v202 = vld [vmem:[%s181 + $0x20] sm:$0xf]
      %v203 = vld [vmem:[%s181 + $0x24] sm:$0xf]
      %v204 = vld [vmem:[%s181 + $0x28] sm:$0xf]
      %v205 = vld [vmem:[%s181 + $0x2c] sm:$0xf]
      %v206 = vld [vmem:[%s181 + $0x30] sm:$0xf]
      %v207 = vld [vmem:[%s181 + $0x34] sm:$0xf]
      %v208 = vld [vmem:[%s181 + $0x38] sm:$0xf]
      %v209 = vld [vmem:[%s181 + $0x3c] sm:$0xf]
      %v210 = vld [vmem:[%s181 + $0x40] sm:$0xf]
      %v211 = vld [vmem:[%s181 + $0x44] sm:$0xf]
      %v212 = vld [vmem:[%s181 + $0x48] sm:$0xf]
      %v213 = vld [vmem:[%s181 + $0x4c] sm:$0xf]
      %v214 = vld [vmem:[%s181 + $0x50] sm:$0xf]
      %v215 = vld [vmem:[%s181 + $0x54] sm:$0xf]
      %v216 = vld [vmem:[%s181 + $0x58] sm:$0xf]
      %v217 = vld [vmem:[%s181 + $0x5c] sm:$0xf]
      %v218 = vld [vmem:[%s181 + $0x60] sm:$0xf]
      %v219 = vld [vmem:[%s181 + $0x64] sm:$0xf]
      %v220 = vld [vmem:[%s181 + $0x68] sm:$0xf]
      %v221 = vld [vmem:[%s181 + $0x6c] sm:$0xf]
      %v222 = vld [vmem:[%s181 + $0x70] sm:$0xf]
      %v223 = vld [vmem:[%s181 + $0x74] sm:$0xf]
      %v224 = vld [vmem:[%s181 + $0x78] sm:$0xf]
      %v225 = vld [vmem:[%s181 + $0x7c] sm:$0xf]
      %v226 = vld [vmem:[%s181 + $0x80] sm:$0xf]
      %v227 = vld [vmem:[%s181 + $0x84] sm:$0xf]
      %v228 = vld [vmem:[%s181 + $0x88] sm:$0xf]
      %v229 = vld [vmem:[%s181 + $0x8c] sm:$0xf]
      %v230 = vunpack.c.l.bf16 %v194
      %v231 = vunpack.c.l.bf16 %v195
      %v232 = vunpack.c.l.bf16 %v196
      %v233 = vunpack.c.l.bf16 %v197
      %v234 = vunpack.c.l.bf16 %v198
      %v235 = vunpack.c.l.bf16 %v199
      %v236 = vunpack.c.l.bf16 %v200
      %v237 = vunpack.c.l.bf16 %v201
      %v238 = vunpack.c.l.bf16 %v202
      %v239 = vunpack.c.l.bf16 %v203
      %v240 = vunpack.c.l.bf16 %v204
      %v241 = vunpack.c.l.bf16 %v205
      %v242 = vunpack.c.l.bf16 %v206
      %v243 = vunpack.c.l.bf16 %v207
      %v244 = vunpack.c.l.bf16 %v208
      %v245 = vunpack.c.l.bf16 %v209
      %v246 = vunpack.c.l.bf16 %v210
      %v247 = vunpack.c.l.bf16 %v211
      %v248 = vunpack.c.l.bf16 %v212
      %v249 = vunpack.c.l.bf16 %v213
      %v250 = vunpack.c.l.bf16 %v214
      %v251 = vunpack.c.l.bf16 %v215
      %v252 = vunpack.c.l.bf16 %v216
      %v253 = vunpack.c.l.bf16 %v217
      %v254 = vunpack.c.l.bf16 %v218
      %v255 = vunpack.c.l.bf16 %v219
      %v256 = vunpack.c.l.bf16 %v220
      %v257 = vunpack.c.l.bf16 %v221
      %v258 = vunpack.c.l.bf16 %v222
      %v259 = vunpack.c.l.bf16 %v223
      %v260 = vunpack.c.l.bf16 %v224
      %v261 = vunpack.c.l.bf16 %v225
      %v262 = vunpack.c.l.bf16 %v226
      %v263 = vunpack.c.l.bf16 %v227
      %v264 = vunpack.c.l.bf16 %v228
      %v265 = vunpack.c.l.bf16 %v229
      %v266 = vld [vmem:[%s184] sm:$0x1]
      %v268 = vlaneseq
      %v269 = vshrl.u32 %v268, 7
      %v270 = vsub.s32 0, %v269
      %v271 = vrot.slane %v266, %v270
      %v273 = vmul.f32 %v230, %v271
      %v274 = vmul.f32 %v231, %v271
      %v275 = vmul.f32 %v232, %v271
      %v276 = vmul.f32 %v233, %v271
      %v277 = vmul.f32 %v234, %v271
      %v278 = vmul.f32 %v235, %v271
      %v279 = vmul.f32 %v236, %v271
      %v280 = vmul.f32 %v237, %v271
      %v281 = vmul.f32 %v238, %v271
      %v282 = vmul.f32 %v239, %v271
      %v283 = vmul.f32 %v240, %v271
      %v284 = vmul.f32 %v241, %v271
      %v285 = vmul.f32 %v242, %v271
      %v286 = vmul.f32 %v243, %v271
      %v287 = vmul.f32 %v244, %v271
      %v288 = vmul.f32 %v245, %v271
      %v289 = vmul.f32 %v246, %v271
      %v290 = vmul.f32 %v247, %v271
      %v291 = vmul.f32 %v248, %v271
      %v292 = vmul.f32 %v249, %v271
      %v293 = vmul.f32 %v250, %v271
      %v294 = vmul.f32 %v251, %v271
      %v295 = vmul.f32 %v252, %v271
      %v296 = vmul.f32 %v253, %v271
      %v297 = vmul.f32 %v254, %v271
      %v298 = vmul.f32 %v255, %v271
      %v299 = vmul.f32 %v256, %v271
      %v300 = vmul.f32 %v257, %v271
      %v301 = vmul.f32 %v258, %v271
      %v302 = vmul.f32 %v259, %v271
      %v303 = vmul.f32 %v260, %v271
      %v304 = vmul.f32 %v261, %v271
      %v305 = vmul.f32 %v262, %v271
      %v306 = vmul.f32 %v263, %v271
      %v307 = vmul.f32 %v264, %v271
      %v308 = vmul.f32 %v265, %v271
      %vm309 = vcmask 130048
      %310 = vst.msk [vmem:[%s193] sm:$0xff] %vm309, %v273
      %311 = vst.msk [vmem:[%s193 + $0x8] sm:$0xff] %vm309, %v274
      %312 = vst.msk [vmem:[%s193 + $0x10] sm:$0xff] %vm309, %v275
      %313 = vst.msk [vmem:[%s193 + $0x18] sm:$0xff] %vm309, %v276
      %314 = vst.msk [vmem:[%s193 + $0x20] sm:$0xff] %vm309, %v277
      %315 = vst.msk [vmem:[%s193 + $0x28] sm:$0xff] %vm309, %v278
      %316 = vst.msk [vmem:[%s193 + $0x30] sm:$0xff] %vm309, %v279
      %317 = vst.msk [vmem:[%s193 + $0x38] sm:$0xff] %vm309, %v280
      %318 = vst.msk [vmem:[%s193 + $0x40] sm:$0xff] %vm309, %v281
      %319 = vst.msk [vmem:[%s193 + $0x48] sm:$0xff] %vm309, %v282
      %320 = vst.msk [vmem:[%s193 + $0x50] sm:$0xff] %vm309, %v283
      %321 = vst.msk [vmem:[%s193 + $0x58] sm:$0xff] %vm309, %v284
      %322 = vst.msk [vmem:[%s193 + $0x60] sm:$0xff] %vm309, %v285
      %323 = vst.msk [vmem:[%s193 + $0x68] sm:$0xff] %vm309, %v286
      %324 = vst.msk [vmem:[%s193 + $0x70] sm:$0xff] %vm309, %v287
      %325 = vst.msk [vmem:[%s193 + $0x78] sm:$0xff] %vm309, %v288
      %326 = vst.msk [vmem:[%s193 + $0x80] sm:$0xff] %vm309, %v289
      %327 = vst.msk [vmem:[%s193 + $0x88] sm:$0xff] %vm309, %v290
      %328 = vst.msk [vmem:[%s193 + $0x90] sm:$0xff] %vm309, %v291
      %329 = vst.msk [vmem:[%s193 + $0x98] sm:$0xff] %vm309, %v292
      %330 = vst.msk [vmem:[%s193 + $0xa0] sm:$0xff] %vm309, %v293
      %331 = vst.msk [vmem:[%s193 + $0xa8] sm:$0xff] %vm309, %v294
      %332 = vst.msk [vmem:[%s193 + $0xb0] sm:$0xff] %vm309, %v295
      %333 = vst.msk [vmem:[%s193 + $0xb8] sm:$0xff] %vm309, %v296
      %334 = vst.msk [vmem:[%s193 + $0xc0] sm:$0xff] %vm309, %v297
      %335 = vst.msk [vmem:[%s193 + $0xc8] sm:$0xff] %vm309, %v298
      %336 = vst.msk [vmem:[%s193 + $0xd0] sm:$0xff] %vm309, %v299
      %337 = vst.msk [vmem:[%s193 + $0xd8] sm:$0xff] %vm309, %v300
      %338 = vst.msk [vmem:[%s193 + $0xe0] sm:$0xff] %vm309, %v301
      %339 = vst.msk [vmem:[%s193 + $0xe8] sm:$0xff] %vm309, %v302
      %340 = vst.msk [vmem:[%s193 + $0xf0] sm:$0xff] %vm309, %v303
      %341 = vst.msk [vmem:[%s193 + $0xf8] sm:$0xff] %vm309, %v304
      %342 = vst.msk [vmem:[%s193 + $0x100] sm:$0xff] %vm309, %v305
      %343 = vst.msk [vmem:[%s193 + $0x108] sm:$0xff] %vm309, %v306
      %344 = vst.msk [vmem:[%s193 + $0x110] sm:$0xff] %vm309, %v307
      %345 = vst.msk [vmem:[%s193 + $0x118] sm:$0xff] %vm309, %v308
      %p346 = scmp.lt.s32.totalorder %s17, 1
      %s347 = scalar_select %p346, %s17, 1
      %p348 = scmp.lt.s32.totalorder %s18, 0
      %s349 = scalar_select %p348, %s18, 0
      %s350 = smul.addr %s349, 36
      %s351 = smul.addr %s347, 36
      %s352 = sadd.s32 %s350, %s351
      %s353 = smul.addr %s352, 8
      %s354 = scalar_lea.vmem %s2, %s353
      // Predicated region
      $region29: #{efm_forward.3} parent=27 // pred_check
        %p355 = pneg %p99
      $region30: #{efm_forward.3} parent=27 // pred_check_branch
        %357 = sbr.rel (%p355) target = $region32
      $region31: #{efm_forward.3} parent=27 // pred_region
        _
      $region32: #{efm_forward.3} parent=27 // pred_fallthru
        _
    $region28: #{efm_forward.3} parent=5 // pred_fallthru
      _
    %p358 = scmp.le.s32.totalorder 2, %s8
    // Predicated region
    $region33: #{efm_forward.3} parent=5 // pred_check
      %p359 = pneg %p358
    $region34: #{efm_forward.3} parent=5 // pred_check_branch
      %361 = sbr.rel (%p359) target = $region36
    $region35: #{efm_forward.3} parent=5 // pred_region
      %s362 = ssub.s32 %s8, 2
      // Predicated region
      $region37: #{efm_forward.3} parent=35 // pred_check
        %p363 = pneg %p105
      $region38: #{efm_forward.3} parent=35 // pred_check_branch
        %365 = sbr.rel (%p363) target = $region40
      $region39: #{efm_forward.3} parent=35 // pred_region
        %p366 = scmp.lt.s32.totalorder %s19, 1
        %s367 = scalar_select %p366, %s19, 1
        %p368 = scmp.lt.s32.totalorder %s20, 0
        %s369 = scalar_select %p368, %s20, 0
        %s370 = smul.addr %s369, 36
        %s371 = smul.addr %s367, 36
        %s372 = sadd.s32 %s370, %s371
        %s373 = smul.addr %s372, 8
        %s374 = scalar_lea.vmem %s2, %s373
      $region40: #{efm_forward.3} parent=35 // pred_fallthru
        _
    $region36: #{efm_forward.3} parent=5 // pred_fallthru
      _
  $region6: #{efm_forward.3} parent=0 // loop_footer
    %s12 = sadd.s32 1, %s8
  $region7: #{efm_forward.3} parent=0 // loop_footer_branch
    %7 = sbr.rel target = $region3
  $region8: #{efm_forward.3} parent=0 // loop_exit
    _

// kernel: efm_forward.2
$region0: #{efm_forward.2}
  #allocation0 [shape = 'u32[]', space=smem, size = 0x4, offset = 0x4, fixed_abs, tag = 'smem constant byte address 0x4 - core index']
  #allocation1 [shape = 'u32[144,128]{1,0:T(1,128)}', space=vmem, size = 0x12000, scoped, tag = 'internal scratch']
  %s0 = inlined_call_operand.vmem [shape: bf16[2,1,342,16], index: 0, kind: input, shape index: {}]
  %s1 = inlined_call_operand.vmem [shape: bf16[9,16,16], index: 1, kind: input, shape index: {}]
  %s2 = inlined_call_operand.vmem [shape: f32[1,16], index: 2, kind: input, shape index: {}]
  %s3 = inlined_call_operand.vmem [shape: bf16[2,1,288,16], index: 3, kind: output, shape index: {0}]
  %s4 = inlined_call_operand.vmem [shape: f32[2,1,1,16], index: 4, kind: output, shape index: {1}]
  %5 = xla_tuple %s3, %s4
  %s6 = sld [smem:[#allocation0]]
  $region53: #{efm_forward.2} parent=0
    _
  %s8 = ssub.s32 1, %s6
  %s9 = scalar_select 0, %s8, %s6
  loop: start=0, step=1, limit=4
  $region2: #{efm_forward.2} parent=0 // loop_pre_header
    _
  $region3: #{efm_forward.2} parent=0 // loop_header
    %s11 = sphi 0, %s15
    %p12 = scmp.ge.s32.totalorder %s11, 4
    %s18 = sphi 0, %s30
    %s19 = sphi 0, %s26
    %s20 = sphi 0, %s18
    %s21 = sphi 0, %s19
    %s22 = sphi 0, %s20
    %s23 = sphi 0, %s21
    %s35 = sphi 0, %s37
    %s38 = sphi 0, %s35
    %s39 = sphi 0, %s38
    %s55 = sphi 0, %s39
    %s59 = sphi 0, %s59
    %s61 = sphi 0, %s59
    %s62 = sphi 0, %s61
    %s76 = sphi 0, %s62
    %s80 = sphi 0, %s80
    %s82 = sphi 0, %s80
    %s83 = sphi 0, %s82
    %s97 = sphi 0, %s83
    %s105 = sphi 0, %s107
    %s108 = sphi 0, %s105
    %s109 = sphi 0, %s108
    %s125 = sphi 0, %s109
    %s133 = sphi 0, %s135
    %s136 = sphi 0, %s133
    %s137 = sphi 0, %s136
    %s153 = sphi 0, %s137
  $region4: #{efm_forward.2} parent=0 // loop_header_branch
    %14 = sbr.rel (%p12) target = $region8
  $region5: #{efm_forward.2} parent=0 // loop_body
    %s16 = ssub.s32 %s11, 1
    %s17 = ssub.s32 %s11, 2
    %s24 = sadd.s32 1, %s19
    %p25 = scmp.ge.s32.totalorder %s24, 1
    %s26 = scalar_select %p25, 0, %s24
    %s27 = sadd.s32 1, %s18
    %s28 = scalar_select %p25, %s27, %s18
    %p29 = scmp.ge.s32.totalorder %s28, 2
    %s30 = scalar_select %p29, 0, %s28
    %s31 = ssub.s32 %s18, %s30
    %s32 = ssub.s32 %s19, %s26
    %s33 = sor.u32 %s31, %s32
    %p34 = scmp.eq.s32.totalorder %s33, 0
    %s36 = sadd.s32 %s35, 1
    %s37 = scalar_select %p34, %s35, %s36
    %p40 = pneg %p34
    %p41 = scmp.eq.s32.totalorder %s11, 1
    %p42 = por %p40, %p41
    %p43 = scmp.ne.s32.totalorder %s35, %s38
    %p44 = scmp.eq.s32.totalorder %s11, 0
    %p45 = por %p43, %p44
    %p46 = scmp.ne.s32.totalorder %s35, %s38
    %p47 = scmp.eq.s32.totalorder %s16, 1
    %p48 = por %p46, %p47
    %p49 = scmp.ne.s32.totalorder %s38, %s39
    %p50 = scmp.eq.s32.totalorder %s16, 0
    %p51 = por %p49, %p50
    %p52 = scmp.ne.s32.totalorder %s38, %s39
    %p53 = scmp.eq.s32.totalorder %s17, 1
    %p54 = por %p52, %p53
    %p56 = scmp.ne.s32.totalorder %s39, %s55
    %p57 = scmp.eq.s32.totalorder %s17, 0
    %p58 = por %p56, %p57
    %s60 = sadd.s32 %s59, 1
    %p63 = scmp.eq.s32.totalorder %s11, 1
    %p64 = scmp.ne.s32.totalorder %s59, %s61
    %p65 = scmp.eq.s32.totalorder %s11, 0
    %p66 = por %p64, %p65
    %p67 = scmp.ne.s32.totalorder %s59, %s61
    %p68 = scmp.eq.s32.totalorder %s16, 1
    %p69 = por %p67, %p68
    %p70 = scmp.ne.s32.totalorder %s61, %s62
    %p71 = scmp.eq.s32.totalorder %s16, 0
    %p72 = por %p70, %p71
    %p73 = scmp.ne.s32.totalorder %s61, %s62
    %p74 = scmp.eq.s32.totalorder %s17, 1
    %p75 = por %p73, %p74
    %p77 = scmp.ne.s32.totalorder %s62, %s76
    %p78 = scmp.eq.s32.totalorder %s17, 0
    %p79 = por %p77, %p78
    %s81 = sadd.s32 %s80, 1
    %p84 = scmp.eq.s32.totalorder %s11, 1
    %p85 = scmp.ne.s32.totalorder %s80, %s82
    %p86 = scmp.eq.s32.totalorder %s11, 0
    %p87 = por %p85, %p86
    %p88 = scmp.ne.s32.totalorder %s80, %s82
    %p89 = scmp.eq.s32.totalorder %s16, 1
    %p90 = por %p88, %p89
    %p91 = scmp.ne.s32.totalorder %s82, %s83
    %p92 = scmp.eq.s32.totalorder %s16, 0
    %p93 = por %p91, %p92
    %p94 = scmp.ne.s32.totalorder %s82, %s83
    %p95 = scmp.eq.s32.totalorder %s17, 1
    %p96 = por %p94, %p95
    %p98 = scmp.ne.s32.totalorder %s83, %s97
    %p99 = scmp.eq.s32.totalorder %s17, 0
    %p100 = por %p98, %p99
    %s101 = ssub.s32 %s18, %s30
    %s102 = ssub.s32 %s19, %s26
    %s103 = sor.u32 %s101, %s102
    %p104 = scmp.eq.s32.totalorder %s103, 0
    %s106 = sadd.s32 %s105, 1
    %s107 = scalar_select %p104, %s105, %s106
    %p110 = pneg %p104
    %p111 = scmp.eq.s32.totalorder %s11, 1
    %p112 = por %p110, %p111
    %p113 = scmp.ne.s32.totalorder %s105, %s108
    %p114 = scmp.eq.s32.totalorder %s11, 0
    %p115 = por %p113, %p114
    %p116 = scmp.ne.s32.totalorder %s105, %s108
    %p117 = scmp.eq.s32.totalorder %s16, 1
    %p118 = por %p116, %p117
    %p119 = scmp.ne.s32.totalorder %s108, %s109
    %p120 = scmp.eq.s32.totalorder %s16, 0
    %p121 = por %p119, %p120
    %p122 = scmp.ne.s32.totalorder %s108, %s109
    %p123 = scmp.eq.s32.totalorder %s17, 1
    %p124 = por %p122, %p123
    %p126 = scmp.ne.s32.totalorder %s109, %s125
    %p127 = scmp.eq.s32.totalorder %s17, 0
    %p128 = por %p126, %p127
    %s129 = ssub.s32 %s18, %s30
    %s130 = ssub.s32 %s19, %s26
    %s131 = sor.u32 %s129, %s130
    %p132 = scmp.eq.s32.totalorder %s131, 0
    %s134 = sadd.s32 %s133, 1
    %s135 = scalar_select %p132, %s133, %s134
    %p138 = pneg %p132
    %p139 = scmp.eq.s32.totalorder %s11, 1
    %p140 = por %p138, %p139
    %p141 = scmp.ne.s32.totalorder %s133, %s136
    %p142 = scmp.eq.s32.totalorder %s11, 0
    %p143 = por %p141, %p142
    %p144 = scmp.ne.s32.totalorder %s133, %s136
    %p145 = scmp.eq.s32.totalorder %s16, 1
    %p146 = por %p144, %p145
    %p147 = scmp.ne.s32.totalorder %s136, %s137
    %p148 = scmp.eq.s32.totalorder %s16, 0
    %p149 = por %p147, %p148
    %p150 = scmp.ne.s32.totalorder %s136, %s137
    %p151 = scmp.eq.s32.totalorder %s17, 1
    %p152 = por %p150, %p151
    %p154 = scmp.ne.s32.totalorder %s137, %s153
    %p155 = scmp.eq.s32.totalorder %s17, 0
    %p156 = por %p154, %p155
    %p157 = scmp.le.s32.totalorder 1, %s11
    %p158 = scmp.lt.s32.totalorder %s11, 3
    %p159 = pnand %p157, %p158
    %p160 = pneg %p159
    // Predicated region
    $region9: #{efm_forward.2} parent=5 // pred_check
      _
    $region10: #{efm_forward.2} parent=5 // pred_check_branch
      %162 = sbr.rel (%p159) target = $region12
    $region11: #{efm_forward.2} parent=5 // pred_region
      %s163 = ssub.s32 %s11, 1
      // Predicated region
      $region13: #{efm_forward.2} parent=11 // pred_check
        %p164 = pneg %p72
      $region14: #{efm_forward.2} parent=11 // pred_check_branch
        %166 = sbr.rel (%p164) target = $region16
      $region15: #{efm_forward.2} parent=11 // pred_region
        _
      $region16: #{efm_forward.2} parent=11 // pred_fallthru
        _
      // Predicated region
      $region17: #{efm_forward.2} parent=11 // pred_check
        %p167 = pneg %p93
      $region18: #{efm_forward.2} parent=11 // pred_check_branch
        %169 = sbr.rel (%p167) target = $region20
      $region19: #{efm_forward.2} parent=11 // pred_region
        _
      $region20: #{efm_forward.2} parent=11 // pred_fallthru
        _
    $region12: #{efm_forward.2} parent=5 // pred_fallthru
      _
    %p170 = scmp.lt.s32.totalorder %s11, 2
    // Predicated region
    $region21: #{efm_forward.2} parent=5 // pred_check
      %p171 = pneg %p170
    $region22: #{efm_forward.2} parent=5 // pred_check_branch
      %173 = sbr.rel (%p171) target = $region24
    $region23: #{efm_forward.2} parent=5 // pred_region
      // Predicated region
      $region25: #{efm_forward.2} parent=23 // pred_check
        %p174 = pneg %p45
      $region26: #{efm_forward.2} parent=23 // pred_check_branch
        %176 = sbr.rel (%p174) target = $region28
      $region27: #{efm_forward.2} parent=23 // pred_region
        %p177 = scmp.lt.s32.totalorder %s18, 1
        %s178 = scalar_select %p177, %s18, 1
        %p179 = scmp.lt.s32.totalorder %s19, 0
        %s180 = scalar_select %p179, %s19, 0
        %s181 = smul.addr %s180, 43
        %s182 = smul.addr %s178, 43
        %s183 = sadd.s32 %s181, %s182
        %s184 = smul.addr %s183, 4
        %s185 = scalar_lea.vmem %s0, %s184
      $region28: #{efm_forward.2} parent=23 // pred_fallthru
        _
    $region24: #{efm_forward.2} parent=5 // pred_fallthru
      _
    %p186 = scmp.le.s32.totalorder 1, %s11
    %p187 = scmp.lt.s32.totalorder %s11, 3
    %p188 = pnand %p186, %p187
    %p189 = pneg %p188
    // Predicated region
    $region29: #{efm_forward.2} parent=5 // pred_check
      _
    $region30: #{efm_forward.2} parent=5 // pred_check_branch
      %191 = sbr.rel (%p188) target = $region32
    $region31: #{efm_forward.2} parent=5 // pred_region
      %s192 = ssub.s32 %s11, 1
      %p193 = scmp.lt.s32.totalorder %s20, 1
      %s194 = scalar_select %p193, %s20, 1
      %p195 = scmp.lt.s32.totalorder %s21, 0
      %s196 = scalar_select %p195, %s21, 0
      %s197 = smul.addr %s196, 43
      %s198 = smul.addr %s194, 43
      %s199 = sadd.s32 %s197, %s198
      %s200 = smul.addr %s199, 4
      %s201 = scalar_lea.vmem %s0, %s200
      %p202 = pneg %p51
      %p203 = pneg %p48
      %p204 = pneg %p72
      %p205 = pneg %p69
      %p206 = pneg %p93
      %p207 = pneg %p90
      %p208 = pneg %p121
      %p209 = pneg %p118
      %p210 = scmp.lt.s32.totalorder %s20, 1
      %s211 = scalar_select %p210, %s20, 1
      %p212 = scmp.lt.s32.totalorder %s21, 0
      %s213 = scalar_select %p212, %s21, 0
      %s214 = smul.addr %s213, 36
      %s215 = smul.addr %s211, 36
      %s216 = sadd.s32 %s214, %s215
      %s217 = smul.addr %s216, 4
      %s218 = scalar_lea.vmem %s3, %s217
      %p219 = pneg %p149
      %p220 = pneg %p146
      %p221 = scmp.lt.s32.totalorder %s20, 1
      %s222 = scalar_select %p221, %s20, 1
      %p223 = scmp.lt.s32.totalorder %s21, 0
      %s224 = scalar_select %p223, %s21, 0
      %s225 = sadd.s32 %s224, %s222
      %s226 = scalar_lea.vmem %s4, %s225
      %p227 = scmp.lt.s32.totalorder %s20, 1
      %s228 = scalar_select %p227, %s20, 1
      %p229 = scmp.lt.s32.totalorder %s21, 0
      %s230 = scalar_select %p229, %s21, 0
      %s231 = smul.addr %s230, 43
      %s232 = smul.addr %s228, 43
      %s233 = sadd.s32 %s231, %s232
      %s234 = smul.addr %s233, 4
      %s235 = scalar_lea.vmem %s0, %s234
      %p236 = scmp.lt.s32.totalorder %s20, 1
      %s237 = scalar_select %p236, %s20, 1
      %p238 = scmp.lt.s32.totalorder %s21, 0
      %s239 = scalar_select %p238, %s21, 0
      %s240 = smul.addr %s239, 36
      %s241 = smul.addr %s237, 36
      %s242 = sadd.s32 %s240, %s241
      %s243 = smul.addr %s242, 4
      %s244 = scalar_lea.vmem %s3, %s243
      %p245 = scmp.lt.s32.totalorder %s20, 1
      %s246 = scalar_select %p245, %s20, 1
      %p247 = scmp.lt.s32.totalorder %s21, 0
      %s248 = scalar_select %p247, %s21, 0
      %s249 = sadd.s32 %s248, %s246
      %s250 = scalar_lea.vmem %s4, %s249
      %v252 = vld [vmem:[%s235] sm:$0xf]
      %v253 = vld [vmem:[%s235 + $0x4] sm:$0xf]
      %v254 = vld [vmem:[%s235 + $0x8] sm:$0xf]
      %v255 = vld [vmem:[%s235 + $0xc] sm:$0xf]
      %v256 = vld [vmem:[%s235 + $0x10] sm:$0xf]
      %v257 = vld [vmem:[%s235 + $0x14] sm:$0xf]
      %v258 = vld [vmem:[%s235 + $0x18] sm:$0xf]
      %v259 = vld [vmem:[%s235 + $0x1c] sm:$0xf]
      %v260 = vld [vmem:[%s235 + $0x20] sm:$0xf]
      %v261 = vld [vmem:[%s235 + $0x24] sm:$0xf]
      %v262 = vld [vmem:[%s235 + $0x28] sm:$0xf]
      %v263 = vld [vmem:[%s235 + $0x2c] sm:$0xf]
      %v264 = vld [vmem:[%s235 + $0x30] sm:$0xf]
      %v265 = vld [vmem:[%s235 + $0x34] sm:$0xf]
      %v266 = vld [vmem:[%s235 + $0x38] sm:$0xf]
      %v267 = vld [vmem:[%s235 + $0x3c] sm:$0xf]
      %v268 = vld [vmem:[%s235 + $0x40] sm:$0xf]
      %v269 = vld [vmem:[%s235 + $0x44] sm:$0xf]
      %v270 = vld [vmem:[%s235 + $0x48] sm:$0xf]
      %v271 = vld [vmem:[%s235 + $0x4c] sm:$0xf]
      %v272 = vld [vmem:[%s235 + $0x50] sm:$0xf]
      %v273 = vld [vmem:[%s235 + $0x54] sm:$0xf]
      %v274 = vld [vmem:[%s235 + $0x58] sm:$0xf]
      %v275 = vld [vmem:[%s235 + $0x5c] sm:$0xf]
      %v276 = vld [vmem:[%s235 + $0x60] sm:$0xf]
      %v277 = vld [vmem:[%s235 + $0x64] sm:$0xf]
      %v278 = vld [vmem:[%s235 + $0x68] sm:$0xf]
      %v279 = vld [vmem:[%s235 + $0x6c] sm:$0xf]
      %v280 = vld [vmem:[%s235 + $0x70] sm:$0xf]
      %v281 = vld [vmem:[%s235 + $0x74] sm:$0xf]
      %v282 = vld [vmem:[%s235 + $0x78] sm:$0xf]
      %v283 = vld [vmem:[%s235 + $0x7c] sm:$0xf]
      %v284 = vld [vmem:[%s235 + $0x80] sm:$0xf]
      %v285 = vld [vmem:[%s235 + $0x84] sm:$0xf]
      %v286 = vld [vmem:[%s235 + $0x88] sm:$0xf]
      %v287 = vld [vmem:[%s235 + $0x8c] sm:$0xf]
      %v288 = vld [vmem:[%s1] sm:$0xf]
      %v289 = vld [vmem:[%s1 + $0x4] sm:$0xf]
      %v290 = vld [vmem:[%s235 + $0x90] sm:$0x1]
      %s291 = scalar_lea.vmem %s1, 8
      %v292 = vld [vmem:[%s291] sm:$0xf]
      %v293 = vld [vmem:[%s291 + $0x4] sm:$0xf]
      %v331 = vunpack.c.l.b16 %v252
      %v332 = vunpack.c.l.b16 %v253
      %v333 = vunpack.c.l.b16 %v254
      %v334 = vunpack.c.l.b16 %v255
      %v335 = vunpack.c.l.b16 %v256
      %v336 = vunpack.c.l.b16 %v257
      %v337 = vunpack.c.l.b16 %v258
      %v338 = vunpack.c.l.b16 %v259
      %v339 = vunpack.c.l.b16 %v260
      %v340 = vunpack.c.l.b16 %v261
      %v341 = vunpack.c.l.b16 %v262
      %v342 = vunpack.c.l.b16 %v263
      %v343 = vunpack.c.l.b16 %v264
      %v344 = vunpack.c.l.b16 %v265
      %v345 = vunpack.c.l.b16 %v266
      %v346 = vunpack.c.l.b16 %v267
      %v347 = vunpack.c.l.b16 %v268
      %v348 = vunpack.c.l.b16 %v269
      %v349 = vunpack.c.l.b16 %v270
      %v350 = vunpack.c.l.b16 %v271
      %v351 = vunpack.c.l.b16 %v272
      %v352 = vunpack.c.l.b16 %v273
      %v353 = vunpack.c.l.b16 %v274
      %v354 = vunpack.c.l.b16 %v275
      %v355 = vunpack.c.l.b16 %v276
      %v356 = vunpack.c.l.b16 %v277
      %v357 = vunpack.c.l.b16 %v278
      %v358 = vunpack.c.l.b16 %v279
      %v359 = vunpack.c.l.b16 %v280
      %v360 = vunpack.c.l.b16 %v281
      %v361 = vunpack.c.l.b16 %v282
      %v362 = vunpack.c.l.b16 %v283
      %v363 = vunpack.c.l.b16 %v284
      %v364 = vunpack.c.l.b16 %v285
      %v365 = vunpack.c.l.b16 %v286
      %v366 = vunpack.c.l.b16 %v287
      %v367 = vunpack.c.l.b16 %v290
      %v368 = vpack.c.b16 %v332, %v331
      %v369 = vpack.c.b16 %v334, %v333
      %v370 = vpack.c.b16 %v336, %v335
      %v371 = vpack.c.b16 %v338, %v337
      %v372 = vpack.c.b16 %v340, %v339
      %v373 = vpack.c.b16 %v342, %v341
      %v374 = vpack.c.b16 %v344, %v343
      %v375 = vpack.c.b16 %v346, %v345
      %v376 = vpack.c.b16 %v348, %v347
      %v377 = vpack.c.b16 %v350, %v349
      %v378 = vpack.c.b16 %v352, %v351
      %v379 = vpack.c.b16 %v354, %v353
      %v380 = vpack.c.b16 %v356, %v355
      %v381 = vpack.c.b16 %v358, %v357
      %v382 = vpack.c.b16 %v360, %v359
      %v383 = vpack.c.b16 %v362, %v361
      %v384 = vpack.c.b16 %v364, %v363
      %v385 = vpack.c.b16 %v366, %v365
      %v386 = vpack.c.b16 %v367, %v367
      %vm387 = vsmask.f32 7424
      %v389 = vshrl.u32 %v368, 16
      %v391 = vshll.u32 %v368, 16
      %v393 = vrot.slane %v391, 1
      %v394 = vor.u32 %v389, %v393
      %v396 = vshll.u32 %v369, 16
      %v398 = vrot.slane %v396, 1
      %v399 = vsel %vm387, %v394, %v398
      %v400 = vshrl.u32 %v369, 16
      %v402 = vor.u32 %v400, %v398
      %v404 = vshll.u32 %v370, 16
      %v406 = vrot.slane %v404, 1
      %v407 = vsel %vm387, %v402, %v406
      %v408 = vshrl.u32 %v370, 16
      %v410 = vor.u32 %v408, %v406
      %v412 = vshll.u32 %v371, 16
      %v414 = vrot.slane %v412, 1
      %v415 = vsel %vm387, %v410, %v414
      %v416 = vshrl.u32 %v371, 16
      %v418 = vor.u32 %v416, %v414
      %v420 = vshll.u32 %v372, 16
      %v422 = vrot.slane %v420, 1
      %v423 = vsel %vm387, %v418, %v422
      %v424 = vshrl.u32 %v372, 16
      %v426 = vor.u32 %v424, %v422
      %v428 = vshll.u32 %v373, 16
      %v430 = vrot.slane %v428, 1
      %v431 = vsel %vm387, %v426, %v430
      %v432 = vshrl.u32 %v373, 16
      %v434 = vor.u32 %v432, %v430
      %v436 = vshll.u32 %v374, 16
      %v438 = vrot.slane %v436, 1
      %v439 = vsel %vm387, %v434, %v438
      %v440 = vshrl.u32 %v374, 16
      %v442 = vor.u32 %v440, %v438
      %v444 = vshll.u32 %v375, 16
      %v446 = vrot.slane %v444, 1
      %v447 = vsel %vm387, %v442, %v446
      %v448 = vshrl.u32 %v375, 16
      %v450 = vor.u32 %v448, %v446
      %v452 = vshll.u32 %v376, 16
      %v454 = vrot.slane %v452, 1
      %v455 = vsel %vm387, %v450, %v454
      %v456 = vshrl.u32 %v376, 16
      %v458 = vor.u32 %v456, %v454
      %v460 = vshll.u32 %v377, 16
      %v462 = vrot.slane %v460, 1
      %v463 = vsel %vm387, %v458, %v462
      %v464 = vshrl.u32 %v377, 16
      %v466 = vor.u32 %v464, %v462
      %v468 = vshll.u32 %v378, 16
      %v470 = vrot.slane %v468, 1
      %v471 = vsel %vm387, %v466, %v470
      %v472 = vshrl.u32 %v378, 16
      %v474 = vor.u32 %v472, %v470
      %v476 = vshll.u32 %v379, 16
      %v478 = vrot.slane %v476, 1
      %v479 = vsel %vm387, %v474, %v478
      %v480 = vshrl.u32 %v379, 16
      %v482 = vor.u32 %v480, %v478
      %v484 = vshll.u32 %v380, 16
      %v486 = vrot.slane %v484, 1
      %v487 = vsel %vm387, %v482, %v486
      %v488 = vshrl.u32 %v380, 16
      %v490 = vor.u32 %v488, %v486
      %v492 = vshll.u32 %v381, 16
      %v494 = vrot.slane %v492, 1
      %v495 = vsel %vm387, %v490, %v494
      %v496 = vshrl.u32 %v381, 16
      %v498 = vor.u32 %v496, %v494
      %v500 = vshll.u32 %v382, 16
      %v502 = vrot.slane %v500, 1
      %v503 = vsel %vm387, %v498, %v502
      %v504 = vshrl.u32 %v382, 16
      %v506 = vor.u32 %v504, %v502
      %v508 = vshll.u32 %v383, 16
      %v510 = vrot.slane %v508, 1
      %v511 = vsel %vm387, %v506, %v510
      %v512 = vshrl.u32 %v383, 16
      %v514 = vor.u32 %v512, %v510
      %v516 = vshll.u32 %v384, 16
      %v518 = vrot.slane %v516, 1
      %v519 = vsel %vm387, %v514, %v518
      %v520 = vshrl.u32 %v384, 16
      %v522 = vor.u32 %v520, %v518
      %v524 = vshll.u32 %v385, 16
      %v526 = vrot.slane %v524, 1
      %v527 = vsel %vm387, %v522, %v526
      %v528 = vshrl.u32 %v385, 16
      %v530 = vor.u32 %v528, %v526
      %v532 = vshll.u32 %v386, 16
      %v534 = vrot.slane %v532, 1
      %v535 = vsel %vm387, %v530, %v534
      %v538 = vunpack.c.l.b16 %v292
      %v539 = vunpack.c.l.b16 %v293
      %v540 = vpack.c.b16 %v539, %v538
      %vm542 = vcmask 130048
      %v544 = vsel %vm542, %v399, 0
      %v547 = vsel %vm542, %v407, 0
      %v550 = vsel %vm542, %v415, 0
      %v553 = vsel %vm542, %v423, 0
      %v556 = vsel %vm542, %v431, 0
      %v559 = vsel %vm542, %v439, 0
      %v562 = vsel %vm542, %v447, 0
      %v565 = vsel %vm542, %v455, 0
      %v568 = vsel %vm542, %v463, 0
      %v571 = vsel %vm542, %v471, 0
      %v574 = vsel %vm542, %v479, 0
      %v577 = vsel %vm542, %v487, 0
      %v580 = vsel %vm542, %v495, 0
      %v583 = vsel %vm542, %v503, 0
      %v586 = vsel %vm542, %v511, 0
      %v589 = vsel %vm542, %v519, 0
      %v592 = vsel %vm542, %v527, 0
      %v595 = vsel %vm542, %v535, 0
      %597 = vmatprep.subr.bf16.mxu0 0
      %598 = vmatpush1.bf16.msra.mxu0 %v540
      %599 = vmatprep.subr.bf16.mxu0 0
      %600 = vmatpush1.bf16.msra.mxu0 0
      %601 = vmatprep.subr.bf16.mxu0 0
      %602 = vmatpush1.bf16.msra.mxu0 0
      %603 = vmatprep.subr.bf16.mxu0 0
      %604 = vmatpush1.bf16.msra.mxu0 0
      %605 = vmatprep.subr.bf16.mxu0 0
      %606 = vmatpush1.bf16.msra.mxu0 0
      %607 = vmatprep.subr.bf16.mxu0 0
      %608 = vmatpush1.bf16.msra.mxu0 0
      %609 = vmatprep.subr.bf16.mxu0 0
      %610 = vmatpush1.bf16.msra.mxu0 0
      %611 = vmatprep.subr.bf16.mxu0 0
      %612 = vmatpush1.bf16.msra.mxu0 0
      %613 = vmatprep.subr.bf16.mxu0 0
      %614 = vmatpush1.bf16.msra.mxu0 0
      %615 = vmatprep.subr.bf16.mxu0 0
      %616 = vmatpush1.bf16.msra.mxu0 0
      %617 = vmatprep.subr.bf16.mxu0 0
      %618 = vmatpush1.bf16.msra.mxu0 0
      %619 = vmatprep.subr.bf16.mxu0 0
      %620 = vmatpush1.bf16.msra.mxu0 0
      %621 = vmatprep.subr.bf16.mxu0 0
      %622 = vmatpush1.bf16.msra.mxu0 0
      %623 = vmatprep.subr.bf16.mxu0 0
      %624 = vmatpush1.bf16.msra.mxu0 0
      %625 = vmatprep.subr.bf16.mxu0 0
      %626 = vmatpush1.bf16.msra.mxu0 0
      %627 = vmatprep.subr.bf16.mxu0 0
      %628 = vmatpush1.bf16.msra.mxu0 0
      %629 = vmatprep.mubr.bf16.mxu0 0
      %630 = vmatmul.mubr.bf16.gmra.mrb[0].mxu0 %v544
      %v631 = vpop.f32.mrb[0].mxu0
      %v632 = vadd.f32 0.0, %v631
      %v633 = vpop.f32.mrb[0].mxu0
      %v634 = vpop.f32.mrb[0].mxu0
      %v635 = vadd.f32 0.0, %v634
      %v636 = vpop.f32.mrb[0].mxu0
      %637 = vmatprep.mubr.bf16.mxu0 0
      %638 = vmatmul.mubr.bf16.gmra.mrb[0].mxu0 %v547
      %v639 = vpop.f32.mrb[0].mxu0
      %v640 = vadd.f32 0.0, %v639
      %v641 = vpop.f32.mrb[0].mxu0
      %v642 = vpop.f32.mrb[0].mxu0
      %v643 = vadd.f32 0.0, %v642
      %v644 = vpop.f32.mrb[0].mxu0
      %645 = vmatprep.mubr.bf16.mxu0 0
      %646 = vmatmul.mubr.bf16.gmra.mrb[0].mxu0 %v550
      %v647 = vpop.f32.mrb[0].mxu0
      %v648 = vadd.f32 0.0, %v647
      %v649 = vpop.f32.mrb[0].mxu0
      %v650 = vpop.f32.mrb[0].mxu0
      %v651 = vadd.f32 0.0, %v650
      %v652 = vpop.f32.mrb[0].mxu0
      %653 = vmatprep.mubr.bf16.mxu0 0
      %654 = vmatmul.mubr.bf16.gmra.mrb[0].mxu0 %v553
      %v655 = vpop.f32.mrb[0].mxu0
      %v656 = vadd.f32 0.0, %v655
      %v657 = vpop.f32.mrb[0].mxu0
      %v658 = vpop.f32.mrb[0].mxu0
      %v659 = vadd.f32 0.0, %v658
      %v660 = vpop.f32.mrb[0].mxu0
      %661 = vmatprep.mubr.bf16.mxu0 0
      %662 = vmatmul.mubr.bf16.gmra.mrb[0].mxu0 %v556
      %v663 = vpop.f32.mrb[0].mxu0
      %v664 = vadd.f32 0.0, %v663
      %v665 = vpop.f32.mrb[0].mxu0
      %v666 = vpop.f32.mrb[0].mxu0
      %v667 = vadd.f32 0.0, %v666
      %v668 = vpop.f32.mrb[0].mxu0
      %669 = vmatprep.mubr.bf16.mxu0 0
      %670 = vmatmul.mubr.bf16.gmra.mrb[0].mxu0 %v559
      %v671 = vpop.f32.mrb[0].mxu0
      %v672 = vadd.f32 0.0, %v671
      %v673 = vpop.f32.mrb[0].mxu0
      %v674 = vpop.f32.mrb[0].mxu0
      %v675 = vadd.f32 0.0, %v674
      %v676 = vpop.f32.mrb[0].mxu0
      %677 = vmatprep.mubr.bf16.mxu0 0
      %678 = vmatmul.mubr.bf16.gmra.mrb[0].mxu0 %v562
      %v679 = vpop.f32.mrb[0].mxu0
      %v680 = vadd.f32 0.0, %v679
      %v681 = vpop.f32.mrb[0].mxu0
      %v682 = vpop.f32.mrb[0].mxu0
      %v683 = vadd.f32 0.0, %v682
      %v684 = vpop.f32.mrb[0].mxu0
      %685 = vmatprep.mubr.bf16.mxu0 0
      %686 = vmatmul.mubr.bf16.gmra.mrb[0].mxu0 %v565
      %v687 = vpop.f32.mrb[0].mxu0
      %v688 = vadd.f32 0.0, %v687
      %v689 = vpop.f32.mrb[0].mxu0
      %v690 = vpop.f32.mrb[0].mxu0
      %v691 = vadd.f32 0.0, %v690
      %v692 = vpop.f32.mrb[0].mxu0
      %693 = vmatprep.mubr.bf16.mxu0 0
      %694 = vmatmul.mubr.bf16.gmra.mrb[0].mxu0 %v568
      %v695 = vpop.f32.mrb[0].mxu0
      %v696 = vadd.f32 0.0, %v695
      %v697 = vpop.f32.mrb[0].mxu0
      %v698 = vpop.f32.mrb[0].mxu0
      %v699 = vadd.f32 0.0, %v698
      %v700 = vpop.f32.mrb[0].mxu0
      %701 = vmatprep.mubr.bf16.mxu0 0
      %702 = vmatmul.mubr.bf16.gmra.mrb[0].mxu0 %v571
      %v703 = vpop.f32.mrb[0].mxu0
      %v704 = vadd.f32 0.0, %v703
      %v705 = vpop.f32.mrb[0].mxu0
      %v706 = vpop.f32.mrb[0].mxu0
      %v707 = vadd.f32 0.0, %v706
      %v708 = vpop.f32.mrb[0].mxu0
      %709 = vmatprep.mubr.bf16.mxu0 0
      %710 = vmatmul.mubr.bf16.gmra.mrb[0].mxu0 %v574
      %v711 = vpop.f32.mrb[0].mxu0
      %v712 = vadd.f32 0.0, %v711
      %v713 = vpop.f32.mrb[0].mxu0
      %v714 = vpop.f32.mrb[0].mxu0
      %v715 = vadd.f32 0.0, %v714
      %v716 = vpop.f32.mrb[0].mxu0
      %717 = vmatprep.mubr.bf16.mxu0 0
      %718 = vmatmul.mubr.bf16.gmra.mrb[0].mxu0 %v577
      %v719 = vpop.f32.mrb[0].mxu0
      %v720 = vadd.f32 0.0, %v719
      %v721 = vpop.f32.mrb[0].mxu0
      %v722 = vpop.f32.mrb[0].mxu0
      %v723 = vadd.f32 0.0, %v722
      %v724 = vpop.f32.mrb[0].mxu0
      %725 = vmatprep.mubr.bf16.mxu0 0
      %726 = vmatmul.mubr.bf16.gmra.mrb[0].mxu0 %v580
      %v727 = vpop.f32.mrb[0].mxu0
      %v728 = vadd.f32 0.0, %v727
      %v729 = vpop.f32.mrb[0].mxu0
      %v730 = vpop.f32.mrb[0].mxu0
      %v731 = vadd.f32 0.0, %v730
      %v732 = vpop.f32.mrb[0].mxu0
      %733 = vmatprep.mubr.bf16.mxu0 0
      %734 = vmatmul.mubr.bf16.gmra.mrb[0].mxu0 %v583
      %v735 = vpop.f32.mrb[0].mxu0
      %v736 = vadd.f32 0.0, %v735
      %v737 = vpop.f32.mrb[0].mxu0
      %v738 = vpop.f32.mrb[0].mxu0
      %v739 = vadd.f32 0.0, %v738
      %v740 = vpop.f32.mrb[0].mxu0
      %741 = vmatprep.mubr.bf16.mxu0 0
      %742 = vmatmul.mubr.bf16.gmra.mrb[0].mxu0 %v586
      %v743 = vpop.f32.mrb[0].mxu0
      %v744 = vadd.f32 0.0, %v743
      %v745 = vpop.f32.mrb[0].mxu0
      %v746 = vpop.f32.mrb[0].mxu0
      %v747 = vadd.f32 0.0, %v746
      %v748 = vpop.f32.mrb[0].mxu0
      %749 = vmatprep.mubr.bf16.mxu0 0
      %750 = vmatmul.mubr.bf16.gmra.mrb[0].mxu0 %v589
      %v751 = vpop.f32.mrb[0].mxu0
      %v752 = vadd.f32 0.0, %v751
      %v753 = vpop.f32.mrb[0].mxu0
      %v754 = vpop.f32.mrb[0].mxu0
      %v755 = vadd.f32 0.0, %v754
      %v756 = vpop.f32.mrb[0].mxu0
      %757 = vmatprep.mubr.bf16.mxu0 0
      %758 = vmatmul.mubr.bf16.gmra.mrb[0].mxu0 %v592
      %v759 = vpop.f32.mrb[0].mxu0
      %v760 = vadd.f32 0.0, %v759
      %v761 = vpop.f32.mrb[0].mxu0
      %v762 = vpop.f32.mrb[0].mxu0
      %v763 = vadd.f32 0.0, %v762
      %v764 = vpop.f32.mrb[0].mxu0
      %765 = vmatprep.mubr.bf16.mxu0 0
      %766 = vmatmul.mubr.bf16.gmra.mrb[0].mxu0 %v595
      %v767 = vpop.f32.mrb[0].mxu0
      %v768 = vadd.f32 0.0, %v767
      %v769 = vpop.f32.mrb[0].mxu0
      %v770 = vpop.f32.mrb[0].mxu0
      %v771 = vadd.f32 0.0, %v770
      %v772 = vpop.f32.mrb[0].mxu0
      %773 = vdwg.mxu0
      %v776 = vunpack.c.l.b16 %v288
      %v777 = vunpack.c.l.b16 %v289
      %v778 = vpack.c.b16 %v777, %v776
      %v780 = vsel %vm542, %v368, 0
      %v782 = vsel %vm542, %v369, 0
      %v784 = vsel %vm542, %v370, 0
      %v786 = vsel %vm542, %v371, 0
      %v788 = vsel %vm542, %v372, 0
      %v790 = vsel %vm542, %v373, 0
      %v792 = vsel %vm542, %v374, 0
      %v794 = vsel %vm542, %v375, 0
      %v796 = vsel %vm542, %v376, 0
      %v798 = vsel %vm542, %v377, 0
      %v800 = vsel %vm542, %v378, 0
      %v802 = vsel %vm542, %v379, 0
      %v804 = vsel %vm542, %v380, 0
      %v806 = vsel %vm542, %v381, 0
      %v808 = vsel %vm542, %v382, 0
      %v810 = vsel %vm542, %v383, 0
      %v812 = vsel %vm542, %v384, 0
      %v814 = vsel %vm542, %v385, 0
      %816 = vmatprep.subr.bf16.mxu0 0
      %817 = vmatpush1.bf16.msra.mxu0 %v778
      %818 = vmatprep.subr.bf16.mxu0 0
      %819 = vmatpush1.bf16.msra.mxu0 0
      %820 = vmatprep.subr.bf16.mxu0 0
      %821 = vmatpush1.bf16.msra.mxu0 0
      %822 = vmatprep.subr.bf16.mxu0 0
      %823 = vmatpush1.bf16.msra.mxu0 0
      %824 = vmatprep.subr.bf16.mxu0 0
      %825 = vmatpush1.bf16.msra.mxu0 0
      %826 = vmatprep.subr.bf16.mxu0 0
      %827 = vmatpush1.bf16.msra.mxu0 0
      %828 = vmatprep.subr.bf16.mxu0 0
      %829 = vmatpush1.bf16.msra.mxu0 0
      %830 = vmatprep.subr.bf16.mxu0 0
      %831 = vmatpush1.bf16.msra.mxu0 0
      %832 = vmatprep.subr.bf16.mxu0 0
      %833 = vmatpush1.bf16.msra.mxu0 0
      %834 = vmatprep.subr.bf16.mxu0 0
      %835 = vmatpush1.bf16.msra.mxu0 0
      %836 = vmatprep.subr.bf16.mxu0 0
      %837 = vmatpush1.bf16.msra.mxu0 0
      %838 = vmatprep.subr.bf16.mxu0 0
      %839 = vmatpush1.bf16.msra.mxu0 0
      %840 = vmatprep.subr.bf16.mxu0 0
      %841 = vmatpush1.bf16.msra.mxu0 0
      %842 = vmatprep.subr.bf16.mxu0 0
      %843 = vmatpush1.bf16.msra.mxu0 0
      %844 = vmatprep.subr.bf16.mxu0 0
      %845 = vmatpush1.bf16.msra.mxu0 0
      %846 = vmatprep.subr.bf16.mxu0 0
      %847 = vmatpush1.bf16.msra.mxu0 0
      %848 = vmatprep.mubr.bf16.mxu0 0
      %849 = vmatmul.mubr.bf16.gmra.mrb[0].mxu0 %v780
      %v850 = vpop.f32.mrb[0].mxu0
      %v851 = vadd.f32 %v632, %v850
      %v852 = vpop.f32.mrb[0].mxu0
      %v853 = vpop.f32.mrb[0].mxu0
      %v854 = vadd.f32 %v635, %v853
      %v855 = vpop.f32.mrb[0].mxu0
      %856 = vmatprep.mubr.bf16.mxu0 0
      %857 = vmatmul.mubr.bf16.gmra.mrb[0].mxu0 %v782
      %v858 = vpop.f32.mrb[0].mxu0
      %v859 = vadd.f32 %v640, %v858
      %v860 = vpop.f32.mrb[0].mxu0
      %v861 = vpop.f32.mrb[0].mxu0
      %v862 = vadd.f32 %v643, %v861
      %v863 = vpop.f32.mrb[0].mxu0
      %864 = vmatprep.mubr.bf16.mxu0 0
      %865 = vmatmul.mubr.bf16.gmra.mrb[0].mxu0 %v784
      %v866 = vpop.f32.mrb[0].mxu0
      %v867 = vadd.f32 %v648, %v866
      %v868 = vpop.f32.mrb[0].mxu0
      %v869 = vpop.f32.mrb[0].mxu0
      %v870 = vadd.f32 %v651, %v869
      %v871 = vpop.f32.mrb[0].mxu0
      %872 = vmatprep.mubr.bf16.mxu0 0
      %873 = vmatmul.mubr.bf16.gmra.mrb[0].mxu0 %v786
      %v874 = vpop.f32.mrb[0].mxu0
      %v875 = vadd.f32 %v656, %v874
      %v876 = vpop.f32.mrb[0].mxu0
      %v877 = vpop.f32.mrb[0].mxu0
      %v878 = vadd.f32 %v659, %v877
      %v879 = vpop.f32.mrb[0].mxu0
      %880 = vmatprep.mubr.bf16.mxu0 0
      %881 = vmatmul.mubr.bf16.gmra.mrb[0].mxu0 %v788
      %v882 = vpop.f32.mrb[0].mxu0
      %v883 = vadd.f32 %v664, %v882
      %v884 = vpop.f32.mrb[0].mxu0
      %v885 = vpop.f32.mrb[0].mxu0
      %v886 = vadd.f32 %v667, %v885
      %v887 = vpop.f32.mrb[0].mxu0
      %888 = vmatprep.mubr.bf16.mxu0 0
      %889 = vmatmul.mubr.bf16.gmra.mrb[0].mxu0 %v790
      %v890 = vpop.f32.mrb[0].mxu0
      %v891 = vadd.f32 %v672, %v890
      %v892 = vpop.f32.mrb[0].mxu0
      %v893 = vpop.f32.mrb[0].mxu0
      %v894 = vadd.f32 %v675, %v893
      %v895 = vpop.f32.mrb[0].mxu0
      %896 = vmatprep.mubr.bf16.mxu0 0
      %897 = vmatmul.mubr.bf16.gmra.mrb[0].mxu0 %v792
      %v898 = vpop.f32.mrb[0].mxu0
      %v899 = vadd.f32 %v680, %v898
      %v900 = vpop.f32.mrb[0].mxu0
      %v901 = vpop.f32.mrb[0].mxu0
      %v902 = vadd.f32 %v683, %v901
      %v903 = vpop.f32.mrb[0].mxu0
      %904 = vmatprep.mubr.bf16.mxu0 0
      %905 = vmatmul.mubr.bf16.gmra.mrb[0].mxu0 %v794
      %v906 = vpop.f32.mrb[0].mxu0
      %v907 = vadd.f32 %v688, %v906
      %v908 = vpop.f32.mrb[0].mxu0
      %v909 = vpop.f32.mrb[0].mxu0
      %v910 = vadd.f32 %v691, %v909
      %v911 = vpop.f32.mrb[0].mxu0
      %912 = vmatprep.mubr.bf16.mxu0 0
      %913 = vmatmul.mubr.bf16.gmra.mrb[0].mxu0 %v796
      %v914 = vpop.f32.mrb[0].mxu0
      %v915 = vadd.f32 %v696, %v914
      %v916 = vpop.f32.mrb[0].mxu0
      %v917 = vpop.f32.mrb[0].mxu0
      %v918 = vadd.f32 %v699, %v917
      %v919 = vpop.f32.mrb[0].mxu0
      %920 = vmatprep.mubr.bf16.mxu0 0
      %921 = vmatmul.mubr.bf16.gmra.mrb[0].mxu0 %v798
      %v922 = vpop.f32.mrb[0].mxu0
      %v923 = vadd.f32 %v704, %v922
      %v924 = vpop.f32.mrb[0].mxu0
      %v925 = vpop.f32.mrb[0].mxu0
      %v926 = vadd.f32 %v707, %v925
      %v927 = vpop.f32.mrb[0].mxu0
      %928 = vmatprep.mubr.bf16.mxu0 0
      %929 = vmatmul.mubr.bf16.gmra.mrb[0].mxu0 %v800
      %v930 = vpop.f32.mrb[0].mxu0
      %v931 = vadd.f32 %v712, %v930
      %v932 = vpop.f32.mrb[0].mxu0
      %v933 = vpop.f32.mrb[0].mxu0
      %v934 = vadd.f32 %v715, %v933
      %v935 = vpop.f32.mrb[0].mxu0
      %936 = vmatprep.mubr.bf16.mxu0 0
      %937 = vmatmul.mubr.bf16.gmra.mrb[0].mxu0 %v802
      %v938 = vpop.f32.mrb[0].mxu0
      %v939 = vadd.f32 %v720, %v938
      %v940 = vpop.f32.mrb[0].mxu0
      %v941 = vpop.f32.mrb[0].mxu0
      %v942 = vadd.f32 %v723, %v941
      %v943 = vpop.f32.mrb[0].mxu0
      %944 = vmatprep.mubr.bf16.mxu0 0
      %945 = vmatmul.mubr.bf16.gmra.mrb[0].mxu0 %v804
      %v946 = vpop.f32.mrb[0].mxu0
      %v947 = vadd.f32 %v728, %v946
      %v948 = vpop.f32.mrb[0].mxu0
      %v949 = vpop.f32.mrb[0].mxu0
      %v950 = vadd.f32 %v731, %v949
      %v951 = vpop.f32.mrb[0].mxu0
      %952 = vmatprep.mubr.bf16.mxu0 0
      %953 = vmatmul.mubr.bf16.gmra.mrb[0].mxu0 %v806
      %v954 = vpop.f32.mrb[0].mxu0
      %v955 = vadd.f32 %v736, %v954
      %v956 = vpop.f32.mrb[0].mxu0
      %v957 = vpop.f32.mrb[0].mxu0
      %v958 = vadd.f32 %v739, %v957
      %v959 = vpop.f32.mrb[0].mxu0
      %960 = vmatprep.mubr.bf16.mxu0 0
      %961 = vmatmul.mubr.bf16.gmra.mrb[0].mxu0 %v808
      %v962 = vpop.f32.mrb[0].mxu0
      %v963 = vadd.f32 %v744, %v962
      %v964 = vpop.f32.mrb[0].mxu0
      %v965 = vpop.f32.mrb[0].mxu0
      %v966 = vadd.f32 %v747, %v965
      %v967 = vpop.f32.mrb[0].mxu0
      %968 = vmatprep.mubr.bf16.mxu0 0
      %969 = vmatmul.mubr.bf16.gmra.mrb[0].mxu0 %v810
      %v970 = vpop.f32.mrb[0].mxu0
      %v971 = vadd.f32 %v752, %v970
      %v972 = vpop.f32.mrb[0].mxu0
      %v973 = vpop.f32.mrb[0].mxu0
      %v974 = vadd.f32 %v755, %v973
      %v975 = vpop.f32.mrb[0].mxu0
      %976 = vmatprep.mubr.bf16.mxu0 0
      %977 = vmatmul.mubr.bf16.gmra.mrb[0].mxu0 %v812
      %v978 = vpop.f32.mrb[0].mxu0
      %v979 = vadd.f32 %v760, %v978
      %v980 = vpop.f32.mrb[0].mxu0
      %v981 = vpop.f32.mrb[0].mxu0
      %v982 = vadd.f32 %v763, %v981
      %v983 = vpop.f32.mrb[0].mxu0
      %984 = vmatprep.mubr.bf16.mxu0 0
      %985 = vmatmul.mubr.bf16.gmra.mrb[0].mxu0 %v814
      %v986 = vpop.f32.mrb[0].mxu0
      %v987 = vadd.f32 %v768, %v986
      %v988 = vpop.f32.mrb[0].mxu0
      %v989 = vpop.f32.mrb[0].mxu0
      %v990 = vadd.f32 %v771, %v989
      %v991 = vpop.f32.mrb[0].mxu0
      %992 = vdwg.mxu0
      %v993 = vld [vmem:[%s235] sm:$0xe]
      %s994 = scalar_lea.vmem %s1, 16
      %v995 = vld [vmem:[%s994] sm:$0xf]
      %v996 = vld [vmem:[%s994 + $0x4] sm:$0xf]
      %v998 = vunpack.c.l.b16 %v993
      %v999 = vpack.c.b16 %v332, %v998
      %vm1000 = vcmask 1046528
      %v1001 = vrot.slane %v999, 1
      %v1002 = vrot.slane %v369, 1
      %v1003 = vsel %vm1000, %v1001, %v1002
      %v1004 = vrot.slane %v370, 1
      %v1005 = vsel %vm1000, %v1002, %v1004
      %v1006 = vrot.slane %v371, 1
      %v1007 = vsel %vm1000, %v1004, %v1006
      %v1008 = vrot.slane %v372, 1
      %v1009 = vsel %vm1000, %v1006, %v1008
      %v1010 = vrot.slane %v373, 1
      %v1011 = vsel %vm1000, %v1008, %v1010
      %v1012 = vrot.slane %v374, 1
      %v1013 = vsel %vm1000, %v1010, %v1012
      %v1014 = vrot.slane %v375, 1
      %v1015 = vsel %vm1000, %v1012, %v1014
      %v1016 = vrot.slane %v376, 1
      %v1017 = vsel %vm1000, %v1014, %v1016
      %v1018 = vrot.slane %v377, 1
      %v1019 = vsel %vm1000, %v1016, %v1018
      %v1020 = vrot.slane %v378, 1
      %v1021 = vsel %vm1000, %v1018, %v1020
      %v1022 = vrot.slane %v379, 1
      %v1023 = vsel %vm1000, %v1020, %v1022
      %v1024 = vrot.slane %v380, 1
      %v1025 = vsel %vm1000, %v1022, %v1024
      %v1026 = vrot.slane %v381, 1
      %v1027 = vsel %vm1000, %v1024, %v1026
      %v1028 = vrot.slane %v382, 1
      %v1029 = vsel %vm1000, %v1026, %v1028
      %v1030 = vrot.slane %v383, 1
      %v1031 = vsel %vm1000, %v1028, %v1030
      %v1032 = vrot.slane %v384, 1
      %v1033 = vsel %vm1000, %v1030, %v1032
      %v1034 = vrot.slane %v385, 1
      %v1035 = vsel %vm1000, %v1032, %v1034
      %v1036 = vrot.slane %v386, 1
      %v1037 = vsel %vm1000, %v1034, %v1036
      %v1040 = vunpack.c.l.b16 %v995
      %v1041 = vunpack.c.l.b16 %v996
      %v1042 = vpack.c.b16 %v1041, %v1040
      %v1045 = vsel %vm542, %v1003, 0
      %v1048 = vsel %vm542, %v1005, 0
      %v1051 = vsel %vm542, %v1007, 0
      %v1054 = vsel %vm542, %v1009, 0
      %v1057 = vsel %vm542, %v1011, 0
      %v1060 = vsel %vm542, %v1013, 0
      %v1063 = vsel %vm542, %v1015, 0
      %v1066 = vsel %vm542, %v1017, 0
      %v1069 = vsel %vm542, %v1019, 0
      %v1072 = vsel %vm542, %v1021, 0
      %v1075 = vsel %vm542, %v1023, 0
      %v1078 = vsel %vm542, %v1025, 0
      %v1081 = vsel %vm542, %v1027, 0
      %v1084 = vsel %vm542, %v1029, 0
      %v1087 = vsel %vm542, %v1031, 0
      %v1090 = vsel %vm542, %v1033, 0
      %v1093 = vsel %vm542, %v1035, 0
      %v1096 = vsel %vm542, %v1037, 0
      %1098 = vmatprep.subr.bf16.mxu0 0
      %1099 = vmatpush1.bf16.msra.mxu0 %v1042
      %1100 = vmatprep.subr.bf16.mxu0 0
      %1101 = vmatpush1.bf16.msra.mxu0 0
      %1102 = vmatprep.subr.bf16.mxu0 0
      %1103 = vmatpush1.bf16.msra.mxu0 0
      %1104 = vmatprep.subr.bf16.mxu0 0
      %1105 = vmatpush1.bf16.msra.mxu0 0
      %1106 = vmatprep.subr.bf16.mxu0 0
      %1107 = vmatpush1.bf16.msra.mxu0 0
      %1108 = vmatprep.subr.bf16.mxu0 0
      %1109 = vmatpush1.bf16.msra.mxu0 0
      %1110 = vmatprep.subr.bf16.mxu0 0
      %1111 = vmatpush1.bf16.msra.mxu0 0
      %1112 = vmatprep.subr.bf16.mxu0 0
      %1113 = vmatpush1.bf16.msra.mxu0 0
      %1114 = vmatprep.subr.bf16.mxu0 0
      %1115 = vmatpush1.bf16.msra.mxu0 0
      %1116 = vmatprep.subr.bf16.mxu0 0
      %1117 = vmatpush1.bf16.msra.mxu0 0
      %1118 = vmatprep.subr.bf16.mxu0 0
      %1119 = vmatpush1.bf16.msra.mxu0 0
      %1120 = vmatprep.subr.bf16.mxu0 0
      %1121 = vmatpush1.bf16.msra.mxu0 0
      %1122 = vmatprep.subr.bf16.mxu0 0
      %1123 = vmatpush1.bf16.msra.mxu0 0
      %1124 = vmatprep.subr.bf16.mxu0 0
      %1125 = vmatpush1.bf16.msra.mxu0 0
      %1126 = vmatprep.subr.bf16.mxu0 0
      %1127 = vmatpush1.bf16.msra.mxu0 0
      %1128 = vmatprep.subr.bf16.mxu0 0
      %1129 = vmatpush1.bf16.msra.mxu0 0
      %1130 = vmatprep.mubr.bf16.mxu0 0
      %1131 = vmatmul.mubr.bf16.gmra.mrb[0].mxu0 %v1045
      %v1132 = vpop.f32.mrb[0].mxu0
      %v1133 = vadd.f32 0.0, %v1132
      %v1134 = vpop.f32.mrb[0].mxu0
      %v1135 = vpop.f32.mrb[0].mxu0
      %v1136 = vadd.f32 0.0, %v1135
      %v1137 = vpop.f32.mrb[0].mxu0
      %1138 = vmatprep.mubr.bf16.mxu0 0
      %1139 = vmatmul.mubr.bf16.gmra.mrb[0].mxu0 %v1048
      %v1140 = vpop.f32.mrb[0].mxu0
      %v1141 = vadd.f32 0.0, %v1140
      %v1142 = vpop.f32.mrb[0].mxu0
      %v1143 = vpop.f32.mrb[0].mxu0
      %v1144 = vadd.f32 0.0, %v1143
      %v1145 = vpop.f32.mrb[0].mxu0
      %1146 = vmatprep.mubr.bf16.mxu0 0
      %1147 = vmatmul.mubr.bf16.gmra.mrb[0].mxu0 %v1051
      %v1148 = vpop.f32.mrb[0].mxu0
      %v1149 = vadd.f32 0.0, %v1148
      %v1150 = vpop.f32.mrb[0].mxu0
      %v1151 = vpop.f32.mrb[0].mxu0
      %v1152 = vadd.f32 0.0, %v1151
      %v1153 = vpop.f32.mrb[0].mxu0
      %1154 = vmatprep.mubr.bf16.mxu0 0
      %1155 = vmatmul.mubr.bf16.gmra.mrb[0].mxu0 %v1054
      %v1156 = vpop.f32.mrb[0].mxu0
      %v1157 = vadd.f32 0.0, %v1156
      %v1158 = vpop.f32.mrb[0].mxu0
      %v1159 = vpop.f32.mrb[0].mxu0
      %v1160 = vadd.f32 0.0, %v1159
      %v1161 = vpop.f32.mrb[0].mxu0
      %1162 = vmatprep.mubr.bf16.mxu0 0
      %1163 = vmatmul.mubr.bf16.gmra.mrb[0].mxu0 %v1057
      %v1164 = vpop.f32.mrb[0].mxu0
      %v1165 = vadd.f32 0.0, %v1164
      %v1166 = vpop.f32.mrb[0].mxu0
      %v1167 = vpop.f32.mrb[0].mxu0
      %v1168 = vadd.f32 0.0, %v1167
      %v1169 = vpop.f32.mrb[0].mxu0
      %1170 = vmatprep.mubr.bf16.mxu0 0
      %1171 = vmatmul.mubr.bf16.gmra.mrb[0].mxu0 %v1060
      %v1172 = vpop.f32.mrb[0].mxu0
      %v1173 = vadd.f32 0.0, %v1172
      %v1174 = vpop.f32.mrb[0].mxu0
      %v1175 = vpop.f32.mrb[0].mxu0
      %v1176 = vadd.f32 0.0, %v1175
      %v1177 = vpop.f32.mrb[0].mxu0
      %1178 = vmatprep.mubr.bf16.mxu0 0
      %1179 = vmatmul.mubr.bf16.gmra.mrb[0].mxu0 %v1063
      %v1180 = vpop.f32.mrb[0].mxu0
      %v1181 = vadd.f32 0.0, %v1180
      %v1182 = vpop.f32.mrb[0].mxu0
      %v1183 = vpop.f32.mrb[0].mxu0
      %v1184 = vadd.f32 0.0, %v1183
      %v1185 = vpop.f32.mrb[0].mxu0
      %1186 = vmatprep.mubr.bf16.mxu0 0
      %1187 = vmatmul.mubr.bf16.gmra.mrb[0].mxu0 %v1066
      %v1188 = vpop.f32.mrb[0].mxu0
      %v1189 = vadd.f32 0.0, %v1188
      %v1190 = vpop.f32.mrb[0].mxu0
      %v1191 = vpop.f32.mrb[0].mxu0
      %v1192 = vadd.f32 0.0, %v1191
      %v1193 = vpop.f32.mrb[0].mxu0
      %1194 = vmatprep.mubr.bf16.mxu0 0
      %1195 = vmatmul.mubr.bf16.gmra.mrb[0].mxu0 %v1069
      %v1196 = vpop.f32.mrb[0].mxu0
      %v1197 = vadd.f32 0.0, %v1196
      %v1198 = vpop.f32.mrb[0].mxu0
      %v1199 = vpop.f32.mrb[0].mxu0
      %v1200 = vadd.f32 0.0, %v1199
      %v1201 = vpop.f32.mrb[0].mxu0
      %1202 = vmatprep.mubr.bf16.mxu0 0
      %1203 = vmatmul.mubr.bf16.gmra.mrb[0].mxu0 %v1072
      %v1204 = vpop.f32.mrb[0].mxu0
      %v1205 = vadd.f32 0.0, %v1204
      %v1206 = vpop.f32.mrb[0].mxu0
      %v1207 = vpop.f32.mrb[0].mxu0
      %v1208 = vadd.f32 0.0, %v1207
      %v1209 = vpop.f32.mrb[0].mxu0
      %1210 = vmatprep.mubr.bf16.mxu0 0
      %1211 = vmatmul.mubr.bf16.gmra.mrb[0].mxu0 %v1075
      %v1212 = vpop.f32.mrb[0].mxu0
      %v1213 = vadd.f32 0.0, %v1212
      %v1214 = vpop.f32.mrb[0].mxu0
      %v1215 = vpop.f32.mrb[0].mxu0
      %v1216 = vadd.f32 0.0, %v1215
      %v1217 = vpop.f32.mrb[0].mxu0
      %1218 = vmatprep.mubr.bf16.mxu0 0
      %1219 = vmatmul.mubr.bf16.gmra.mrb[0].mxu0 %v1078
      %v1220 = vpop.f32.mrb[0].mxu0
      %v1221 = vadd.f32 0.0, %v1220
      %v1222 = vpop.f32.mrb[0].mxu0
      %v1223 = vpop.f32.mrb[0].mxu0
      %v1224 = vadd.f32 0.0, %v1223
      %v1225 = vpop.f32.mrb[0].mxu0
      %1226 = vmatprep.mubr.bf16.mxu0 0
      %1227 = vmatmul.mubr.bf16.gmra.mrb[0].mxu0 %v1081
      %v1228 = vpop.f32.mrb[0].mxu0
      %v1229 = vadd.f32 0.0, %v1228
      %v1230 = vpop.f32.mrb[0].mxu0
      %v1231 = vpop.f32.mrb[0].mxu0
      %v1232 = vadd.f32 0.0, %v1231
      %v1233 = vpop.f32.mrb[0].mxu0
      %1234 = vmatprep.mubr.bf16.mxu0 0
      %1235 = vmatmul.mubr.bf16.gmra.mrb[0].mxu0 %v1084
      %v1236 = vpop.f32.mrb[0].mxu0
      %v1237 = vadd.f32 0.0, %v1236
      %v1238 = vpop.f32.mrb[0].mxu0
      %v1239 = vpop.f32.mrb[0].mxu0
      %v1240 = vadd.f32 0.0, %v1239
      %v1241 = vpop.f32.mrb[0].mxu0
      %1242 = vmatprep.mubr.bf16.mxu0 0
      %1243 = vmatmul.mubr.bf16.gmra.mrb[0].mxu0 %v1087
      %v1244 = vpop.f32.mrb[0].mxu0
      %v1245 = vadd.f32 0.0, %v1244
      %v1246 = vpop.f32.mrb[0].mxu0
      %v1247 = vpop.f32.mrb[0].mxu0
      %v1248 = vadd.f32 0.0, %v1247
      %v1249 = vpop.f32.mrb[0].mxu0
      %1250 = vmatprep.mubr.bf16.mxu0 0
      %1251 = vmatmul.mubr.bf16.gmra.mrb[0].mxu0 %v1090
      %v1252 = vpop.f32.mrb[0].mxu0
      %v1253 = vadd.f32 0.0, %v1252
      %v1254 = vpop.f32.mrb[0].mxu0
      %v1255 = vpop.f32.mrb[0].mxu0
      %v1256 = vadd.f32 0.0, %v1255
      %v1257 = vpop.f32.mrb[0].mxu0
      %1258 = vmatprep.mubr.bf16.mxu0 0
      %1259 = vmatmul.mubr.bf16.gmra.mrb[0].mxu0 %v1093
      %v1260 = vpop.f32.mrb[0].mxu0
      %v1261 = vadd.f32 0.0, %v1260
      %v1262 = vpop.f32.mrb[0].mxu0
      %v1263 = vpop.f32.mrb[0].mxu0
      %v1264 = vadd.f32 0.0, %v1263
      %v1265 = vpop.f32.mrb[0].mxu0
      %1266 = vmatprep.mubr.bf16.mxu0 0
      %1267 = vmatmul.mubr.bf16.gmra.mrb[0].mxu0 %v1096
      %v1268 = vpop.f32.mrb[0].mxu0
      %v1269 = vadd.f32 0.0, %v1268
      %v1270 = vpop.f32.mrb[0].mxu0
      %v1271 = vpop.f32.mrb[0].mxu0
      %v1272 = vadd.f32 0.0, %v1271
      %v1273 = vpop.f32.mrb[0].mxu0
      %1274 = vdwg.mxu0
      %v1275 = vadd.f32 %v851, %v1133
      %v1276 = vadd.f32 %v854, %v1136
      %v1277 = vadd.f32 %v859, %v1141
      %v1278 = vadd.f32 %v862, %v1144
      %v1279 = vadd.f32 %v867, %v1149
      %v1280 = vadd.f32 %v870, %v1152
      %v1281 = vadd.f32 %v875, %v1157
      %v1282 = vadd.f32 %v878, %v1160
      %v1283 = vadd.f32 %v883, %v1165
      %v1284 = vadd.f32 %v886, %v1168
      %v1285 = vadd.f32 %v891, %v1173
      %v1286 = vadd.f32 %v894, %v1176
      %v1287 = vadd.f32 %v899, %v1181
      %v1288 = vadd.f32 %v902, %v1184
      %v1289 = vadd.f32 %v907, %v1189
      %v1290 = vadd.f32 %v910, %v1192
      %v1291 = vadd.f32 %v915, %v1197
      %v1292 = vadd.f32 %v918, %v1200
      %v1293 = vadd.f32 %v923, %v1205
      %v1294 = vadd.f32 %v926, %v1208
      %v1295 = vadd.f32 %v931, %v1213
      %v1296 = vadd.f32 %v934, %v1216
      %v1297 = vadd.f32 %v939, %v1221
      %v1298 = vadd.f32 %v942, %v1224
      %v1299 = vadd.f32 %v947, %v1229
      %v1300 = vadd.f32 %v950, %v1232
      %v1301 = vadd.f32 %v955, %v1237
      %v1302 = vadd.f32 %v958, %v1240
      %v1303 = vadd.f32 %v963, %v1245
      %v1304 = vadd.f32 %v966, %v1248
      %v1305 = vadd.f32 %v971, %v1253
      %v1306 = vadd.f32 %v974, %v1256
      %v1307 = vadd.f32 %v979, %v1261
      %v1308 = vadd.f32 %v982, %v1264
      %v1309 = vadd.f32 %v987, %v1269
      %v1310 = vadd.f32 %v990, %v1272
      %v1311 = vld [vmem:[%s235 + $0x8] sm:$0xe]
      %v1312 = vld [vmem:[%s235 + $0xc] sm:$0xf]
      %v1313 = vld [vmem:[%s235 + $0x10] sm:$0xf]
      %v1314 = vld [vmem:[%s235 + $0x14] sm:$0xf]
      %v1315 = vld [vmem:[%s235 + $0x18] sm:$0xf]
      %v1316 = vld [vmem:[%s235 + $0x1c] sm:$0xf]
      %v1317 = vld [vmem:[%s235 + $0x20] sm:$0xf]
      %v1318 = vld [vmem:[%s235 + $0x24] sm:$0xf]
      %v1319 = vld [vmem:[%s235 + $0x28] sm:$0xf]
      %v1320 = vld [vmem:[%s235 + $0x2c] sm:$0xf]
      %v1321 = vld [vmem:[%s235 + $0x30] sm:$0xf]
      %v1322 = vld [vmem:[%s235 + $0x34] sm:$0xf]
      %v1323 = vld [vmem:[%s235 + $0x38] sm:$0xf]
      %v1324 = vld [vmem:[%s235 + $0x3c] sm:$0xf]
      %v1325 = vld [vmem:[%s235 + $0x40] sm:$0xf]
      %v1326 = vld [vmem:[%s235 + $0x44] sm:$0xf]
      %v1327 = vld [vmem:[%s235 + $0x48] sm:$0xf]
      %v1328 = vld [vmem:[%s235 + $0x4c] sm:$0xf]
      %v1329 = vld [vmem:[%s235 + $0x50] sm:$0xf]
      %v1330 = vld [vmem:[%s235 + $0x54] sm:$0xf]
      %v1331 = vld [vmem:[%s235 + $0x58] sm:$0xf]
      %v1332 = vld [vmem:[%s235 + $0x5c] sm:$0xf]
      %v1333 = vld [vmem:[%s235 + $0x60] sm:$0xf]
      %v1334 = vld [vmem:[%s235 + $0x64] sm:$0xf]
      %v1335 = vld [vmem:[%s235 + $0x68] sm:$0xf]
      %v1336 = vld [vmem:[%s235 + $0x6c] sm:$0xf]
      %v1337 = vld [vmem:[%s235 + $0x70] sm:$0xf]
      %v1338 = vld [vmem:[%s235 + $0x74] sm:$0xf]
      %v1339 = vld [vmem:[%s235 + $0x78] sm:$0xf]
      %v1340 = vld [vmem:[%s235 + $0x7c] sm:$0xf]
      %v1341 = vld [vmem:[%s235 + $0x80] sm:$0xf]
      %v1342 = vld [vmem:[%s235 + $0x84] sm:$0xf]
      %v1343 = vld [vmem:[%s235 + $0x88] sm:$0xf]
      %v1344 = vld [vmem:[%s235 + $0x8c] sm:$0xf]
      %v1345 = vld [vmem:[%s235 + $0x90] sm:$0xf]
      %v1346 = vld [vmem:[%s235 + $0x94] sm:$0xf]
      %v1347 = vld [vmem:[%s235 + $0x98] sm:$0x1]
      %s1348 = scalar_lea.vmem %s1, 24
      %v1349 = vld [vmem:[%s1348] sm:$0xf]
      %v1350 = vld [vmem:[%s1348 + $0x4] sm:$0xf]
      %v1388 = vunpack.c.l.b16 %v1311
      %v1389 = vunpack.c.l.b16 %v1312
      %v1390 = vunpack.c.l.b16 %v1313
      %v1391 = vunpack.c.l.b16 %v1314
      %v1392 = vunpack.c.l.b16 %v1315
      %v1393 = vunpack.c.l.b16 %v1316
      %v1394 = vunpack.c.l.b16 %v1317
      %v1395 = vunpack.c.l.b16 %v1318
      %v1396 = vunpack.c.l.b16 %v1319
      %v1397 = vunpack.c.l.b16 %v1320
      %v1398 = vunpack.c.l.b16 %v1321
      %v1399 = vunpack.c.l.b16 %v1322
      %v1400 = vunpack.c.l.b16 %v1323
      %v1401 = vunpack.c.l.b16 %v1324
      %v1402 = vunpack.c.l.b16 %v1325
      %v1403 = vunpack.c.l.b16 %v1326
      %v1404 = vunpack.c.l.b16 %v1327
      %v1405 = vunpack.c.l.b16 %v1328
      %v1406 = vunpack.c.l.b16 %v1329
      %v1407 = vunpack.c.l.b16 %v1330
      %v1408 = vunpack.c.l.b16 %v1331
      %v1409 = vunpack.c.l.b16 %v1332
      %v1410 = vunpack.c.l.b16 %v1333
      %v1411 = vunpack.c.l.b16 %v1334
      %v1412 = vunpack.c.l.b16 %v1335
      %v1413 = vunpack.c.l.b16 %v1336
      %v1414 = vunpack.c.l.b16 %v1337
      %v1415 = vunpack.c.l.b16 %v1338
      %v1416 = vunpack.c.l.b16 %v1339
      %v1417 = vunpack.c.l.b16 %v1340
      %v1418 = vunpack.c.l.b16 %v1341
      %v1419 = vunpack.c.l.b16 %v1342
      %v1420 = vunpack.c.l.b16 %v1343
      %v1421 = vunpack.c.l.b16 %v1344
      %v1422 = vunpack.c.l.b16 %v1345
      %v1423 = vunpack.c.l.b16 %v1346
      %v1424 = vunpack.c.l.b16 %v1347
      %v1425 = vpack.c.b16 %v1389, %v1388
      %v1426 = vpack.c.b16 %v1391, %v1390
      %v1427 = vpack.c.b16 %v1393, %v1392
      %v1428 = vpack.c.b16 %v1395, %v1394
      %v1429 = vpack.c.b16 %v1397, %v1396
      %v1430 = vpack.c.b16 %v1399, %v1398
      %v1431 = vpack.c.b16 %v1401, %v1400
      %v1432 = vpack.c.b16 %v1403, %v1402
      %v1433 = vpack.c.b16 %v1405, %v1404
      %v1434 = vpack.c.b16 %v1407, %v1406
      %v1435 = vpack.c.b16 %v1409, %v1408
      %v1436 = vpack.c.b16 %v1411, %v1410
      %v1437 = vpack.c.b16 %v1413, %v1412
      %v1438 = vpack.c.b16 %v1415, %v1414
      %v1439 = vpack.c.b16 %v1417, %v1416
      %v1440 = vpack.c.b16 %v1419, %v1418
      %v1441 = vpack.c.b16 %v1421, %v1420
      %v1442 = vpack.c.b16 %v1423, %v1422
      %v1443 = vpack.c.b16 %v1424, %v1424
      %v1444 = vrot.slane %v1425, 1
      %v1445 = vrot.slane %v1426, 1
      %v1446 = vsel %vm1000, %v1444, %v1445
      %v1447 = vrot.slane %v1427, 1
      %v1448 = vsel %vm1000, %v1445, %v1447
      %v1449 = vrot.slane %v1428, 1
      %v1450 = vsel %vm1000, %v1447, %v1449
      %v1451 = vrot.slane %v1429, 1
      %v1452 = vsel %vm1000, %v1449, %v1451
      %v1453 = vrot.slane %v1430, 1
      %v1454 = vsel %vm1000, %v1451, %v1453
      %v1455 = vrot.slane %v1431, 1
      %v1456 = vsel %vm1000, %v1453, %v1455
      %v1457 = vrot.slane %v1432, 1
      %v1458 = vsel %vm1000, %v1455, %v1457
      %v1459 = vrot.slane %v1433, 1
      %v1460 = vsel %vm1000, %v1457, %v1459
      %v1461 = vrot.slane %v1434, 1
      %v1462 = vsel %vm1000, %v1459, %v1461
      %v1463 = vrot.slane %v1435, 1
      %v1464 = vsel %vm1000, %v1461, %v1463
      %v1465 = vrot.slane %v1436, 1
      %v1466 = vsel %vm1000, %v1463, %v1465
      %v1467 = vrot.slane %v1437, 1
      %v1468 = vsel %vm1000, %v1465, %v1467
      %v1469 = vrot.slane %v1438, 1
      %v1470 = vsel %vm1000, %v1467, %v1469
      %v1471 = vrot.slane %v1439, 1
      %v1472 = vsel %vm1000, %v1469, %v1471
      %v1473 = vrot.slane %v1440, 1
      %v1474 = vsel %vm1000, %v1471, %v1473
      %v1475 = vrot.slane %v1441, 1
      %v1476 = vsel %vm1000, %v1473, %v1475
      %v1477 = vrot.slane %v1442, 1
      %v1478 = vsel %vm1000, %v1475, %v1477
      %v1479 = vrot.slane %v1443, 1
      %v1480 = vsel %vm1000, %v1477, %v1479
      %v1483 = vunpack.c.l.b16 %v1349
      %v1484 = vunpack.c.l.b16 %v1350
      %v1485 = vpack.c.b16 %v1484, %v1483
      %v1488 = vsel %vm542, %v1446, 0
      %v1491 = vsel %vm542, %v1448, 0
      %v1494 = vsel %vm542, %v1450, 0
      %v1497 = vsel %vm542, %v1452, 0
      %v1500 = vsel %vm542, %v1454, 0
      %v1503 = vsel %vm542, %v1456, 0
      %v1506 = vsel %vm542, %v1458, 0
      %v1509 = vsel %vm542, %v1460, 0
      %v1512 = vsel %vm542, %v1462, 0
      %v1515 = vsel %vm542, %v1464, 0
      %v1518 = vsel %vm542, %v1466, 0
      %v1521 = vsel %vm542, %v1468, 0
      %v1524 = vsel %vm542, %v1470, 0
      %v1527 = vsel %vm542, %v1472, 0
      %v1530 = vsel %vm542, %v1474, 0
      %v1533 = vsel %vm542, %v1476, 0
      %v1536 = vsel %vm542, %v1478, 0
      %v1539 = vsel %vm542, %v1480, 0
      %1541 = vmatprep.subr.bf16.mxu0 0
      %1542 = vmatpush1.bf16.msra.mxu0 %v1485
      %1543 = vmatprep.subr.bf16.mxu0 0
      %1544 = vmatpush1.bf16.msra.mxu0 0
      %1545 = vmatprep.subr.bf16.mxu0 0
      %1546 = vmatpush1.bf16.msra.mxu0 0
      %1547 = vmatprep.subr.bf16.mxu0 0
      %1548 = vmatpush1.bf16.msra.mxu0 0
      %1549 = vmatprep.subr.bf16.mxu0 0
      %1550 = vmatpush1.bf16.msra.mxu0 0
      %1551 = vmatprep.subr.bf16.mxu0 0
      %1552 = vmatpush1.bf16.msra.mxu0 0
      %1553 = vmatprep.subr.bf16.mxu0 0
      %1554 = vmatpush1.bf16.msra.mxu0 0
      %1555 = vmatprep.subr.bf16.mxu0 0
      %1556 = vmatpush1.bf16.msra.mxu0 0
      %1557 = vmatprep.subr.bf16.mxu0 0
      %1558 = vmatpush1.bf16.msra.mxu0 0
      %1559 = vmatprep.subr.bf16.mxu0 0
      %1560 = vmatpush1.bf16.msra.mxu0 0
      %1561 = vmatprep.subr.bf16.mxu0 0
      %1562 = vmatpush1.bf16.msra.mxu0 0
      %1563 = vmatprep.subr.bf16.mxu0 0
      %1564 = vmatpush1.bf16.msra.mxu0 0
      %1565 = vmatprep.subr.bf16.mxu0 0
      %1566 = vmatpush1.bf16.msra.mxu0 0
      %1567 = vmatprep.subr.bf16.mxu0 0
      %1568 = vmatpush1.bf16.msra.mxu0 0
      %1569 = vmatprep.subr.bf16.mxu0 0
      %1570 = vmatpush1.bf16.msra.mxu0 0
      %1571 = vmatprep.subr.bf16.mxu0 0
      %1572 = vmatpush1.bf16.msra.mxu0 0
      %1573 = vmatprep.mubr.bf16.mxu0 0
      %1574 = vmatmul.mubr.bf16.gmra.mrb[0].mxu0 %v1488
      %v1575 = vpop.f32.mrb[0].mxu0
      %v1576 = vadd.f32 0.0, %v1575
      %v1577 = vpop.f32.mrb[0].mxu0
      %v1578 = vpop.f32.mrb[0].mxu0
      %v1579 = vadd.f32 0.0, %v1578
      %v1580 = vpop.f32.mrb[0].mxu0
      %1581 = vmatprep.mubr.bf16.mxu0 0
      %1582 = vmatmul.mubr.bf16.gmra.mrb[0].mxu0 %v1491
      %v1583 = vpop.f32.mrb[0].mxu0
      %v1584 = vadd.f32 0.0, %v1583
      %v1585 = vpop.f32.mrb[0].mxu0
      %v1586 = vpop.f32.mrb[0].mxu0
      %v1587 = vadd.f32 0.0, %v1586
      %v1588 = vpop.f32.mrb[0].mxu0
      %1589 = vmatprep.mubr.bf16.mxu0 0
      %1590 = vmatmul.mubr.bf16.gmra.mrb[0].mxu0 %v1494
      %v1591 = vpop.f32.mrb[0].mxu0
      %v1592 = vadd.f32 0.0, %v1591
      %v1593 = vpop.f32.mrb[0].mxu0
      %v1594 = vpop.f32.mrb[0].mxu0
      %v1595 = vadd.f32 0.0, %v1594
      %v1596 = vpop.f32.mrb[0].mxu0
      %1597 = vmatprep.mubr.bf16.mxu0 0
      %1598 = vmatmul.mubr.bf16.gmra.mrb[0].mxu0 %v1497
      %v1599 = vpop.f32.mrb[0].mxu0
      %v1600 = vadd.f32 0.0, %v1599
      %v1601 = vpop.f32.mrb[0].mxu0
      %v1602 = vpop.f32.mrb[0].mxu0
      %v1603 = vadd.f32 0.0, %v1602
      %v1604 = vpop.f32.mrb[0].mxu0
      %1605 = vmatprep.mubr.bf16.mxu0 0
      %1606 = vmatmul.mubr.bf16.gmra.mrb[0].mxu0 %v1500
      %v1607 = vpop.f32.mrb[0].mxu0
      %v1608 = vadd.f32 0.0, %v1607
      %v1609 = vpop.f32.mrb[0].mxu0
      %v1610 = vpop.f32.mrb[0].mxu0
      %v1611 = vadd.f32 0.0, %v1610
      %v1612 = vpop.f32.mrb[0].mxu0
      %1613 = vmatprep.mubr.bf16.mxu0 0
      %1614 = vmatmul.mubr.bf16.gmra.mrb[0].mxu0 %v1503
      %v1615 = vpop.f32.mrb[0].mxu0
      %v1616 = vadd.f32 0.0, %v1615
      %v1617 = vpop.f32.mrb[0].mxu0
      %v1618 = vpop.f32.mrb[0].mxu0
      %v1619 = vadd.f32 0.0, %v1618
      %v1620 = vpop.f32.mrb[0].mxu0
      %1621 = vmatprep.mubr.bf16.mxu0 0
      %1622 = vmatmul.mubr.bf16.gmra.mrb[0].mxu0 %v1506
      %v1623 = vpop.f32.mrb[0].mxu0
      %v1624 = vadd.f32 0.0, %v1623
      %v1625 = vpop.f32.mrb[0].mxu0
      %v1626 = vpop.f32.mrb[0].mxu0
      %v1627 = vadd.f32 0.0, %v1626
      %v1628 = vpop.f32.mrb[0].mxu0
      %1629 = vmatprep.mubr.bf16.mxu0 0
      %1630 = vmatmul.mubr.bf16.gmra.mrb[0].mxu0 %v1509
      %v1631 = vpop.f32.mrb[0].mxu0
      %v1632 = vadd.f32 0.0, %v1631
      %v1633 = vpop.f32.mrb[0].mxu0
      %v1634 = vpop.f32.mrb[0].mxu0
      %v1635 = vadd.f32 0.0, %v1634
      %v1636 = vpop.f32.mrb[0].mxu0
      %1637 = vmatprep.mubr.bf16.mxu0 0
      %1638 = vmatmul.mubr.bf16.gmra.mrb[0].mxu0 %v1512
      %v1639 = vpop.f32.mrb[0].mxu0
      %v1640 = vadd.f32 0.0, %v1639
      %v1641 = vpop.f32.mrb[0].mxu0
      %v1642 = vpop.f32.mrb[0].mxu0
      %v1643 = vadd.f32 0.0, %v1642
      %v1644 = vpop.f32.mrb[0].mxu0
      %1645 = vmatprep.mubr.bf16.mxu0 0
      %1646 = vmatmul.mubr.bf16.gmra.mrb[0].mxu0 %v1515
      %v1647 = vpop.f32.mrb[0].mxu0
      %v1648 = vadd.f32 0.0, %v1647
      %v1649 = vpop.f32.mrb[0].mxu0
      %v1650 = vpop.f32.mrb[0].mxu0
      %v1651 = vadd.f32 0.0, %v1650
      %v1652 = vpop.f32.mrb[0].mxu0
      %1653 = vmatprep.mubr.bf16.mxu0 0
      %1654 = vmatmul.mubr.bf16.gmra.mrb[0].mxu0 %v1518
      %v1655 = vpop.f32.mrb[0].mxu0
      %v1656 = vadd.f32 0.0, %v1655
      %v1657 = vpop.f32.mrb[0].mxu0
      %v1658 = vpop.f32.mrb[0].mxu0
      %v1659 = vadd.f32 0.0, %v1658
      %v1660 = vpop.f32.mrb[0].mxu0
      %1661 = vmatprep.mubr.bf16.mxu0 0
      %1662 = vmatmul.mubr.bf16.gmra.mrb[0].mxu0 %v1521
      %v1663 = vpop.f32.mrb[0].mxu0
      %v1664 = vadd.f32 0.0, %v1663
      %v1665 = vpop.f32.mrb[0].mxu0
      %v1666 = vpop.f32.mrb[0].mxu0
      %v1667 = vadd.f32 0.0, %v1666
      %v1668 = vpop.f32.mrb[0].mxu0
      %1669 = vmatprep.mubr.bf16.mxu0 0
      %1670 = vmatmul.mubr.bf16.gmra.mrb[0].mxu0 %v1524
      %v1671 = vpop.f32.mrb[0].mxu0
      %v1672 = vadd.f32 0.0, %v1671
      %v1673 = vpop.f32.mrb[0].mxu0
      %v1674 = vpop.f32.mrb[0].mxu0
      %v1675 = vadd.f32 0.0, %v1674
      %v1676 = vpop.f32.mrb[0].mxu0
      %1677 = vmatprep.mubr.bf16.mxu0 0
      %1678 = vmatmul.mubr.bf16.gmra.mrb[0].mxu0 %v1527
      %v1679 = vpop.f32.mrb[0].mxu0
      %v1680 = vadd.f32 0.0, %v1679
      %v1681 = vpop.f32.mrb[0].mxu0
      %v1682 = vpop.f32.mrb[0].mxu0
      %v1683 = vadd.f32 0.0, %v1682
      %v1684 = vpop.f32.mrb[0].mxu0
      %1685 = vmatprep.mubr.bf16.mxu0 0
      %1686 = vmatmul.mubr.bf16.gmra.mrb[0].mxu0 %v1530
      %v1687 = vpop.f32.mrb[0].mxu0
      %v1688 = vadd.f32 0.0, %v1687
      %v1689 = vpop.f32.mrb[0].mxu0
      %v1690 = vpop.f32.mrb[0].mxu0
      %v1691 = vadd.f32 0.0, %v1690
      %v1692 = vpop.f32.mrb[0].mxu0
      %1693 = vmatprep.mubr.bf16.mxu0 0
      %1694 = vmatmul.mubr.bf16.gmra.mrb[0].mxu0 %v1533
      %v1695 = vpop.f32.mrb[0].mxu0
      %v1696 = vadd.f32 0.0, %v1695
      %v1697 = vpop.f32.mrb[0].mxu0
      %v1698 = vpop.f32.mrb[0].mxu0
      %v1699 = vadd.f32 0.0, %v1698
      %v1700 = vpop.f32.mrb[0].mxu0
      %1701 = vmatprep.mubr.bf16.mxu0 0
      %1702 = vmatmul.mubr.bf16.gmra.mrb[0].mxu0 %v1536
      %v1703 = vpop.f32.mrb[0].mxu0
      %v1704 = vadd.f32 0.0, %v1703
      %v1705 = vpop.f32.mrb[0].mxu0
      %v1706 = vpop.f32.mrb[0].mxu0
      %v1707 = vadd.f32 0.0, %v1706
      %v1708 = vpop.f32.mrb[0].mxu0
      %1709 = vmatprep.mubr.bf16.mxu0 0
      %1710 = vmatmul.mubr.bf16.gmra.mrb[0].mxu0 %v1539
      %v1711 = vpop.f32.mrb[0].mxu0
      %v1712 = vadd.f32 0.0, %v1711
      %v1713 = vpop.f32.mrb[0].mxu0
      %v1714 = vpop.f32.mrb[0].mxu0
      %v1715 = vadd.f32 0.0, %v1714
      %v1716 = vpop.f32.mrb[0].mxu0
      %1717 = vdwg.mxu0
      %v1718 = vadd.f32 %v1275, %v1576
      %v1719 = vadd.f32 %v1276, %v1579
      %v1720 = vadd.f32 %v1277, %v1584
      %v1721 = vadd.f32 %v1278, %v1587
      %v1722 = vadd.f32 %v1279, %v1592
      %v1723 = vadd.f32 %v1280, %v1595
      %v1724 = vadd.f32 %v1281, %v1600
      %v1725 = vadd.f32 %v1282, %v1603
      %v1726 = vadd.f32 %v1283, %v1608
      %v1727 = vadd.f32 %v1284, %v1611
      %v1728 = vadd.f32 %v1285, %v1616
      %v1729 = vadd.f32 %v1286, %v1619
      %v1730 = vadd.f32 %v1287, %v1624
      %v1731 = vadd.f32 %v1288, %v1627
      %v1732 = vadd.f32 %v1289, %v1632
      %v1733 = vadd.f32 %v1290, %v1635
      %v1734 = vadd.f32 %v1291, %v1640
      %v1735 = vadd.f32 %v1292, %v1643
      %v1736 = vadd.f32 %v1293, %v1648
      %v1737 = vadd.f32 %v1294, %v1651
      %v1738 = vadd.f32 %v1295, %v1656
      %v1739 = vadd.f32 %v1296, %v1659
      %v1740 = vadd.f32 %v1297, %v1664
      %v1741 = vadd.f32 %v1298, %v1667
      %v1742 = vadd.f32 %v1299, %v1672
      %v1743 = vadd.f32 %v1300, %v1675
      %v1744 = vadd.f32 %v1301, %v1680
      %v1745 = vadd.f32 %v1302, %v1683
      %v1746 = vadd.f32 %v1303, %v1688
      %v1747 = vadd.f32 %v1304, %v1691
      %v1748 = vadd.f32 %v1305, %v1696
      %v1749 = vadd.f32 %v1306, %v1699
      %v1750 = vadd.f32 %v1307, %v1704
      %v1751 = vadd.f32 %v1308, %v1707
      %v1752 = vadd.f32 %v1309, %v1712
      %v1753 = vadd.f32 %v1310, %v1715
      %v1754 = vld [vmem:[%s235 + $0x98] sm:$0x3]
      %s1755 = scalar_lea.vmem %s1, 32
      %v1756 = vld [vmem:[%s1755] sm:$0xf]
      %v1757 = vld [vmem:[%s1755 + $0x4] sm:$0xf]
      %v1759 = vunpack.c.l.b16 %v1754
      %v1760 = vpack.c.b16 %v1759, %v1759
      %vm1761 = vsmask.f32 6400
      %v1763 = vshrl.u32 %v1425, 16
      %v1765 = vrot.slane %v1763, 1
      %v1766 = vshll.u32 %v1425, 16
      %v1768 = vrot.slane %v1766, 2
      %v1769 = vor.u32 %v1765, %v1768
      %v1771 = vshrl.u32 %v1426, 16
      %v1773 = vrot.slane %v1771, 1
      %v1774 = vshll.u32 %v1426, 16
      %v1776 = vrot.slane %v1774, 2
      %v1777 = vor.u32 %v1773, %v1776
      %v1778 = vsel %vm1761, %v1769, %v1777
      %v1780 = vshrl.u32 %v1427, 16
      %v1782 = vrot.slane %v1780, 1
      %v1783 = vshll.u32 %v1427, 16
      %v1785 = vrot.slane %v1783, 2
      %v1786 = vor.u32 %v1782, %v1785
      %v1787 = vsel %vm1761, %v1777, %v1786
      %v1789 = vshrl.u32 %v1428, 16
      %v1791 = vrot.slane %v1789, 1
      %v1792 = vshll.u32 %v1428, 16
      %v1794 = vrot.slane %v1792, 2
      %v1795 = vor.u32 %v1791, %v1794
      %v1796 = vsel %vm1761, %v1786, %v1795
      %v1798 = vshrl.u32 %v1429, 16
      %v1800 = vrot.slane %v1798, 1
      %v1801 = vshll.u32 %v1429, 16
      %v1803 = vrot.slane %v1801, 2
      %v1804 = vor.u32 %v1800, %v1803
      %v1805 = vsel %vm1761, %v1795, %v1804
      %v1807 = vshrl.u32 %v1430, 16
      %v1809 = vrot.slane %v1807, 1
      %v1810 = vshll.u32 %v1430, 16
      %v1812 = vrot.slane %v1810, 2
      %v1813 = vor.u32 %v1809, %v1812
      %v1814 = vsel %vm1761, %v1804, %v1813
      %v1816 = vshrl.u32 %v1431, 16
      %v1818 = vrot.slane %v1816, 1
      %v1819 = vshll.u32 %v1431, 16
      %v1821 = vrot.slane %v1819, 2
      %v1822 = vor.u32 %v1818, %v1821
      %v1823 = vsel %vm1761, %v1813, %v1822
      %v1825 = vshrl.u32 %v1432, 16
      %v1827 = vrot.slane %v1825, 1
      %v1828 = vshll.u32 %v1432, 16
      %v1830 = vrot.slane %v1828, 2
      %v1831 = vor.u32 %v1827, %v1830
      %v1832 = vsel %vm1761, %v1822, %v1831
      %v1834 = vshrl.u32 %v1433, 16
      %v1836 = vrot.slane %v1834, 1
      %v1837 = vshll.u32 %v1433, 16
      %v1839 = vrot.slane %v1837, 2
      %v1840 = vor.u32 %v1836, %v1839
      %v1841 = vsel %vm1761, %v1831, %v1840
      %v1843 = vshrl.u32 %v1434, 16
      %v1845 = vrot.slane %v1843, 1
      %v1846 = vshll.u32 %v1434, 16
      %v1848 = vrot.slane %v1846, 2
      %v1849 = vor.u32 %v1845, %v1848
      %v1850 = vsel %vm1761, %v1840, %v1849
      %v1852 = vshrl.u32 %v1435, 16
      %v1854 = vrot.slane %v1852, 1
      %v1855 = vshll.u32 %v1435, 16
      %v1857 = vrot.slane %v1855, 2
      %v1858 = vor.u32 %v1854, %v1857
      %v1859 = vsel %vm1761, %v1849, %v1858
      %v1861 = vshrl.u32 %v1436, 16
      %v1863 = vrot.slane %v1861, 1
      %v1864 = vshll.u32 %v1436, 16
      %v1866 = vrot.slane %v1864, 2
      %v1867 = vor.u32 %v1863, %v1866
      %v1868 = vsel %vm1761, %v1858, %v1867
      %v1870 = vshrl.u32 %v1437, 16
      %v1872 = vrot.slane %v1870, 1
      %v1873 = vshll.u32 %v1437, 16
      %v1875 = vrot.slane %v1873, 2
      %v1876 = vor.u32 %v1872, %v1875
      %v1877 = vsel %vm1761, %v1867, %v1876
      %v1879 = vshrl.u32 %v1438, 16
      %v1881 = vrot.slane %v1879, 1
      %v1882 = vshll.u32 %v1438, 16
      %v1884 = vrot.slane %v1882, 2
      %v1885 = vor.u32 %v1881, %v1884
      %v1886 = vsel %vm1761, %v1876, %v1885
      %v1888 = vshrl.u32 %v1439, 16
      %v1890 = vrot.slane %v1888, 1
      %v1891 = vshll.u32 %v1439, 16
      %v1893 = vrot.slane %v1891, 2
      %v1894 = vor.u32 %v1890, %v1893
      %v1895 = vsel %vm1761, %v1885, %v1894
      %v1897 = vshrl.u32 %v1440, 16
      %v1899 = vrot.slane %v1897, 1
      %v1900 = vshll.u32 %v1440, 16
      %v1902 = vrot.slane %v1900, 2
      %v1903 = vor.u32 %v1899, %v1902
      %v1904 = vsel %vm1761, %v1894, %v1903
      %v1906 = vshrl.u32 %v1441, 16
      %v1908 = vrot.slane %v1906, 1
      %v1909 = vshll.u32 %v1441, 16
      %v1911 = vrot.slane %v1909, 2
      %v1912 = vor.u32 %v1908, %v1911
      %v1913 = vsel %vm1761, %v1903, %v1912
      %v1915 = vshrl.u32 %v1442, 16
      %v1917 = vrot.slane %v1915, 1
      %v1918 = vshll.u32 %v1442, 16
      %v1920 = vrot.slane %v1918, 2
      %v1921 = vor.u32 %v1917, %v1920
      %v1922 = vsel %vm1761, %v1912, %v1921
      %v1924 = vshrl.u32 %v1760, 16
      %v1926 = vrot.slane %v1924, 1
      %v1927 = vshll.u32 %v1760, 16
      %v1929 = vrot.slane %v1927, 2
      %v1930 = vor.u32 %v1926, %v1929
      %v1931 = vsel %vm1761, %v1921, %v1930
      %v1934 = vunpack.c.l.b16 %v1756
      %v1935 = vunpack.c.l.b16 %v1757
      %v1936 = vpack.c.b16 %v1935, %v1934
      %v1939 = vsel %vm542, %v1778, 0
      %v1942 = vsel %vm542, %v1787, 0
      %v1945 = vsel %vm542, %v1796, 0
      %v1948 = vsel %vm542, %v1805, 0
      %v1951 = vsel %vm542, %v1814, 0
      %v1954 = vsel %vm542, %v1823, 0
      %v1957 = vsel %vm542, %v1832, 0
      %v1960 = vsel %vm542, %v1841, 0
      %v1963 = vsel %vm542, %v1850, 0
      %v1966 = vsel %vm542, %v1859, 0
      %v1969 = vsel %vm542, %v1868, 0
      %v1972 = vsel %vm542, %v1877, 0
      %v1975 = vsel %vm542, %v1886, 0
      %v1978 = vsel %vm542, %v1895, 0
      %v1981 = vsel %vm542, %v1904, 0
      %v1984 = vsel %vm542, %v1913, 0
      %v1987 = vsel %vm542, %v1922, 0
      %v1990 = vsel %vm542, %v1931, 0
      %1992 = vmatprep.subr.bf16.mxu0 0
      %1993 = vmatpush1.bf16.msra.mxu0 %v1936
      %1994 = vmatprep.subr.bf16.mxu0 0
      %1995 = vmatpush1.bf16.msra.mxu0 0
      %1996 = vmatprep.subr.bf16.mxu0 0
      %1997 = vmatpush1.bf16.msra.mxu0 0
      %1998 = vmatprep.subr.bf16.mxu0 0
      %1999 = vmatpush1.bf16.msra.mxu0 0
      %2000 = vmatprep.subr.bf16.mxu0 0
      %2001 = vmatpush1.bf16.msra.mxu0 0
      %2002 = vmatprep.subr.bf16.mxu0 0
      %2003 = vmatpush1.bf16.msra.mxu0 0
      %2004 = vmatprep.subr.bf16.mxu0 0
      %2005 = vmatpush1.bf16.msra.mxu0 0
      %2006 = vmatprep.subr.bf16.mxu0 0
      %2007 = vmatpush1.bf16.msra.mxu0 0
      %2008 = vmatprep.subr.bf16.mxu0 0
      %2009 = vmatpush1.bf16.msra.mxu0 0
      %2010 = vmatprep.subr.bf16.mxu0 0
      %2011 = vmatpush1.bf16.msra.mxu0 0
      %2012 = vmatprep.subr.bf16.mxu0 0
      %2013 = vmatpush1.bf16.msra.mxu0 0
      %2014 = vmatprep.subr.bf16.mxu0 0
      %2015 = vmatpush1.bf16.msra.mxu0 0
      %2016 = vmatprep.subr.bf16.mxu0 0
      %2017 = vmatpush1.bf16.msra.mxu0 0
      %2018 = vmatprep.subr.bf16.mxu0 0
      %2019 = vmatpush1.bf16.msra.mxu0 0
      %2020 = vmatprep.subr.bf16.mxu0 0
      %2021 = vmatpush1.bf16.msra.mxu0 0
      %2022 = vmatprep.subr.bf16.mxu0 0
      %2023 = vmatpush1.bf16.msra.mxu0 0
      %2024 = vmatprep.mubr.bf16.mxu0 0
      %2025 = vmatmul.mubr.bf16.gmra.mrb[0].mxu0 %v1939
      %v2026 = vpop.f32.mrb[0].mxu0
      %v2027 = vadd.f32 0.0, %v2026
      %v2028 = vpop.f32.mrb[0].mxu0
      %v2029 = vpop.f32.mrb[0].mxu0
      %v2030 = vadd.f32 0.0, %v2029
      %v2031 = vpop.f32.mrb[0].mxu0
      %2032 = vmatprep.mubr.bf16.mxu0 0
      %2033 = vmatmul.mubr.bf16.gmra.mrb[0].mxu0 %v1942
      %v2034 = vpop.f32.mrb[0].mxu0
      %v2035 = vadd.f32 0.0, %v2034
      %v2036 = vpop.f32.mrb[0].mxu0
      %v2037 = vpop.f32.mrb[0].mxu0
      %v2038 = vadd.f32 0.0, %v2037
      %v2039 = vpop.f32.mrb[0].mxu0
      %2040 = vmatprep.mubr.bf16.mxu0 0
      %2041 = vmatmul.mubr.bf16.gmra.mrb[0].mxu0 %v1945
      %v2042 = vpop.f32.mrb[0].mxu0
      %v2043 = vadd.f32 0.0, %v2042
      %v2044 = vpop.f32.mrb[0].mxu0
      %v2045 = vpop.f32.mrb[0].mxu0
      %v2046 = vadd.f32 0.0, %v2045
      %v2047 = vpop.f32.mrb[0].mxu0
      %2048 = vmatprep.mubr.bf16.mxu0 0
      %2049 = vmatmul.mubr.bf16.gmra.mrb[0].mxu0 %v1948
      %v2050 = vpop.f32.mrb[0].mxu0
      %v2051 = vadd.f32 0.0, %v2050
      %v2052 = vpop.f32.mrb[0].mxu0
      %v2053 = vpop.f32.mrb[0].mxu0
      %v2054 = vadd.f32 0.0, %v2053
      %v2055 = vpop.f32.mrb[0].mxu0
      %2056 = vmatprep.mubr.bf16.mxu0 0
      %2057 = vmatmul.mubr.bf16.gmra.mrb[0].mxu0 %v1951
      %v2058 = vpop.f32.mrb[0].mxu0
      %v2059 = vadd.f32 0.0, %v2058
      %v2060 = vpop.f32.mrb[0].mxu0
      %v2061 = vpop.f32.mrb[0].mxu0
      %v2062 = vadd.f32 0.0, %v2061
      %v2063 = vpop.f32.mrb[0].mxu0
      %2064 = vmatprep.mubr.bf16.mxu0 0
      %2065 = vmatmul.mubr.bf16.gmra.mrb[0].mxu0 %v1954
      %v2066 = vpop.f32.mrb[0].mxu0
      %v2067 = vadd.f32 0.0, %v2066
      %v2068 = vpop.f32.mrb[0].mxu0
      %v2069 = vpop.f32.mrb[0].mxu0
      %v2070 = vadd.f32 0.0, %v2069
      %v2071 = vpop.f32.mrb[0].mxu0
      %2072 = vmatprep.mubr.bf16.mxu0 0
      %2073 = vmatmul.mubr.bf16.gmra.mrb[0].mxu0 %v1957
      %v2074 = vpop.f32.mrb[0].mxu0
      %v2075 = vadd.f32 0.0, %v2074
      %v2076 = vpop.f32.mrb[0].mxu0
      %v2077 = vpop.f32.mrb[0].mxu0
      %v2078 = vadd.f32 0.0, %v2077
      %v2079 = vpop.f32.mrb[0].mxu0
      %2080 = vmatprep.mubr.bf16.mxu0 0
      %2081 = vmatmul.mubr.bf16.gmra.mrb[0].mxu0 %v1960
      %v2082 = vpop.f32.mrb[0].mxu0
      %v2083 = vadd.f32 0.0, %v2082
      %v2084 = vpop.f32.mrb[0].mxu0
      %v2085 = vpop.f32.mrb[0].mxu0
      %v2086 = vadd.f32 0.0, %v2085
      %v2087 = vpop.f32.mrb[0].mxu0
      %2088 = vmatprep.mubr.bf16.mxu0 0
      %2089 = vmatmul.mubr.bf16.gmra.mrb[0].mxu0 %v1963
      %v2090 = vpop.f32.mrb[0].mxu0
      %v2091 = vadd.f32 0.0, %v2090
      %v2092 = vpop.f32.mrb[0].mxu0
      %v2093 = vpop.f32.mrb[0].mxu0
      %v2094 = vadd.f32 0.0, %v2093
      %v2095 = vpop.f32.mrb[0].mxu0
      %2096 = vmatprep.mubr.bf16.mxu0 0
      %2097 = vmatmul.mubr.bf16.gmra.mrb[0].mxu0 %v1966
      %v2098 = vpop.f32.mrb[0].mxu0
      %v2099 = vadd.f32 0.0, %v2098
      %v2100 = vpop.f32.mrb[0].mxu0
      %v2101 = vpop.f32.mrb[0].mxu0
      %v2102 = vadd.f32 0.0, %v2101
      %v2103 = vpop.f32.mrb[0].mxu0
      %2104 = vmatprep.mubr.bf16.mxu0 0
      %2105 = vmatmul.mubr.bf16.gmra.mrb[0].mxu0 %v1969
      %v2106 = vpop.f32.mrb[0].mxu0
      %v2107 = vadd.f32 0.0, %v2106
      %v2108 = vpop.f32.mrb[0].mxu0
      %v2109 = vpop.f32.mrb[0].mxu0
      %v2110 = vadd.f32 0.0, %v2109
      %v2111 = vpop.f32.mrb[0].mxu0
      %2112 = vmatprep.mubr.bf16.mxu0 0
      %2113 = vmatmul.mubr.bf16.gmra.mrb[0].mxu0 %v1972
      %v2114 = vpop.f32.mrb[0].mxu0
      %v2115 = vadd.f32 0.0, %v2114
      %v2116 = vpop.f32.mrb[0].mxu0
      %v2117 = vpop.f32.mrb[0].mxu0
      %v2118 = vadd.f32 0.0, %v2117
      %v2119 = vpop.f32.mrb[0].mxu0
      %2120 = vmatprep.mubr.bf16.mxu0 0
      %2121 = vmatmul.mubr.bf16.gmra.mrb[0].mxu0 %v1975
      %v2122 = vpop.f32.mrb[0].mxu0
      %v2123 = vadd.f32 0.0, %v2122
      %v2124 = vpop.f32.mrb[0].mxu0
      %v2125 = vpop.f32.mrb[0].mxu0
      %v2126 = vadd.f32 0.0, %v2125
      %v2127 = vpop.f32.mrb[0].mxu0
      %2128 = vmatprep.mubr.bf16.mxu0 0
      %2129 = vmatmul.mubr.bf16.gmra.mrb[0].mxu0 %v1978
      %v2130 = vpop.f32.mrb[0].mxu0
      %v2131 = vadd.f32 0.0, %v2130
      %v2132 = vpop.f32.mrb[0].mxu0
      %v2133 = vpop.f32.mrb[0].mxu0
      %v2134 = vadd.f32 0.0, %v2133
      %v2135 = vpop.f32.mrb[0].mxu0
      %2136 = vmatprep.mubr.bf16.mxu0 0
      %2137 = vmatmul.mubr.bf16.gmra.mrb[0].mxu0 %v1981
      %v2138 = vpop.f32.mrb[0].mxu0
      %v2139 = vadd.f32 0.0, %v2138
      %v2140 = vpop.f32.mrb[0].mxu0
      %v2141 = vpop.f32.mrb[0].mxu0
      %v2142 = vadd.f32 0.0, %v2141
      %v2143 = vpop.f32.mrb[0].mxu0
      %2144 = vmatprep.mubr.bf16.mxu0 0
      %2145 = vmatmul.mubr.bf16.gmra.mrb[0].mxu0 %v1984
      %v2146 = vpop.f32.mrb[0].mxu0
      %v2147 = vadd.f32 0.0, %v2146
      %v2148 = vpop.f32.mrb[0].mxu0
      %v2149 = vpop.f32.mrb[0].mxu0
      %v2150 = vadd.f32 0.0, %v2149
      %v2151 = vpop.f32.mrb[0].mxu0
      %2152 = vmatprep.mubr.bf16.mxu0 0
      %2153 = vmatmul.mubr.bf16.gmra.mrb[0].mxu0 %v1987
      %v2154 = vpop.f32.mrb[0].mxu0
      %v2155 = vadd.f32 0.0, %v2154
      %v2156 = vpop.f32.mrb[0].mxu0
      %v2157 = vpop.f32.mrb[0].mxu0
      %v2158 = vadd.f32 0.0, %v2157
      %v2159 = vpop.f32.mrb[0].mxu0
      %2160 = vmatprep.mubr.bf16.mxu0 0
      %2161 = vmatmul.mubr.bf16.gmra.mrb[0].mxu0 %v1990
      %v2162 = vpop.f32.mrb[0].mxu0
      %v2163 = vadd.f32 0.0, %v2162
      %v2164 = vpop.f32.mrb[0].mxu0
      %v2165 = vpop.f32.mrb[0].mxu0
      %v2166 = vadd.f32 0.0, %v2165
      %v2167 = vpop.f32.mrb[0].mxu0
      %2168 = vdwg.mxu0
      %v2169 = vadd.f32 %v1718, %v2027
      %v2170 = vadd.f32 %v1719, %v2030
      %v2171 = vadd.f32 %v1720, %v2035
      %v2172 = vadd.f32 %v1721, %v2038
      %v2173 = vadd.f32 %v1722, %v2043
      %v2174 = vadd.f32 %v1723, %v2046
      %v2175 = vadd.f32 %v1724, %v2051
      %v2176 = vadd.f32 %v1725, %v2054
      %v2177 = vadd.f32 %v1726, %v2059
      %v2178 = vadd.f32 %v1727, %v2062
      %v2179 = vadd.f32 %v1728, %v2067
      %v2180 = vadd.f32 %v1729, %v2070
      %v2181 = vadd.f32 %v1730, %v2075
      %v2182 = vadd.f32 %v1731, %v2078
      %v2183 = vadd.f32 %v1732, %v2083
      %v2184 = vadd.f32 %v1733, %v2086
      %v2185 = vadd.f32 %v1734, %v2091
      %v2186 = vadd.f32 %v1735, %v2094
      %v2187 = vadd.f32 %v1736, %v2099
      %v2188 = vadd.f32 %v1737, %v2102
      %v2189 = vadd.f32 %v1738, %v2107
      %v2190 = vadd.f32 %v1739, %v2110
      %v2191 = vadd.f32 %v1740, %v2115
      %v2192 = vadd.f32 %v1741, %v2118
      %v2193 = vadd.f32 %v1742, %v2123
      %v2194 = vadd.f32 %v1743, %v2126
      %v2195 = vadd.f32 %v1744, %v2131
      %v2196 = vadd.f32 %v1745, %v2134
      %v2197 = vadd.f32 %v1746, %v2139
      %v2198 = vadd.f32 %v1747, %v2142
      %v2199 = vadd.f32 %v1748, %v2147
      %v2200 = vadd.f32 %v1749, %v2150
      %v2201 = vadd.f32 %v1750, %v2155
      %v2202 = vadd.f32 %v1751, %v2158
      %v2203 = vadd.f32 %v1752, %v2163
      %v2204 = vadd.f32 %v1753, %v2166
      %v2205 = vld [vmem:[%s235 + $0x8] sm:$0xc]
      %s2206 = scalar_lea.vmem %s1, 40
      %v2207 = vld [vmem:[%s2206] sm:$0xf]
      %v2208 = vld [vmem:[%s2206 + $0x4] sm:$0xf]
      %v2210 = vunpack.c.l.b16 %v2205
      %v2211 = vpack.c.b16 %v1389, %v2210
      %vm2212 = vcmask 1045504
      %v2213 = vrot.slane %v2211, 2
      %v2214 = vrot.slane %v1426, 2
      %v2215 = vsel %vm2212, %v2213, %v2214
      %v2216 = vrot.slane %v1427, 2
      %v2217 = vsel %vm2212, %v2214, %v2216
      %v2218 = vrot.slane %v1428, 2
      %v2219 = vsel %vm2212, %v2216, %v2218
      %v2220 = vrot.slane %v1429, 2
      %v2221 = vsel %vm2212, %v2218, %v2220
      %v2222 = vrot.slane %v1430, 2
      %v2223 = vsel %vm2212, %v2220, %v2222
      %v2224 = vrot.slane %v1431, 2
      %v2225 = vsel %vm2212, %v2222, %v2224
      %v2226 = vrot.slane %v1432, 2
      %v2227 = vsel %vm2212, %v2224, %v2226
      %v2228 = vrot.slane %v1433, 2
      %v2229 = vsel %vm2212, %v2226, %v2228
      %v2230 = vrot.slane %v1434, 2
      %v2231 = vsel %vm2212, %v2228, %v2230
      %v2232 = vrot.slane %v1435, 2
      %v2233 = vsel %vm2212, %v2230, %v2232
      %v2234 = vrot.slane %v1436, 2
      %v2235 = vsel %vm2212, %v2232, %v2234
      %v2236 = vrot.slane %v1437, 2
      %v2237 = vsel %vm2212, %v2234, %v2236
      %v2238 = vrot.slane %v1438, 2
      %v2239 = vsel %vm2212, %v2236, %v2238
      %v2240 = vrot.slane %v1439, 2
      %v2241 = vsel %vm2212, %v2238, %v2240
      %v2242 = vrot.slane %v1440, 2
      %v2243 = vsel %vm2212, %v2240, %v2242
      %v2244 = vrot.slane %v1441, 2
      %v2245 = vsel %vm2212, %v2242, %v2244
      %v2246 = vrot.slane %v1442, 2
      %v2247 = vsel %vm2212, %v2244, %v2246
      %v2248 = vrot.slane %v1760, 2
      %v2249 = vsel %vm2212, %v2246, %v2248
      %v2252 = vunpack.c.l.b16 %v2207
      %v2253 = vunpack.c.l.b16 %v2208
      %v2254 = vpack.c.b16 %v2253, %v2252
      %v2257 = vsel %vm542, %v2215, 0
      %v2260 = vsel %vm542, %v2217, 0
      %v2263 = vsel %vm542, %v2219, 0
      %v2266 = vsel %vm542, %v2221, 0
      %v2269 = vsel %vm542, %v2223, 0
      %v2272 = vsel %vm542, %v2225, 0
      %v2275 = vsel %vm542, %v2227, 0
      %v2278 = vsel %vm542, %v2229, 0
      %v2281 = vsel %vm542, %v2231, 0
      %v2284 = vsel %vm542, %v2233, 0
      %v2287 = vsel %vm542, %v2235, 0
      %v2290 = vsel %vm542, %v2237, 0
      %v2293 = vsel %vm542, %v2239, 0
      %v2296 = vsel %vm542, %v2241, 0
      %v2299 = vsel %vm542, %v2243, 0
      %v2302 = vsel %vm542, %v2245, 0
      %v2305 = vsel %vm542, %v2247, 0
      %v2308 = vsel %vm542, %v2249, 0
      %2310 = vmatprep.subr.bf16.mxu0 0
      %2311 = vmatpush1.bf16.msra.mxu0 %v2254
      %2312 = vmatprep.subr.bf16.mxu0 0
      %2313 = vmatpush1.bf16.msra.mxu0 0
      %2314 = vmatprep.subr.bf16.mxu0 0
      %2315 = vmatpush1.bf16.msra.mxu0 0
      %2316 = vmatprep.subr.bf16.mxu0 0
      %2317 = vmatpush1.bf16.msra.mxu0 0
      %2318 = vmatprep.subr.bf16.mxu0 0
      %2319 = vmatpush1.bf16.msra.mxu0 0
      %2320 = vmatprep.subr.bf16.mxu0 0
      %2321 = vmatpush1.bf16.msra.mxu0 0
      %2322 = vmatprep.subr.bf16.mxu0 0
      %2323 = vmatpush1.bf16.msra.mxu0 0
      %2324 = vmatprep.subr.bf16.mxu0 0
      %2325 = vmatpush1.bf16.msra.mxu0 0
      %2326 = vmatprep.subr.bf16.mxu0 0
      %2327 = vmatpush1.bf16.msra.mxu0 0
      %2328 = vmatprep.subr.bf16.mxu0 0
      %2329 = vmatpush1.bf16.msra.mxu0 0
      %2330 = vmatprep.subr.bf16.mxu0 0
      %2331 = vmatpush1.bf16.msra.mxu0 0
      %2332 = vmatprep.subr.bf16.mxu0 0
      %2333 = vmatpush1.bf16.msra.mxu0 0
      %2334 = vmatprep.subr.bf16.mxu0 0
      %2335 = vmatpush1.bf16.msra.mxu0 0
      %2336 = vmatprep.subr.bf16.mxu0 0
      %2337 = vmatpush1.bf16.msra.mxu0 0
      %2338 = vmatprep.subr.bf16.mxu0 0
      %2339 = vmatpush1.bf16.msra.mxu0 0
      %2340 = vmatprep.subr.bf16.mxu0 0
      %2341 = vmatpush1.bf16.msra.mxu0 0
      %2342 = vmatprep.mubr.bf16.mxu0 0
      %2343 = vmatmul.mubr.bf16.gmra.mrb[0].mxu0 %v2257
      %v2344 = vpop.f32.mrb[0].mxu0
      %v2345 = vadd.f32 0.0, %v2344
      %v2346 = vpop.f32.mrb[0].mxu0
      %v2347 = vpop.f32.mrb[0].mxu0
      %v2348 = vadd.f32 0.0, %v2347
      %v2349 = vpop.f32.mrb[0].mxu0
      %2350 = vmatprep.mubr.bf16.mxu0 0
      %2351 = vmatmul.mubr.bf16.gmra.mrb[0].mxu0 %v2260
      %v2352 = vpop.f32.mrb[0].mxu0
      %v2353 = vadd.f32 0.0, %v2352
      %v2354 = vpop.f32.mrb[0].mxu0
      %v2355 = vpop.f32.mrb[0].mxu0
      %v2356 = vadd.f32 0.0, %v2355
      %v2357 = vpop.f32.mrb[0].mxu0
      %2358 = vmatprep.mubr.bf16.mxu0 0
      %2359 = vmatmul.mubr.bf16.gmra.mrb[0].mxu0 %v2263
      %v2360 = vpop.f32.mrb[0].mxu0
      %v2361 = vadd.f32 0.0, %v2360
      %v2362 = vpop.f32.mrb[0].mxu0
      %v2363 = vpop.f32.mrb[0].mxu0
      %v2364 = vadd.f32 0.0, %v2363
      %v2365 = vpop.f32.mrb[0].mxu0
      %2366 = vmatprep.mubr.bf16.mxu0 0
      %2367 = vmatmul.mubr.bf16.gmra.mrb[0].mxu0 %v2266
      %v2368 = vpop.f32.mrb[0].mxu0
      %v2369 = vadd.f32 0.0, %v2368
      %v2370 = vpop.f32.mrb[0].mxu0
      %v2371 = vpop.f32.mrb[0].mxu0
      %v2372 = vadd.f32 0.0, %v2371
      %v2373 = vpop.f32.mrb[0].mxu0
      %2374 = vmatprep.mubr.bf16.mxu0 0
      %2375 = vmatmul.mubr.bf16.gmra.mrb[0].mxu0 %v2269
      %v2376 = vpop.f32.mrb[0].mxu0
      %v2377 = vadd.f32 0.0, %v2376
      %v2378 = vpop.f32.mrb[0].mxu0
      %v2379 = vpop.f32.mrb[0].mxu0
      %v2380 = vadd.f32 0.0, %v2379
      %v2381 = vpop.f32.mrb[0].mxu0
      %2382 = vmatprep.mubr.bf16.mxu0 0
      %2383 = vmatmul.mubr.bf16.gmra.mrb[0].mxu0 %v2272
      %v2384 = vpop.f32.mrb[0].mxu0
      %v2385 = vadd.f32 0.0, %v2384
      %v2386 = vpop.f32.mrb[0].mxu0
      %v2387 = vpop.f32.mrb[0].mxu0
      %v2388 = vadd.f32 0.0, %v2387
      %v2389 = vpop.f32.mrb[0].mxu0
      %2390 = vmatprep.mubr.bf16.mxu0 0
      %2391 = vmatmul.mubr.bf16.gmra.mrb[0].mxu0 %v2275
      %v2392 = vpop.f32.mrb[0].mxu0
      %v2393 = vadd.f32 0.0, %v2392
      %v2394 = vpop.f32.mrb[0].mxu0
      %v2395 = vpop.f32.mrb[0].mxu0
      %v2396 = vadd.f32 0.0, %v2395
      %v2397 = vpop.f32.mrb[0].mxu0
      %2398 = vmatprep.mubr.bf16.mxu0 0
      %2399 = vmatmul.mubr.bf16.gmra.mrb[0].mxu0 %v2278
      %v2400 = vpop.f32.mrb[0].mxu0
      %v2401 = vadd.f32 0.0, %v2400
      %v2402 = vpop.f32.mrb[0].mxu0
      %v2403 = vpop.f32.mrb[0].mxu0
      %v2404 = vadd.f32 0.0, %v2403
      %v2405 = vpop.f32.mrb[0].mxu0
      %2406 = vmatprep.mubr.bf16.mxu0 0
      %2407 = vmatmul.mubr.bf16.gmra.mrb[0].mxu0 %v2281
      %v2408 = vpop.f32.mrb[0].mxu0
      %v2409 = vadd.f32 0.0, %v2408
      %v2410 = vpop.f32.mrb[0].mxu0
      %v2411 = vpop.f32.mrb[0].mxu0
      %v2412 = vadd.f32 0.0, %v2411
      %v2413 = vpop.f32.mrb[0].mxu0
      %2414 = vmatprep.mubr.bf16.mxu0 0
      %2415 = vmatmul.mubr.bf16.gmra.mrb[0].mxu0 %v2284
      %v2416 = vpop.f32.mrb[0].mxu0
      %v2417 = vadd.f32 0.0, %v2416
      %v2418 = vpop.f32.mrb[0].mxu0
      %v2419 = vpop.f32.mrb[0].mxu0
      %v2420 = vadd.f32 0.0, %v2419
      %v2421 = vpop.f32.mrb[0].mxu0
      %2422 = vmatprep.mubr.bf16.mxu0 0
      %2423 = vmatmul.mubr.bf16.gmra.mrb[0].mxu0 %v2287
      %v2424 = vpop.f32.mrb[0].mxu0
      %v2425 = vadd.f32 0.0, %v2424
      %v2426 = vpop.f32.mrb[0].mxu0
      %v2427 = vpop.f32.mrb[0].mxu0
      %v2428 = vadd.f32 0.0, %v2427
      %v2429 = vpop.f32.mrb[0].mxu0
      %2430 = vmatprep.mubr.bf16.mxu0 0
      %2431 = vmatmul.mubr.bf16.gmra.mrb[0].mxu0 %v2290
      %v2432 = vpop.f32.mrb[0].mxu0
      %v2433 = vadd.f32 0.0, %v2432
      %v2434 = vpop.f32.mrb[0].mxu0
      %v2435 = vpop.f32.mrb[0].mxu0
      %v2436 = vadd.f32 0.0, %v2435
      %v2437 = vpop.f32.mrb[0].mxu0
      %2438 = vmatprep.mubr.bf16.mxu0 0
      %2439 = vmatmul.mubr.bf16.gmra.mrb[0].mxu0 %v2293
      %v2440 = vpop.f32.mrb[0].mxu0
      %v2441 = vadd.f32 0.0, %v2440
      %v2442 = vpop.f32.mrb[0].mxu0
      %v2443 = vpop.f32.mrb[0].mxu0
      %v2444 = vadd.f32 0.0, %v2443
      %v2445 = vpop.f32.mrb[0].mxu0
      %2446 = vmatprep.mubr.bf16.mxu0 0
      %2447 = vmatmul.mubr.bf16.gmra.mrb[0].mxu0 %v2296
      %v2448 = vpop.f32.mrb[0].mxu0
      %v2449 = vadd.f32 0.0, %v2448
      %v2450 = vpop.f32.mrb[0].mxu0
      %v2451 = vpop.f32.mrb[0].mxu0
      %v2452 = vadd.f32 0.0, %v2451
      %v2453 = vpop.f32.mrb[0].mxu0
      %2454 = vmatprep.mubr.bf16.mxu0 0
      %2455 = vmatmul.mubr.bf16.gmra.mrb[0].mxu0 %v2299
      %v2456 = vpop.f32.mrb[0].mxu0
      %v2457 = vadd.f32 0.0, %v2456
      %v2458 = vpop.f32.mrb[0].mxu0
      %v2459 = vpop.f32.mrb[0].mxu0
      %v2460 = vadd.f32 0.0, %v2459
      %v2461 = vpop.f32.mrb[0].mxu0
      %2462 = vmatprep.mubr.bf16.mxu0 0
      %2463 = vmatmul.mubr.bf16.gmra.mrb[0].mxu0 %v2302
      %v2464 = vpop.f32.mrb[0].mxu0
      %v2465 = vadd.f32 0.0, %v2464
      %v2466 = vpop.f32.mrb[0].mxu0
      %v2467 = vpop.f32.mrb[0].mxu0
      %v2468 = vadd.f32 0.0, %v2467
      %v2469 = vpop.f32.mrb[0].mxu0
      %2470 = vmatprep.mubr.bf16.mxu0 0
      %2471 = vmatmul.mubr.bf16.gmra.mrb[0].mxu0 %v2305
      %v2472 = vpop.f32.mrb[0].mxu0
      %v2473 = vadd.f32 0.0, %v2472
      %v2474 = vpop.f32.mrb[0].mxu0
      %v2475 = vpop.f32.mrb[0].mxu0
      %v2476 = vadd.f32 0.0, %v2475
      %v2477 = vpop.f32.mrb[0].mxu0
      %2478 = vmatprep.mubr.bf16.mxu0 0
      %2479 = vmatmul.mubr.bf16.gmra.mrb[0].mxu0 %v2308
      %v2480 = vpop.f32.mrb[0].mxu0
      %v2481 = vadd.f32 0.0, %v2480
      %v2482 = vpop.f32.mrb[0].mxu0
      %v2483 = vpop.f32.mrb[0].mxu0
      %v2484 = vadd.f32 0.0, %v2483
      %v2485 = vpop.f32.mrb[0].mxu0
      %2486 = vdwg.mxu0
      %v2487 = vadd.f32 %v2169, %v2345
      %v2488 = vadd.f32 %v2170, %v2348
      %v2489 = vadd.f32 %v2171, %v2353
      %v2490 = vadd.f32 %v2172, %v2356
      %v2491 = vadd.f32 %v2173, %v2361
      %v2492 = vadd.f32 %v2174, %v2364
      %v2493 = vadd.f32 %v2175, %v2369
      %v2494 = vadd.f32 %v2176, %v2372
      %v2495 = vadd.f32 %v2177, %v2377
      %v2496 = vadd.f32 %v2178, %v2380
      %v2497 = vadd.f32 %v2179, %v2385
      %v2498 = vadd.f32 %v2180, %v2388
      %v2499 = vadd.f32 %v2181, %v2393
      %v2500 = vadd.f32 %v2182, %v2396
      %v2501 = vadd.f32 %v2183, %v2401
      %v2502 = vadd.f32 %v2184, %v2404
      %v2503 = vadd.f32 %v2185, %v2409
      %v2504 = vadd.f32 %v2186, %v2412
      %v2505 = vadd.f32 %v2187, %v2417
      %v2506 = vadd.f32 %v2188, %v2420
      %v2507 = vadd.f32 %v2189, %v2425
      %v2508 = vadd.f32 %v2190, %v2428
      %v2509 = vadd.f32 %v2191, %v2433
      %v2510 = vadd.f32 %v2192, %v2436
      %v2511 = vadd.f32 %v2193, %v2441
      %v2512 = vadd.f32 %v2194, %v2444
      %v2513 = vadd.f32 %v2195, %v2449
      %v2514 = vadd.f32 %v2196, %v2452
      %v2515 = vadd.f32 %v2197, %v2457
      %v2516 = vadd.f32 %v2198, %v2460
      %v2517 = vadd.f32 %v2199, %v2465
      %v2518 = vadd.f32 %v2200, %v2468
      %v2519 = vadd.f32 %v2201, %v2473
      %v2520 = vadd.f32 %v2202, %v2476
      %v2521 = vadd.f32 %v2203, %v2481
      %v2522 = vadd.f32 %v2204, %v2484
      %v2523 = vld [vmem:[%s235 + $0x10] sm:$0xc]
      %v2524 = vld [vmem:[%s235 + $0x14] sm:$0xf]
      %v2525 = vld [vmem:[%s235 + $0x18] sm:$0xf]
      %v2526 = vld [vmem:[%s235 + $0x1c] sm:$0xf]
      %v2527 = vld [vmem:[%s235 + $0x20] sm:$0xf]
      %v2528 = vld [vmem:[%s235 + $0x24] sm:$0xf]
      %v2529 = vld [vmem:[%s235 + $0x28] sm:$0xf]
      %v2530 = vld [vmem:[%s235 + $0x2c] sm:$0xf]
      %v2531 = vld [vmem:[%s235 + $0x30] sm:$0xf]
      %v2532 = vld [vmem:[%s235 + $0x34] sm:$0xf]
      %v2533 = vld [vmem:[%s235 + $0x38] sm:$0xf]
      %v2534 = vld [vmem:[%s235 + $0x3c] sm:$0xf]
      %v2535 = vld [vmem:[%s235 + $0x40] sm:$0xf]
      %v2536 = vld [vmem:[%s235 + $0x44] sm:$0xf]
      %v2537 = vld [vmem:[%s235 + $0x48] sm:$0xf]
      %v2538 = vld [vmem:[%s235 + $0x4c] sm:$0xf]
      %v2539 = vld [vmem:[%s235 + $0x50] sm:$0xf]
      %v2540 = vld [vmem:[%s235 + $0x54] sm:$0xf]
      %v2541 = vld [vmem:[%s235 + $0x58] sm:$0xf]
      %v2542 = vld [vmem:[%s235 + $0x5c] sm:$0xf]
      %v2543 = vld [vmem:[%s235 + $0x60] sm:$0xf]
      %v2544 = vld [vmem:[%s235 + $0x64] sm:$0xf]
      %v2545 = vld [vmem:[%s235 + $0x68] sm:$0xf]
      %v2546 = vld [vmem:[%s235 + $0x6c] sm:$0xf]
      %v2547 = vld [vmem:[%s235 + $0x70] sm:$0xf]
      %v2548 = vld [vmem:[%s235 + $0x74] sm:$0xf]
      %v2549 = vld [vmem:[%s235 + $0x78] sm:$0xf]
      %v2550 = vld [vmem:[%s235 + $0x7c] sm:$0xf]
      %v2551 = vld [vmem:[%s235 + $0x80] sm:$0xf]
      %v2552 = vld [vmem:[%s235 + $0x84] sm:$0xf]
      %v2553 = vld [vmem:[%s235 + $0x88] sm:$0xf]
      %v2554 = vld [vmem:[%s235 + $0x8c] sm:$0xf]
      %v2555 = vld [vmem:[%s235 + $0x90] sm:$0xf]
      %v2556 = vld [vmem:[%s235 + $0x94] sm:$0xf]
      %v2557 = vld [vmem:[%s235 + $0x98] sm:$0xf]
      %v2558 = vld [vmem:[%s235 + $0x9c] sm:$0xf]
      %v2559 = vld [vmem:[%s235 + $0xa0] sm:$0x3]
      %s2560 = scalar_lea.vmem %s1, 48
      %v2561 = vld [vmem:[%s2560] sm:$0xf]
      %v2562 = vld [vmem:[%s2560 + $0x4] sm:$0xf]
      %v2600 = vunpack.c.l.b16 %v2523
      %v2601 = vunpack.c.l.b16 %v2524
      %v2602 = vunpack.c.l.b16 %v2525
      %v2603 = vunpack.c.l.b16 %v2526
      %v2604 = vunpack.c.l.b16 %v2527
      %v2605 = vunpack.c.l.b16 %v2528
      %v2606 = vunpack.c.l.b16 %v2529
      %v2607 = vunpack.c.l.b16 %v2530
      %v2608 = vunpack.c.l.b16 %v2531
      %v2609 = vunpack.c.l.b16 %v2532
      %v2610 = vunpack.c.l.b16 %v2533
      %v2611 = vunpack.c.l.b16 %v2534
      %v2612 = vunpack.c.l.b16 %v2535
      %v2613 = vunpack.c.l.b16 %v2536
      %v2614 = vunpack.c.l.b16 %v2537
      %v2615 = vunpack.c.l.b16 %v2538
      %v2616 = vunpack.c.l.b16 %v2539
      %v2617 = vunpack.c.l.b16 %v2540
      %v2618 = vunpack.c.l.b16 %v2541
      %v2619 = vunpack.c.l.b16 %v2542
      %v2620 = vunpack.c.l.b16 %v2543
      %v2621 = vunpack.c.l.b16 %v2544
      %v2622 = vunpack.c.l.b16 %v2545
      %v2623 = vunpack.c.l.b16 %v2546
      %v2624 = vunpack.c.l.b16 %v2547
      %v2625 = vunpack.c.l.b16 %v2548
      %v2626 = vunpack.c.l.b16 %v2549
      %v2627 = vunpack.c.l.b16 %v2550
      %v2628 = vunpack.c.l.b16 %v2551
      %v2629 = vunpack.c.l.b16 %v2552
      %v2630 = vunpack.c.l.b16 %v2553
      %v2631 = vunpack.c.l.b16 %v2554
      %v2632 = vunpack.c.l.b16 %v2555
      %v2633 = vunpack.c.l.b16 %v2556
      %v2634 = vunpack.c.l.b16 %v2557
      %v2635 = vunpack.c.l.b16 %v2558
      %v2636 = vunpack.c.l.b16 %v2559
      %v2637 = vpack.c.b16 %v2601, %v2600
      %v2638 = vpack.c.b16 %v2603, %v2602
      %v2639 = vpack.c.b16 %v2605, %v2604
      %v2640 = vpack.c.b16 %v2607, %v2606
      %v2641 = vpack.c.b16 %v2609, %v2608
      %v2642 = vpack.c.b16 %v2611, %v2610
      %v2643 = vpack.c.b16 %v2613, %v2612
      %v2644 = vpack.c.b16 %v2615, %v2614
      %v2645 = vpack.c.b16 %v2617, %v2616
      %v2646 = vpack.c.b16 %v2619, %v2618
      %v2647 = vpack.c.b16 %v2621, %v2620
      %v2648 = vpack.c.b16 %v2623, %v2622
      %v2649 = vpack.c.b16 %v2625, %v2624
      %v2650 = vpack.c.b16 %v2627, %v2626
      %v2651 = vpack.c.b16 %v2629, %v2628
      %v2652 = vpack.c.b16 %v2631, %v2630
      %v2653 = vpack.c.b16 %v2633, %v2632
      %v2654 = vpack.c.b16 %v2635, %v2634
      %v2655 = vpack.c.b16 %v2636, %v2636
      %v2656 = vrot.slane %v2637, 2
      %v2657 = vrot.slane %v2638, 2
      %v2658 = vsel %vm2212, %v2656, %v2657
      %v2659 = vrot.slane %v2639, 2
      %v2660 = vsel %vm2212, %v2657, %v2659
      %v2661 = vrot.slane %v2640, 2
      %v2662 = vsel %vm2212, %v2659, %v2661
      %v2663 = vrot.slane %v2641, 2
      %v2664 = vsel %vm2212, %v2661, %v2663
      %v2665 = vrot.slane %v2642, 2
      %v2666 = vsel %vm2212, %v2663, %v2665
      %v2667 = vrot.slane %v2643, 2
      %v2668 = vsel %vm2212, %v2665, %v2667
      %v2669 = vrot.slane %v2644, 2
      %v2670 = vsel %vm2212, %v2667, %v2669
      %v2671 = vrot.slane %v2645, 2
      %v2672 = vsel %vm2212, %v2669, %v2671
      %v2673 = vrot.slane %v2646, 2
      %v2674 = vsel %vm2212, %v2671, %v2673
      %v2675 = vrot.slane %v2647, 2
      %v2676 = vsel %vm2212, %v2673, %v2675
      %v2677 = vrot.slane %v2648, 2
      %v2678 = vsel %vm2212, %v2675, %v2677
      %v2679 = vrot.slane %v2649, 2
      %v2680 = vsel %vm2212, %v2677, %v2679
      %v2681 = vrot.slane %v2650, 2
      %v2682 = vsel %vm2212, %v2679, %v2681
      %v2683 = vrot.slane %v2651, 2
      %v2684 = vsel %vm2212, %v2681, %v2683
      %v2685 = vrot.slane %v2652, 2
      %v2686 = vsel %vm2212, %v2683, %v2685
      %v2687 = vrot.slane %v2653, 2
      %v2688 = vsel %vm2212, %v2685, %v2687
      %v2689 = vrot.slane %v2654, 2
      %v2690 = vsel %vm2212, %v2687, %v2689
      %v2691 = vrot.slane %v2655, 2
      %v2692 = vsel %vm2212, %v2689, %v2691
      %v2695 = vunpack.c.l.b16 %v2561
      %v2696 = vunpack.c.l.b16 %v2562
      %v2697 = vpack.c.b16 %v2696, %v2695
      %v2700 = vsel %vm542, %v2658, 0
      %v2703 = vsel %vm542, %v2660, 0
      %v2706 = vsel %vm542, %v2662, 0
      %v2709 = vsel %vm542, %v2664, 0
      %v2712 = vsel %vm542, %v2666, 0
      %v2715 = vsel %vm542, %v2668, 0
      %v2718 = vsel %vm542, %v2670, 0
      %v2721 = vsel %vm542, %v2672, 0
      %v2724 = vsel %vm542, %v2674, 0
      %v2727 = vsel %vm542, %v2676, 0
      %v2730 = vsel %vm542, %v2678, 0
      %v2733 = vsel %vm542, %v2680, 0
      %v2736 = vsel %vm542, %v2682, 0
      %v2739 = vsel %vm542, %v2684, 0
      %v2742 = vsel %vm542, %v2686, 0
      %v2745 = vsel %vm542, %v2688, 0
      %v2748 = vsel %vm542, %v2690, 0
      %v2751 = vsel %vm542, %v2692, 0
      %2753 = vmatprep.subr.bf16.mxu0 0
      %2754 = vmatpush1.bf16.msra.mxu0 %v2697
      %2755 = vmatprep.subr.bf16.mxu0 0
      %2756 = vmatpush1.bf16.msra.mxu0 0
      %2757 = vmatprep.subr.bf16.mxu0 0
      %2758 = vmatpush1.bf16.msra.mxu0 0
      %2759 = vmatprep.subr.bf16.mxu0 0
      %2760 = vmatpush1.bf16.msra.mxu0 0
      %2761 = vmatprep.subr.bf16.mxu0 0
      %2762 = vmatpush1.bf16.msra.mxu0 0
      %2763 = vmatprep.subr.bf16.mxu0 0
      %2764 = vmatpush1.bf16.msra.mxu0 0
      %2765 = vmatprep.subr.bf16.mxu0 0
      %2766 = vmatpush1.bf16.msra.mxu0 0
      %2767 = vmatprep.subr.bf16.mxu0 0
      %2768 = vmatpush1.bf16.msra.mxu0 0
      %2769 = vmatprep.subr.bf16.mxu0 0
      %2770 = vmatpush1.bf16.msra.mxu0 0
      %2771 = vmatprep.subr.bf16.mxu0 0
      %2772 = vmatpush1.bf16.msra.mxu0 0
      %2773 = vmatprep.subr.bf16.mxu0 0
      %2774 = vmatpush1.bf16.msra.mxu0 0
      %2775 = vmatprep.subr.bf16.mxu0 0
      %2776 = vmatpush1.bf16.msra.mxu0 0
      %2777 = vmatprep.subr.bf16.mxu0 0
      %2778 = vmatpush1.bf16.msra.mxu0 0
      %2779 = vmatprep.subr.bf16.mxu0 0
      %2780 = vmatpush1.bf16.msra.mxu0 0
      %2781 = vmatprep.subr.bf16.mxu0 0
      %2782 = vmatpush1.bf16.msra.mxu0 0
      %2783 = vmatprep.subr.bf16.mxu0 0
      %2784 = vmatpush1.bf16.msra.mxu0 0
      %2785 = vmatprep.mubr.bf16.mxu0 0
      %2786 = vmatmul.mubr.bf16.gmra.mrb[0].mxu0 %v2700
      %v2787 = vpop.f32.mrb[0].mxu0
      %v2788 = vadd.f32 0.0, %v2787
      %v2789 = vpop.f32.mrb[0].mxu0
      %v2790 = vpop.f32.mrb[0].mxu0
      %v2791 = vadd.f32 0.0, %v2790
      %v2792 = vpop.f32.mrb[0].mxu0
      %2793 = vmatprep.mubr.bf16.mxu0 0
      %2794 = vmatmul.mubr.bf16.gmra.mrb[0].mxu0 %v2703
      %v2795 = vpop.f32.mrb[0].mxu0
      %v2796 = vadd.f32 0.0, %v2795
      %v2797 = vpop.f32.mrb[0].mxu0
      %v2798 = vpop.f32.mrb[0].mxu0
      %v2799 = vadd.f32 0.0, %v2798
      %v2800 = vpop.f32.mrb[0].mxu0
      %2801 = vmatprep.mubr.bf16.mxu0 0
      %2802 = vmatmul.mubr.bf16.gmra.mrb[0].mxu0 %v2706
      %v2803 = vpop.f32.mrb[0].mxu0
      %v2804 = vadd.f32 0.0, %v2803
      %v2805 = vpop.f32.mrb[0].mxu0
      %v2806 = vpop.f32.mrb[0].mxu0
      %v2807 = vadd.f32 0.0, %v2806
      %v2808 = vpop.f32.mrb[0].mxu0
      %2809 = vmatprep.mubr.bf16.mxu0 0
      %2810 = vmatmul.mubr.bf16.gmra.mrb[0].mxu0 %v2709
      %v2811 = vpop.f32.mrb[0].mxu0
      %v2812 = vadd.f32 0.0, %v2811
      %v2813 = vpop.f32.mrb[0].mxu0
      %v2814 = vpop.f32.mrb[0].mxu0
      %v2815 = vadd.f32 0.0, %v2814
      %v2816 = vpop.f32.mrb[0].mxu0
      %2817 = vmatprep.mubr.bf16.mxu0 0
      %2818 = vmatmul.mubr.bf16.gmra.mrb[0].mxu0 %v2712
      %v2819 = vpop.f32.mrb[0].mxu0
      %v2820 = vadd.f32 0.0, %v2819
      %v2821 = vpop.f32.mrb[0].mxu0
      %v2822 = vpop.f32.mrb[0].mxu0
      %v2823 = vadd.f32 0.0, %v2822
      %v2824 = vpop.f32.mrb[0].mxu0
      %2825 = vmatprep.mubr.bf16.mxu0 0
      %2826 = vmatmul.mubr.bf16.gmra.mrb[0].mxu0 %v2715
      %v2827 = vpop.f32.mrb[0].mxu0
      %v2828 = vadd.f32 0.0, %v2827
      %v2829 = vpop.f32.mrb[0].mxu0
      %v2830 = vpop.f32.mrb[0].mxu0
      %v2831 = vadd.f32 0.0, %v2830
      %v2832 = vpop.f32.mrb[0].mxu0
      %2833 = vmatprep.mubr.bf16.mxu0 0
      %2834 = vmatmul.mubr.bf16.gmra.mrb[0].mxu0 %v2718
      %v2835 = vpop.f32.mrb[0].mxu0
      %v2836 = vadd.f32 0.0, %v2835
      %v2837 = vpop.f32.mrb[0].mxu0
      %v2838 = vpop.f32.mrb[0].mxu0
      %v2839 = vadd.f32 0.0, %v2838
      %v2840 = vpop.f32.mrb[0].mxu0
      %2841 = vmatprep.mubr.bf16.mxu0 0
      %2842 = vmatmul.mubr.bf16.gmra.mrb[0].mxu0 %v2721
      %v2843 = vpop.f32.mrb[0].mxu0
      %v2844 = vadd.f32 0.0, %v2843
      %v2845 = vpop.f32.mrb[0].mxu0
      %v2846 = vpop.f32.mrb[0].mxu0
      %v2847 = vadd.f32 0.0, %v2846
      %v2848 = vpop.f32.mrb[0].mxu0
      %2849 = vmatprep.mubr.bf16.mxu0 0
      %2850 = vmatmul.mubr.bf16.gmra.mrb[0].mxu0 %v2724
      %v2851 = vpop.f32.mrb[0].mxu0
      %v2852 = vadd.f32 0.0, %v2851
      %v2853 = vpop.f32.mrb[0].mxu0
      %v2854 = vpop.f32.mrb[0].mxu0
      %v2855 = vadd.f32 0.0, %v2854
      %v2856 = vpop.f32.mrb[0].mxu0
      %2857 = vmatprep.mubr.bf16.mxu0 0
      %2858 = vmatmul.mubr.bf16.gmra.mrb[0].mxu0 %v2727
      %v2859 = vpop.f32.mrb[0].mxu0
      %v2860 = vadd.f32 0.0, %v2859
      %v2861 = vpop.f32.mrb[0].mxu0
      %v2862 = vpop.f32.mrb[0].mxu0
      %v2863 = vadd.f32 0.0, %v2862
      %v2864 = vpop.f32.mrb[0].mxu0
      %2865 = vmatprep.mubr.bf16.mxu0 0
      %2866 = vmatmul.mubr.bf16.gmra.mrb[0].mxu0 %v2730
      %v2867 = vpop.f32.mrb[0].mxu0
      %v2868 = vadd.f32 0.0, %v2867
      %v2869 = vpop.f32.mrb[0].mxu0
      %v2870 = vpop.f32.mrb[0].mxu0
      %v2871 = vadd.f32 0.0, %v2870
      %v2872 = vpop.f32.mrb[0].mxu0
      %2873 = vmatprep.mubr.bf16.mxu0 0
      %2874 = vmatmul.mubr.bf16.gmra.mrb[0].mxu0 %v2733
      %v2875 = vpop.f32.mrb[0].mxu0
      %v2876 = vadd.f32 0.0, %v2875
      %v2877 = vpop.f32.mrb[0].mxu0
      %v2878 = vpop.f32.mrb[0].mxu0
      %v2879 = vadd.f32 0.0, %v2878
      %v2880 = vpop.f32.mrb[0].mxu0
      %2881 = vmatprep.mubr.bf16.mxu0 0
      %2882 = vmatmul.mubr.bf16.gmra.mrb[0].mxu0 %v2736
      %v2883 = vpop.f32.mrb[0].mxu0
      %v2884 = vadd.f32 0.0, %v2883
      %v2885 = vpop.f32.mrb[0].mxu0
      %v2886 = vpop.f32.mrb[0].mxu0
      %v2887 = vadd.f32 0.0, %v2886
      %v2888 = vpop.f32.mrb[0].mxu0
      %2889 = vmatprep.mubr.bf16.mxu0 0
      %2890 = vmatmul.mubr.bf16.gmra.mrb[0].mxu0 %v2739
      %v2891 = vpop.f32.mrb[0].mxu0
      %v2892 = vadd.f32 0.0, %v2891
      %v2893 = vpop.f32.mrb[0].mxu0
      %v2894 = vpop.f32.mrb[0].mxu0
      %v2895 = vadd.f32 0.0, %v2894
      %v2896 = vpop.f32.mrb[0].mxu0
      %2897 = vmatprep.mubr.bf16.mxu0 0
      %2898 = vmatmul.mubr.bf16.gmra.mrb[0].mxu0 %v2742
      %v2899 = vpop.f32.mrb[0].mxu0
      %v2900 = vadd.f32 0.0, %v2899
      %v2901 = vpop.f32.mrb[0].mxu0
      %v2902 = vpop.f32.mrb[0].mxu0
      %v2903 = vadd.f32 0.0, %v2902
      %v2904 = vpop.f32.mrb[0].mxu0
      %2905 = vmatprep.mubr.bf16.mxu0 0
      %2906 = vmatmul.mubr.bf16.gmra.mrb[0].mxu0 %v2745
      %v2907 = vpop.f32.mrb[0].mxu0
      %v2908 = vadd.f32 0.0, %v2907
      %v2909 = vpop.f32.mrb[0].mxu0
      %v2910 = vpop.f32.mrb[0].mxu0
      %v2911 = vadd.f32 0.0, %v2910
      %v2912 = vpop.f32.mrb[0].mxu0
      %2913 = vmatprep.mubr.bf16.mxu0 0
      %2914 = vmatmul.mubr.bf16.gmra.mrb[0].mxu0 %v2748
      %v2915 = vpop.f32.mrb[0].mxu0
      %v2916 = vadd.f32 0.0, %v2915
      %v2917 = vpop.f32.mrb[0].mxu0
      %v2918 = vpop.f32.mrb[0].mxu0
      %v2919 = vadd.f32 0.0, %v2918
      %v2920 = vpop.f32.mrb[0].mxu0
      %2921 = vmatprep.mubr.bf16.mxu0 0
      %2922 = vmatmul.mubr.bf16.gmra.mrb[0].mxu0 %v2751
      %v2923 = vpop.f32.mrb[0].mxu0
      %v2924 = vadd.f32 0.0, %v2923
      %v2925 = vpop.f32.mrb[0].mxu0
      %v2926 = vpop.f32.mrb[0].mxu0
      %v2927 = vadd.f32 0.0, %v2926
      %v2928 = vpop.f32.mrb[0].mxu0
      %2929 = vdwg.mxu0
      %v2930 = vadd.f32 %v2487, %v2788
      %v2931 = vadd.f32 %v2488, %v2791
      %v2932 = vadd.f32 %v2489, %v2796
      %v2933 = vadd.f32 %v2490, %v2799
      %v2934 = vadd.f32 %v2491, %v2804
      %v2935 = vadd.f32 %v2492, %v2807
      %v2936 = vadd.f32 %v2493, %v2812
      %v2937 = vadd.f32 %v2494, %v2815
      %v2938 = vadd.f32 %v2495, %v2820
      %v2939 = vadd.f32 %v2496, %v2823
      %v2940 = vadd.f32 %v2497, %v2828
      %v2941 = vadd.f32 %v2498, %v2831
      %v2942 = vadd.f32 %v2499, %v2836
      %v2943 = vadd.f32 %v2500, %v2839
      %v2944 = vadd.f32 %v2501, %v2844
      %v2945 = vadd.f32 %v2502, %v2847
      %v2946 = vadd.f32 %v2503, %v2852
      %v2947 = vadd.f32 %v2504, %v2855
      %v2948 = vadd.f32 %v2505, %v2860
      %v2949 = vadd.f32 %v2506, %v2863
      %v2950 = vadd.f32 %v2507, %v2868
      %v2951 = vadd.f32 %v2508, %v2871
      %v2952 = vadd.f32 %v2509, %v2876
      %v2953 = vadd.f32 %v2510, %v2879
      %v2954 = vadd.f32 %v2511, %v2884
      %v2955 = vadd.f32 %v2512, %v2887
      %v2956 = vadd.f32 %v2513, %v2892
      %v2957 = vadd.f32 %v2514, %v2895
      %v2958 = vadd.f32 %v2515, %v2900
      %v2959 = vadd.f32 %v2516, %v2903
      %v2960 = vadd.f32 %v2517, %v2908
      %v2961 = vadd.f32 %v2518, %v2911
      %v2962 = vadd.f32 %v2519, %v2916
      %v2963 = vadd.f32 %v2520, %v2919
      %v2964 = vadd.f32 %v2521, %v2924
      %v2965 = vadd.f32 %v2522, %v2927
      %v2966 = vld [vmem:[%s235 + $0xa0] sm:$0x7]
      %s2967 = scalar_lea.vmem %s1, 56
      %v2968 = vld [vmem:[%s2967] sm:$0xf]
      %v2969 = vld [vmem:[%s2967 + $0x4] sm:$0xf]
      %v2971 = vunpack.c.l.b16 %v2966
      %v2972 = vpack.c.b16 %v2971, %v2971
      %vm2973 = vsmask.f32 5376
      %v2975 = vshrl.u32 %v2637, 16
      %v2977 = vrot.slane %v2975, 2
      %v2978 = vshll.u32 %v2637, 16
      %v2980 = vrot.slane %v2978, 3
      %v2981 = vor.u32 %v2977, %v2980
      %v2983 = vshrl.u32 %v2638, 16
      %v2985 = vrot.slane %v2983, 2
      %v2986 = vshll.u32 %v2638, 16
      %v2988 = vrot.slane %v2986, 3
      %v2989 = vor.u32 %v2985, %v2988
      %v2990 = vsel %vm2973, %v2981, %v2989
      %v2992 = vshrl.u32 %v2639, 16
      %v2994 = vrot.slane %v2992, 2
      %v2995 = vshll.u32 %v2639, 16
      %v2997 = vrot.slane %v2995, 3
      %v2998 = vor.u32 %v2994, %v2997
      %v2999 = vsel %vm2973, %v2989, %v2998
      %v3001 = vshrl.u32 %v2640, 16
      %v3003 = vrot.slane %v3001, 2
      %v3004 = vshll.u32 %v2640, 16
      %v3006 = vrot.slane %v3004, 3
      %v3007 = vor.u32 %v3003, %v3006
      %v3008 = vsel %vm2973, %v2998, %v3007
      %v3010 = vshrl.u32 %v2641, 16
      %v3012 = vrot.slane %v3010, 2
      %v3013 = vshll.u32 %v2641, 16
      %v3015 = vrot.slane %v3013, 3
      %v3016 = vor.u32 %v3012, %v3015
      %v3017 = vsel %vm2973, %v3007, %v3016
      %v3019 = vshrl.u32 %v2642, 16
      %v3021 = vrot.slane %v3019, 2
      %v3022 = vshll.u32 %v2642, 16
      %v3024 = vrot.slane %v3022, 3
      %v3025 = vor.u32 %v3021, %v3024
      %v3026 = vsel %vm2973, %v3016, %v3025
      %v3028 = vshrl.u32 %v2643, 16
      %v3030 = vrot.slane %v3028, 2
      %v3031 = vshll.u32 %v2643, 16
      %v3033 = vrot.slane %v3031, 3
      %v3034 = vor.u32 %v3030, %v3033
      %v3035 = vsel %vm2973, %v3025, %v3034
      %v3037 = vshrl.u32 %v2644, 16
      %v3039 = vrot.slane %v3037, 2
      %v3040 = vshll.u32 %v2644, 16
      %v3042 = vrot.slane %v3040, 3
      %v3043 = vor.u32 %v3039, %v3042
      %v3044 = vsel %vm2973, %v3034, %v3043
      %v3046 = vshrl.u32 %v2645, 16
      %v3048 = vrot.slane %v3046, 2
      %v3049 = vshll.u32 %v2645, 16
      %v3051 = vrot.slane %v3049, 3
      %v3052 = vor.u32 %v3048, %v3051
      %v3053 = vsel %vm2973, %v3043, %v3052
      %v3055 = vshrl.u32 %v2646, 16
      %v3057 = vrot.slane %v3055, 2
      %v3058 = vshll.u32 %v2646, 16
      %v3060 = vrot.slane %v3058, 3
      %v3061 = vor.u32 %v3057, %v3060
      %v3062 = vsel %vm2973, %v3052, %v3061
      %v3064 = vshrl.u32 %v2647, 16
      %v3066 = vrot.slane %v3064, 2
      %v3067 = vshll.u32 %v2647, 16
      %v3069 = vrot.slane %v3067, 3
      %v3070 = vor.u32 %v3066, %v3069
      %v3071 = vsel %vm2973, %v3061, %v3070
      %v3073 = vshrl.u32 %v2648, 16
      %v3075 = vrot.slane %v3073, 2
      %v3076 = vshll.u32 %v2648, 16
      %v3078 = vrot.slane %v3076, 3
      %v3079 = vor.u32 %v3075, %v3078
      %v3080 = vsel %vm2973, %v3070, %v3079
      %v3082 = vshrl.u32 %v2649, 16
      %v3084 = vrot.slane %v3082, 2
      %v3085 = vshll.u32 %v2649, 16
      %v3087 = vrot.slane %v3085, 3
      %v3088 = vor.u32 %v3084, %v3087
      %v3089 = vsel %vm2973, %v3079, %v3088
      %v3091 = vshrl.u32 %v2650, 16
      %v3093 = vrot.slane %v3091, 2
      %v3094 = vshll.u32 %v2650, 16
      %v3096 = vrot.slane %v3094, 3
      %v3097 = vor.u32 %v3093, %v3096
      %v3098 = vsel %vm2973, %v3088, %v3097
      %v3100 = vshrl.u32 %v2651, 16
      %v3102 = vrot.slane %v3100, 2
      %v3103 = vshll.u32 %v2651, 16
      %v3105 = vrot.slane %v3103, 3
      %v3106 = vor.u32 %v3102, %v3105
      %v3107 = vsel %vm2973, %v3097, %v3106
      %v3109 = vshrl.u32 %v2652, 16
      %v3111 = vrot.slane %v3109, 2
      %v3112 = vshll.u32 %v2652, 16
      %v3114 = vrot.slane %v3112, 3
      %v3115 = vor.u32 %v3111, %v3114
      %v3116 = vsel %vm2973, %v3106, %v3115
      %v3118 = vshrl.u32 %v2653, 16
      %v3120 = vrot.slane %v3118, 2
      %v3121 = vshll.u32 %v2653, 16
      %v3123 = vrot.slane %v3121, 3
      %v3124 = vor.u32 %v3120, %v3123
      %v3125 = vsel %vm2973, %v3115, %v3124
      %v3127 = vshrl.u32 %v2654, 16
      %v3129 = vrot.slane %v3127, 2
      %v3130 = vshll.u32 %v2654, 16
      %v3132 = vrot.slane %v3130, 3
      %v3133 = vor.u32 %v3129, %v3132
      %v3134 = vsel %vm2973, %v3124, %v3133
      %v3136 = vshrl.u32 %v2972, 16
      %v3138 = vrot.slane %v3136, 2
      %v3139 = vshll.u32 %v2972, 16
      %v3141 = vrot.slane %v3139, 3
      %v3142 = vor.u32 %v3138, %v3141
      %v3143 = vsel %vm2973, %v3133, %v3142
      %v3146 = vunpack.c.l.b16 %v2968
      %v3147 = vunpack.c.l.b16 %v2969
      %v3148 = vpack.c.b16 %v3147, %v3146
      %v3151 = vsel %vm542, %v2990, 0
      %v3154 = vsel %vm542, %v2999, 0
      %v3157 = vsel %vm542, %v3008, 0
      %v3160 = vsel %vm542, %v3017, 0
      %v3163 = vsel %vm542, %v3026, 0
      %v3166 = vsel %vm542, %v3035, 0
      %v3169 = vsel %vm542, %v3044, 0
      %v3172 = vsel %vm542, %v3053, 0
      %v3175 = vsel %vm542, %v3062, 0
      %v3178 = vsel %vm542, %v3071, 0
      %v3181 = vsel %vm542, %v3080, 0
      %v3184 = vsel %vm542, %v3089, 0
      %v3187 = vsel %vm542, %v3098, 0
      %v3190 = vsel %vm542, %v3107, 0
      %v3193 = vsel %vm542, %v3116, 0
      %v3196 = vsel %vm542, %v3125, 0
      %v3199 = vsel %vm542, %v3134, 0
      %v3202 = vsel %vm542, %v3143, 0
      %3204 = vmatprep.subr.bf16.mxu0 0
      %3205 = vmatpush1.bf16.msra.mxu0 %v3148
      %3206 = vmatprep.subr.bf16.mxu0 0
      %3207 = vmatpush1.bf16.msra.mxu0 0
      %3208 = vmatprep.subr.bf16.mxu0 0
      %3209 = vmatpush1.bf16.msra.mxu0 0
      %3210 = vmatprep.subr.bf16.mxu0 0
      %3211 = vmatpush1.bf16.msra.mxu0 0
      %3212 = vmatprep.subr.bf16.mxu0 0
      %3213 = vmatpush1.bf16.msra.mxu0 0
      %3214 = vmatprep.subr.bf16.mxu0 0
      %3215 = vmatpush1.bf16.msra.mxu0 0
      %3216 = vmatprep.subr.bf16.mxu0 0
      %3217 = vmatpush1.bf16.msra.mxu0 0
      %3218 = vmatprep.subr.bf16.mxu0 0
      %3219 = vmatpush1.bf16.msra.mxu0 0
      %3220 = vmatprep.subr.bf16.mxu0 0
      %3221 = vmatpush1.bf16.msra.mxu0 0
      %3222 = vmatprep.subr.bf16.mxu0 0
      %3223 = vmatpush1.bf16.msra.mxu0 0
      %3224 = vmatprep.subr.bf16.mxu0 0
      %3225 = vmatpush1.bf16.msra.mxu0 0
      %3226 = vmatprep.subr.bf16.mxu0 0
      %3227 = vmatpush1.bf16.msra.mxu0 0
      %3228 = vmatprep.subr.bf16.mxu0 0
      %3229 = vmatpush1.bf16.msra.mxu0 0
      %3230 = vmatprep.subr.bf16.mxu0 0
      %3231 = vmatpush1.bf16.msra.mxu0 0
      %3232 = vmatprep.subr.bf16.mxu0 0
      %3233 = vmatpush1.bf16.msra.mxu0 0
      %3234 = vmatprep.subr.bf16.mxu0 0
      %3235 = vmatpush1.bf16.msra.mxu0 0
      %3236 = vmatprep.mubr.bf16.mxu0 0
      %3237 = vmatmul.mubr.bf16.gmra.mrb[0].mxu0 %v3151
      %v3238 = vpop.f32.mrb[0].mxu0
      %v3239 = vadd.f32 0.0, %v3238
      %v3240 = vpop.f32.mrb[0].mxu0
      %v3241 = vpop.f32.mrb[0].mxu0
      %v3242 = vadd.f32 0.0, %v3241
      %v3243 = vpop.f32.mrb[0].mxu0
      %3244 = vmatprep.mubr.bf16.mxu0 0
      %3245 = vmatmul.mubr.bf16.gmra.mrb[0].mxu0 %v3154
      %v3246 = vpop.f32.mrb[0].mxu0
      %v3247 = vadd.f32 0.0, %v3246
      %v3248 = vpop.f32.mrb[0].mxu0
      %v3249 = vpop.f32.mrb[0].mxu0
      %v3250 = vadd.f32 0.0, %v3249
      %v3251 = vpop.f32.mrb[0].mxu0
      %3252 = vmatprep.mubr.bf16.mxu0 0
      %3253 = vmatmul.mubr.bf16.gmra.mrb[0].mxu0 %v3157
      %v3254 = vpop.f32.mrb[0].mxu0
      %v3255 = vadd.f32 0.0, %v3254
      %v3256 = vpop.f32.mrb[0].mxu0
      %v3257 = vpop.f32.mrb[0].mxu0
      %v3258 = vadd.f32 0.0, %v3257
      %v3259 = vpop.f32.mrb[0].mxu0
      %3260 = vmatprep.mubr.bf16.mxu0 0
      %3261 = vmatmul.mubr.bf16.gmra.mrb[0].mxu0 %v3160
      %v3262 = vpop.f32.mrb[0].mxu0
      %v3263 = vadd.f32 0.0, %v3262
      %v3264 = vpop.f32.mrb[0].mxu0
      %v3265 = vpop.f32.mrb[0].mxu0
      %v3266 = vadd.f32 0.0, %v3265
      %v3267 = vpop.f32.mrb[0].mxu0
      %3268 = vmatprep.mubr.bf16.mxu0 0
      %3269 = vmatmul.mubr.bf16.gmra.mrb[0].mxu0 %v3163
      %v3270 = vpop.f32.mrb[0].mxu0
      %v3271 = vadd.f32 0.0, %v3270
      %v3272 = vpop.f32.mrb[0].mxu0
      %v3273 = vpop.f32.mrb[0].mxu0
      %v3274 = vadd.f32 0.0, %v3273
      %v3275 = vpop.f32.mrb[0].mxu0
      %3276 = vmatprep.mubr.bf16.mxu0 0
      %3277 = vmatmul.mubr.bf16.gmra.mrb[0].mxu0 %v3166
      %v3278 = vpop.f32.mrb[0].mxu0
      %v3279 = vadd.f32 0.0, %v3278
      %v3280 = vpop.f32.mrb[0].mxu0
      %v3281 = vpop.f32.mrb[0].mxu0
      %v3282 = vadd.f32 0.0, %v3281
      %v3283 = vpop.f32.mrb[0].mxu0
      %3284 = vmatprep.mubr.bf16.mxu0 0
      %3285 = vmatmul.mubr.bf16.gmra.mrb[0].mxu0 %v3169
      %v3286 = vpop.f32.mrb[0].mxu0
      %v3287 = vadd.f32 0.0, %v3286
      %v3288 = vpop.f32.mrb[0].mxu0
      %v3289 = vpop.f32.mrb[0].mxu0
      %v3290 = vadd.f32 0.0, %v3289
      %v3291 = vpop.f32.mrb[0].mxu0
      %3292 = vmatprep.mubr.bf16.mxu0 0
      %3293 = vmatmul.mubr.bf16.gmra.mrb[0].mxu0 %v3172
      %v3294 = vpop.f32.mrb[0].mxu0
      %v3295 = vadd.f32 0.0, %v3294
      %v3296 = vpop.f32.mrb[0].mxu0
      %v3297 = vpop.f32.mrb[0].mxu0
      %v3298 = vadd.f32 0.0, %v3297
      %v3299 = vpop.f32.mrb[0].mxu0
      %3300 = vmatprep.mubr.bf16.mxu0 0
      %3301 = vmatmul.mubr.bf16.gmra.mrb[0].mxu0 %v3175
      %v3302 = vpop.f32.mrb[0].mxu0
      %v3303 = vadd.f32 0.0, %v3302
      %v3304 = vpop.f32.mrb[0].mxu0
      %v3305 = vpop.f32.mrb[0].mxu0
      %v3306 = vadd.f32 0.0, %v3305
      %v3307 = vpop.f32.mrb[0].mxu0
      %3308 = vmatprep.mubr.bf16.mxu0 0
      %3309 = vmatmul.mubr.bf16.gmra.mrb[0].mxu0 %v3178
      %v3310 = vpop.f32.mrb[0].mxu0
      %v3311 = vadd.f32 0.0, %v3310
      %v3312 = vpop.f32.mrb[0].mxu0
      %v3313 = vpop.f32.mrb[0].mxu0
      %v3314 = vadd.f32 0.0, %v3313
      %v3315 = vpop.f32.mrb[0].mxu0
      %3316 = vmatprep.mubr.bf16.mxu0 0
      %3317 = vmatmul.mubr.bf16.gmra.mrb[0].mxu0 %v3181
      %v3318 = vpop.f32.mrb[0].mxu0
      %v3319 = vadd.f32 0.0, %v3318
      %v3320 = vpop.f32.mrb[0].mxu0
      %v3321 = vpop.f32.mrb[0].mxu0
      %v3322 = vadd.f32 0.0, %v3321
      %v3323 = vpop.f32.mrb[0].mxu0
      %3324 = vmatprep.mubr.bf16.mxu0 0
      %3325 = vmatmul.mubr.bf16.gmra.mrb[0].mxu0 %v3184
      %v3326 = vpop.f32.mrb[0].mxu0
      %v3327 = vadd.f32 0.0, %v3326
      %v3328 = vpop.f32.mrb[0].mxu0
      %v3329 = vpop.f32.mrb[0].mxu0
      %v3330 = vadd.f32 0.0, %v3329
      %v3331 = vpop.f32.mrb[0].mxu0
      %3332 = vmatprep.mubr.bf16.mxu0 0
      %3333 = vmatmul.mubr.bf16.gmra.mrb[0].mxu0 %v3187
      %v3334 = vpop.f32.mrb[0].mxu0
      %v3335 = vadd.f32 0.0, %v3334
      %v3336 = vpop.f32.mrb[0].mxu0
      %v3337 = vpop.f32.mrb[0].mxu0
      %v3338 = vadd.f32 0.0, %v3337
      %v3339 = vpop.f32.mrb[0].mxu0
      %3340 = vmatprep.mubr.bf16.mxu0 0
      %3341 = vmatmul.mubr.bf16.gmra.mrb[0].mxu0 %v3190
      %v3342 = vpop.f32.mrb[0].mxu0
      %v3343 = vadd.f32 0.0, %v3342
      %v3344 = vpop.f32.mrb[0].mxu0
      %v3345 = vpop.f32.mrb[0].mxu0
      %v3346 = vadd.f32 0.0, %v3345
      %v3347 = vpop.f32.mrb[0].mxu0
      %3348 = vmatprep.mubr.bf16.mxu0 0
      %3349 = vmatmul.mubr.bf16.gmra.mrb[0].mxu0 %v3193
      %v3350 = vpop.f32.mrb[0].mxu0
      %v3351 = vadd.f32 0.0, %v3350
      %v3352 = vpop.f32.mrb[0].mxu0
      %v3353 = vpop.f32.mrb[0].mxu0
      %v3354 = vadd.f32 0.0, %v3353
      %v3355 = vpop.f32.mrb[0].mxu0
      %3356 = vmatprep.mubr.bf16.mxu0 0
      %3357 = vmatmul.mubr.bf16.gmra.mrb[0].mxu0 %v3196
      %v3358 = vpop.f32.mrb[0].mxu0
      %v3359 = vadd.f32 0.0, %v3358
      %v3360 = vpop.f32.mrb[0].mxu0
      %v3361 = vpop.f32.mrb[0].mxu0
      %v3362 = vadd.f32 0.0, %v3361
      %v3363 = vpop.f32.mrb[0].mxu0
      %3364 = vmatprep.mubr.bf16.mxu0 0
      %3365 = vmatmul.mubr.bf16.gmra.mrb[0].mxu0 %v3199
      %v3366 = vpop.f32.mrb[0].mxu0
      %v3367 = vadd.f32 0.0, %v3366
      %v3368 = vpop.f32.mrb[0].mxu0
      %v3369 = vpop.f32.mrb[0].mxu0
      %v3370 = vadd.f32 0.0, %v3369
      %v3371 = vpop.f32.mrb[0].mxu0
      %3372 = vmatprep.mubr.bf16.mxu0 0
      %3373 = vmatmul.mubr.bf16.gmra.mrb[0].mxu0 %v3202
      %v3374 = vpop.f32.mrb[0].mxu0
      %v3375 = vadd.f32 0.0, %v3374
      %v3376 = vpop.f32.mrb[0].mxu0
      %v3377 = vpop.f32.mrb[0].mxu0
      %v3378 = vadd.f32 0.0, %v3377
      %v3379 = vpop.f32.mrb[0].mxu0
      %3380 = vdwg.mxu0
      %v3381 = vadd.f32 %v2930, %v3239
      %v3382 = vadd.f32 %v2931, %v3242
      %v3383 = vadd.f32 %v2932, %v3247
      %v3384 = vadd.f32 %v2933, %v3250
      %v3385 = vadd.f32 %v2934, %v3255
      %v3386 = vadd.f32 %v2935, %v3258
      %v3387 = vadd.f32 %v2936, %v3263
      %v3388 = vadd.f32 %v2937, %v3266
      %v3389 = vadd.f32 %v2938, %v3271
      %v3390 = vadd.f32 %v2939, %v3274
      %v3391 = vadd.f32 %v2940, %v3279
      %v3392 = vadd.f32 %v2941, %v3282
      %v3393 = vadd.f32 %v2942, %v3287
      %v3394 = vadd.f32 %v2943, %v3290
      %v3395 = vadd.f32 %v2944, %v3295
      %v3396 = vadd.f32 %v2945, %v3298
      %v3397 = vadd.f32 %v2946, %v3303
      %v3398 = vadd.f32 %v2947, %v3306
      %v3399 = vadd.f32 %v2948, %v3311
      %v3400 = vadd.f32 %v2949, %v3314
      %v3401 = vadd.f32 %v2950, %v3319
      %v3402 = vadd.f32 %v2951, %v3322
      %v3403 = vadd.f32 %v2952, %v3327
      %v3404 = vadd.f32 %v2953, %v3330
      %v3405 = vadd.f32 %v2954, %v3335
      %v3406 = vadd.f32 %v2955, %v3338
      %v3407 = vadd.f32 %v2956, %v3343
      %v3408 = vadd.f32 %v2957, %v3346
      %v3409 = vadd.f32 %v2958, %v3351
      %v3410 = vadd.f32 %v2959, %v3354
      %v3411 = vadd.f32 %v2960, %v3359
      %v3412 = vadd.f32 %v2961, %v3362
      %v3413 = vadd.f32 %v2962, %v3367
      %v3414 = vadd.f32 %v2963, %v3370
      %v3415 = vadd.f32 %v2964, %v3375
      %v3416 = vadd.f32 %v2965, %v3378
      %v3417 = vld [vmem:[%s235 + $0x10] sm:$0x8]
      %s3418 = scalar_lea.vmem %s1, 64
      %v3419 = vld [vmem:[%s3418] sm:$0xf]
      %v3420 = vld [vmem:[%s3418 + $0x4] sm:$0xf]
      %v3422 = vunpack.c.l.b16 %v3417
      %v3423 = vpack.c.b16 %v2601, %v3422
      %vm3424 = vcmask 1044480
      %v3425 = vrot.slane %v3423, 3
      %v3426 = vrot.slane %v2638, 3
      %v3427 = vsel %vm3424, %v3425, %v3426
      %v3428 = vrot.slane %v2639, 3
      %v3429 = vsel %vm3424, %v3426, %v3428
      %v3430 = vrot.slane %v2640, 3
      %v3431 = vsel %vm3424, %v3428, %v3430
      %v3432 = vrot.slane %v2641, 3
      %v3433 = vsel %vm3424, %v3430, %v3432
      %v3434 = vrot.slane %v2642, 3
      %v3435 = vsel %vm3424, %v3432, %v3434
      %v3436 = vrot.slane %v2643, 3
      %v3437 = vsel %vm3424, %v3434, %v3436
      %v3438 = vrot.slane %v2644, 3
      %v3439 = vsel %vm3424, %v3436, %v3438
      %v3440 = vrot.slane %v2645, 3
      %v3441 = vsel %vm3424, %v3438, %v3440
      %v3442 = vrot.slane %v2646, 3
      %v3443 = vsel %vm3424, %v3440, %v3442
      %v3444 = vrot.slane %v2647, 3
      %v3445 = vsel %vm3424, %v3442, %v3444
      %v3446 = vrot.slane %v2648, 3
      %v3447 = vsel %vm3424, %v3444, %v3446
      %v3448 = vrot.slane %v2649, 3
      %v3449 = vsel %vm3424, %v3446, %v3448
      %v3450 = vrot.slane %v2650, 3
      %v3451 = vsel %vm3424, %v3448, %v3450
      %v3452 = vrot.slane %v2651, 3
      %v3453 = vsel %vm3424, %v3450, %v3452
      %v3454 = vrot.slane %v2652, 3
      %v3455 = vsel %vm3424, %v3452, %v3454
      %v3456 = vrot.slane %v2653, 3
      %v3457 = vsel %vm3424, %v3454, %v3456
      %v3458 = vrot.slane %v2654, 3
      %v3459 = vsel %vm3424, %v3456, %v3458
      %v3460 = vrot.slane %v2972, 3
      %v3461 = vsel %vm3424, %v3458, %v3460
      %v3464 = vunpack.c.l.b16 %v3419
      %v3465 = vunpack.c.l.b16 %v3420
      %v3466 = vpack.c.b16 %v3465, %v3464
      %v3469 = vsel %vm542, %v3427, 0
      %v3472 = vsel %vm542, %v3429, 0
      %v3475 = vsel %vm542, %v3431, 0
      %v3478 = vsel %vm542, %v3433, 0
      %v3481 = vsel %vm542, %v3435, 0
      %v3484 = vsel %vm542, %v3437, 0
      %v3487 = vsel %vm542, %v3439, 0
      %v3490 = vsel %vm542, %v3441, 0
      %v3493 = vsel %vm542, %v3443, 0
      %v3496 = vsel %vm542, %v3445, 0
      %v3499 = vsel %vm542, %v3447, 0
      %v3502 = vsel %vm542, %v3449, 0
      %v3505 = vsel %vm542, %v3451, 0
      %v3508 = vsel %vm542, %v3453, 0
      %v3511 = vsel %vm542, %v3455, 0
      %v3514 = vsel %vm542, %v3457, 0
      %v3517 = vsel %vm542, %v3459, 0
      %v3520 = vsel %vm542, %v3461, 0
      %3522 = vmatprep.subr.bf16.mxu0 0
      %3523 = vmatpush1.bf16.msra.mxu0 %v3466
      %3524 = vmatprep.subr.bf16.mxu0 0
      %3525 = vmatpush1.bf16.msra.mxu0 0
      %3526 = vmatprep.subr.bf16.mxu0 0
      %3527 = vmatpush1.bf16.msra.mxu0 0
      %3528 = vmatprep.subr.bf16.mxu0 0
      %3529 = vmatpush1.bf16.msra.mxu0 0
      %3530 = vmatprep.subr.bf16.mxu0 0
      %3531 = vmatpush1.bf16.msra.mxu0 0
      %3532 = vmatprep.subr.bf16.mxu0 0
      %3533 = vmatpush1.bf16.msra.mxu0 0
      %3534 = vmatprep.subr.bf16.mxu0 0
      %3535 = vmatpush1.bf16.msra.mxu0 0
      %3536 = vmatprep.subr.bf16.mxu0 0
      %3537 = vmatpush1.bf16.msra.mxu0 0
      %3538 = vmatprep.subr.bf16.mxu0 0
      %3539 = vmatpush1.bf16.msra.mxu0 0
      %3540 = vmatprep.subr.bf16.mxu0 0
      %3541 = vmatpush1.bf16.msra.mxu0 0
      %3542 = vmatprep.subr.bf16.mxu0 0
      %3543 = vmatpush1.bf16.msra.mxu0 0
      %3544 = vmatprep.subr.bf16.mxu0 0
      %3545 = vmatpush1.bf16.msra.mxu0 0
      %3546 = vmatprep.subr.bf16.mxu0 0
      %3547 = vmatpush1.bf16.msra.mxu0 0
      %3548 = vmatprep.subr.bf16.mxu0 0
      %3549 = vmatpush1.bf16.msra.mxu0 0
      %3550 = vmatprep.subr.bf16.mxu0 0
      %3551 = vmatpush1.bf16.msra.mxu0 0
      %3552 = vmatprep.subr.bf16.mxu0 0
      %3553 = vmatpush1.bf16.msra.mxu0 0
      %3554 = vmatprep.mubr.bf16.mxu0 0
      %3555 = vmatmul.mubr.bf16.gmra.mrb[0].mxu0 %v3469
      %v3556 = vpop.f32.mrb[0].mxu0
      %v3557 = vadd.f32 0.0, %v3556
      %v3558 = vpop.f32.mrb[0].mxu0
      %v3559 = vpop.f32.mrb[0].mxu0
      %v3560 = vadd.f32 0.0, %v3559
      %v3561 = vpop.f32.mrb[0].mxu0
      %3562 = vmatprep.mubr.bf16.mxu0 0
      %3563 = vmatmul.mubr.bf16.gmra.mrb[0].mxu0 %v3472
      %v3564 = vpop.f32.mrb[0].mxu0
      %v3565 = vadd.f32 0.0, %v3564
      %v3566 = vpop.f32.mrb[0].mxu0
      %v3567 = vpop.f32.mrb[0].mxu0
      %v3568 = vadd.f32 0.0, %v3567
      %v3569 = vpop.f32.mrb[0].mxu0
      %3570 = vmatprep.mubr.bf16.mxu0 0
      %3571 = vmatmul.mubr.bf16.gmra.mrb[0].mxu0 %v3475
      %v3572 = vpop.f32.mrb[0].mxu0
      %v3573 = vadd.f32 0.0, %v3572
      %v3574 = vpop.f32.mrb[0].mxu0
      %v3575 = vpop.f32.mrb[0].mxu0
      %v3576 = vadd.f32 0.0, %v3575
      %v3577 = vpop.f32.mrb[0].mxu0
      %3578 = vmatprep.mubr.bf16.mxu0 0
      %3579 = vmatmul.mubr.bf16.gmra.mrb[0].mxu0 %v3478
      %v3580 = vpop.f32.mrb[0].mxu0
      %v3581 = vadd.f32 0.0, %v3580
      %v3582 = vpop.f32.mrb[0].mxu0
      %v3583 = vpop.f32.mrb[0].mxu0
      %v3584 = vadd.f32 0.0, %v3583
      %v3585 = vpop.f32.mrb[0].mxu0
      %3586 = vmatprep.mubr.bf16.mxu0 0
      %3587 = vmatmul.mubr.bf16.gmra.mrb[0].mxu0 %v3481
      %v3588 = vpop.f32.mrb[0].mxu0
      %v3589 = vadd.f32 0.0, %v3588
      %v3590 = vpop.f32.mrb[0].mxu0
      %v3591 = vpop.f32.mrb[0].mxu0
      %v3592 = vadd.f32 0.0, %v3591
      %v3593 = vpop.f32.mrb[0].mxu0
      %3594 = vmatprep.mubr.bf16.mxu0 0
      %3595 = vmatmul.mubr.bf16.gmra.mrb[0].mxu0 %v3484
      %v3596 = vpop.f32.mrb[0].mxu0
      %v3597 = vadd.f32 0.0, %v3596
      %v3598 = vpop.f32.mrb[0].mxu0
      %v3599 = vpop.f32.mrb[0].mxu0
      %v3600 = vadd.f32 0.0, %v3599
      %v3601 = vpop.f32.mrb[0].mxu0
      %3602 = vmatprep.mubr.bf16.mxu0 0
      %3603 = vmatmul.mubr.bf16.gmra.mrb[0].mxu0 %v3487
      %v3604 = vpop.f32.mrb[0].mxu0
      %v3605 = vadd.f32 0.0, %v3604
      %v3606 = vpop.f32.mrb[0].mxu0
      %v3607 = vpop.f32.mrb[0].mxu0
      %v3608 = vadd.f32 0.0, %v3607
      %v3609 = vpop.f32.mrb[0].mxu0
      %3610 = vmatprep.mubr.bf16.mxu0 0
      %3611 = vmatmul.mubr.bf16.gmra.mrb[0].mxu0 %v3490
      %v3612 = vpop.f32.mrb[0].mxu0
      %v3613 = vadd.f32 0.0, %v3612
      %v3614 = vpop.f32.mrb[0].mxu0
      %v3615 = vpop.f32.mrb[0].mxu0
      %v3616 = vadd.f32 0.0, %v3615
      %v3617 = vpop.f32.mrb[0].mxu0
      %3618 = vmatprep.mubr.bf16.mxu0 0
      %3619 = vmatmul.mubr.bf16.gmra.mrb[0].mxu0 %v3493
      %v3620 = vpop.f32.mrb[0].mxu0
      %v3621 = vadd.f32 0.0, %v3620
      %v3622 = vpop.f32.mrb[0].mxu0
      %v3623 = vpop.f32.mrb[0].mxu0
      %v3624 = vadd.f32 0.0, %v3623
      %v3625 = vpop.f32.mrb[0].mxu0
      %3626 = vmatprep.mubr.bf16.mxu0 0
      %3627 = vmatmul.mubr.bf16.gmra.mrb[0].mxu0 %v3496
      %v3628 = vpop.f32.mrb[0].mxu0
      %v3629 = vadd.f32 0.0, %v3628
      %v3630 = vpop.f32.mrb[0].mxu0
      %v3631 = vpop.f32.mrb[0].mxu0
      %v3632 = vadd.f32 0.0, %v3631
      %v3633 = vpop.f32.mrb[0].mxu0
      %3634 = vmatprep.mubr.bf16.mxu0 0
      %3635 = vmatmul.mubr.bf16.gmra.mrb[0].mxu0 %v3499
      %v3636 = vpop.f32.mrb[0].mxu0
      %v3637 = vadd.f32 0.0, %v3636
      %v3638 = vpop.f32.mrb[0].mxu0
      %v3639 = vpop.f32.mrb[0].mxu0
      %v3640 = vadd.f32 0.0, %v3639
      %v3641 = vpop.f32.mrb[0].mxu0
      %3642 = vmatprep.mubr.bf16.mxu0 0
      %3643 = vmatmul.mubr.bf16.gmra.mrb[0].mxu0 %v3502
      %v3644 = vpop.f32.mrb[0].mxu0
      %v3645 = vadd.f32 0.0, %v3644
      %v3646 = vpop.f32.mrb[0].mxu0
      %v3647 = vpop.f32.mrb[0].mxu0
      %v3648 = vadd.f32 0.0, %v3647
      %v3649 = vpop.f32.mrb[0].mxu0
      %3650 = vmatprep.mubr.bf16.mxu0 0
      %3651 = vmatmul.mubr.bf16.gmra.mrb[0].mxu0 %v3505
      %v3652 = vpop.f32.mrb[0].mxu0
      %v3653 = vadd.f32 0.0, %v3652
      %v3654 = vpop.f32.mrb[0].mxu0
      %v3655 = vpop.f32.mrb[0].mxu0
      %v3656 = vadd.f32 0.0, %v3655
      %v3657 = vpop.f32.mrb[0].mxu0
      %3658 = vmatprep.mubr.bf16.mxu0 0
      %3659 = vmatmul.mubr.bf16.gmra.mrb[0].mxu0 %v3508
      %v3660 = vpop.f32.mrb[0].mxu0
      %v3661 = vadd.f32 0.0, %v3660
      %v3662 = vpop.f32.mrb[0].mxu0
      %v3663 = vpop.f32.mrb[0].mxu0
      %v3664 = vadd.f32 0.0, %v3663
      %v3665 = vpop.f32.mrb[0].mxu0
      %3666 = vmatprep.mubr.bf16.mxu0 0
      %3667 = vmatmul.mubr.bf16.gmra.mrb[0].mxu0 %v3511
      %v3668 = vpop.f32.mrb[0].mxu0
      %v3669 = vadd.f32 0.0, %v3668
      %v3670 = vpop.f32.mrb[0].mxu0
      %v3671 = vpop.f32.mrb[0].mxu0
      %v3672 = vadd.f32 0.0, %v3671
      %v3673 = vpop.f32.mrb[0].mxu0
      %3674 = vmatprep.mubr.bf16.mxu0 0
      %3675 = vmatmul.mubr.bf16.gmra.mrb[0].mxu0 %v3514
      %v3676 = vpop.f32.mrb[0].mxu0
      %v3677 = vadd.f32 0.0, %v3676
      %v3678 = vpop.f32.mrb[0].mxu0
      %v3679 = vpop.f32.mrb[0].mxu0
      %v3680 = vadd.f32 0.0, %v3679
      %v3681 = vpop.f32.mrb[0].mxu0
      %3682 = vmatprep.mubr.bf16.mxu0 0
      %3683 = vmatmul.mubr.bf16.gmra.mrb[0].mxu0 %v3517
      %v3684 = vpop.f32.mrb[0].mxu0
      %v3685 = vadd.f32 0.0, %v3684
      %v3686 = vpop.f32.mrb[0].mxu0
      %v3687 = vpop.f32.mrb[0].mxu0
      %v3688 = vadd.f32 0.0, %v3687
      %v3689 = vpop.f32.mrb[0].mxu0
      %3690 = vmatprep.mubr.bf16.mxu0 0
      %3691 = vmatmul.mubr.bf16.gmra.mrb[0].mxu0 %v3520
      %v3692 = vpop.f32.mrb[0].mxu0
      %v3693 = vadd.f32 0.0, %v3692
      %v3694 = vpop.f32.mrb[0].mxu0
      %v3695 = vpop.f32.mrb[0].mxu0
      %v3696 = vadd.f32 0.0, %v3695
      %v3697 = vpop.f32.mrb[0].mxu0
      %3698 = vdwg.mxu0
      %v3699 = vadd.f32 %v3381, %v3557
      %v3700 = vadd.f32 %v3382, %v3560
      %v3701 = vadd.f32 %v3383, %v3565
      %v3702 = vadd.f32 %v3384, %v3568
      %v3703 = vadd.f32 %v3385, %v3573
      %v3704 = vadd.f32 %v3386, %v3576
      %v3705 = vadd.f32 %v3387, %v3581
      %v3706 = vadd.f32 %v3388, %v3584
      %v3707 = vadd.f32 %v3389, %v3589
      %v3708 = vadd.f32 %v3390, %v3592
      %v3709 = vadd.f32 %v3391, %v3597
      %v3710 = vadd.f32 %v3392, %v3600
      %v3711 = vadd.f32 %v3393, %v3605
      %v3712 = vadd.f32 %v3394, %v3608
      %v3713 = vadd.f32 %v3395, %v3613
      %v3714 = vadd.f32 %v3396, %v3616
      %v3715 = vadd.f32 %v3397, %v3621
      %v3716 = vadd.f32 %v3398, %v3624
      %v3717 = vadd.f32 %v3399, %v3629
      %v3718 = vadd.f32 %v3400, %v3632
      %v3719 = vadd.f32 %v3401, %v3637
      %v3720 = vadd.f32 %v3402, %v3640
      %v3721 = vadd.f32 %v3403, %v3645
      %v3722 = vadd.f32 %v3404, %v3648
      %v3723 = vadd.f32 %v3405, %v3653
      %v3724 = vadd.f32 %v3406, %v3656
      %v3725 = vadd.f32 %v3407, %v3661
      %v3726 = vadd.f32 %v3408, %v3664
      %v3727 = vadd.f32 %v3409, %v3669
      %v3728 = vadd.f32 %v3410, %v3672
      %v3729 = vadd.f32 %v3411, %v3677
      %v3730 = vadd.f32 %v3412, %v3680
      %v3731 = vadd.f32 %v3413, %v3685
      %v3732 = vadd.f32 %v3414, %v3688
      %v3733 = vadd.f32 %v3415, %v3693
      %v3734 = vadd.f32 %v3416, %v3696
      %v3735 = vld [vmem:[%s2] sm:$0x1]
      %v3737 = vlaneseq
      %v3738 = vshrl.u32 %v3737, 7
      %v3739 = vsub.s32 0, %v3738
      %v3740 = vrot.slane %v3735, %v3739
      %v3742 = vadd.f32 %v3699, %v3740
      %v3743 = vadd.f32 %v3700, %v3740
      %v3744 = vadd.f32 %v3701, %v3740
      %v3745 = vadd.f32 %v3702, %v3740
      %v3746 = vadd.f32 %v3703, %v3740
      %v3747 = vadd.f32 %v3704, %v3740
      %v3748 = vadd.f32 %v3705, %v3740
      %v3749 = vadd.f32 %v3706, %v3740
      %v3750 = vadd.f32 %v3707, %v3740
      %v3751 = vadd.f32 %v3708, %v3740
      %v3752 = vadd.f32 %v3709, %v3740
      %v3753 = vadd.f32 %v3710, %v3740
      %v3754 = vadd.f32 %v3711, %v3740
      %v3755 = vadd.f32 %v3712, %v3740
      %v3756 = vadd.f32 %v3713, %v3740
      %v3757 = vadd.f32 %v3714, %v3740
      %v3758 = vadd.f32 %v3715, %v3740
      %v3759 = vadd.f32 %v3716, %v3740
      %v3760 = vadd.f32 %v3717, %v3740
      %v3761 = vadd.f32 %v3718, %v3740
      %v3762 = vadd.f32 %v3719, %v3740
      %v3763 = vadd.f32 %v3720, %v3740
      %v3764 = vadd.f32 %v3721, %v3740
      %v3765 = vadd.f32 %v3722, %v3740
      %v3766 = vadd.f32 %v3723, %v3740
      %v3767 = vadd.f32 %v3724, %v3740
      %v3768 = vadd.f32 %v3725, %v3740
      %v3769 = vadd.f32 %v3726, %v3740
      %v3770 = vadd.f32 %v3727, %v3740
      %v3771 = vadd.f32 %v3728, %v3740
      %v3772 = vadd.f32 %v3729, %v3740
      %v3773 = vadd.f32 %v3730, %v3740
      %v3774 = vadd.f32 %v3731, %v3740
      %v3775 = vadd.f32 %v3732, %v3740
      %v3776 = vadd.f32 %v3733, %v3740
      %v3777 = vadd.f32 %v3734, %v3740
      %v3778 = vmax.f32 %v3742, 0.0
      %v3779 = vmax.f32 %v3743, 0.0
      %v3780 = vmax.f32 %v3744, 0.0
      %v3781 = vmax.f32 %v3745, 0.0
      %v3782 = vmax.f32 %v3746, 0.0
      %v3783 = vmax.f32 %v3747, 0.0
      %v3784 = vmax.f32 %v3748, 0.0
      %v3785 = vmax.f32 %v3749, 0.0
      %v3786 = vmax.f32 %v3750, 0.0
      %v3787 = vmax.f32 %v3751, 0.0
      %v3788 = vmax.f32 %v3752, 0.0
      %v3789 = vmax.f32 %v3753, 0.0
      %v3790 = vmax.f32 %v3754, 0.0
      %v3791 = vmax.f32 %v3755, 0.0
      %v3792 = vmax.f32 %v3756, 0.0
      %v3793 = vmax.f32 %v3757, 0.0
      %v3794 = vmax.f32 %v3758, 0.0
      %v3795 = vmax.f32 %v3759, 0.0
      %v3796 = vmax.f32 %v3760, 0.0
      %v3797 = vmax.f32 %v3761, 0.0
      %v3798 = vmax.f32 %v3762, 0.0
      %v3799 = vmax.f32 %v3763, 0.0
      %v3800 = vmax.f32 %v3764, 0.0
      %v3801 = vmax.f32 %v3765, 0.0
      %v3802 = vmax.f32 %v3766, 0.0
      %v3803 = vmax.f32 %v3767, 0.0
      %v3804 = vmax.f32 %v3768, 0.0
      %v3805 = vmax.f32 %v3769, 0.0
      %v3806 = vmax.f32 %v3770, 0.0
      %v3807 = vmax.f32 %v3771, 0.0
      %v3808 = vmax.f32 %v3772, 0.0
      %v3809 = vmax.f32 %v3773, 0.0
      %v3810 = vmax.f32 %v3774, 0.0
      %v3811 = vmax.f32 %v3775, 0.0
      %v3812 = vmax.f32 %v3776, 0.0
      %v3813 = vmax.f32 %v3777, 0.0
      %v3814 = vlaneseq
      %v3815 = vand.u32 %v3814, 127
      %v3816 = vadd.s32 %v3815, 128
      %v3817 = vadd.s32 %v3815, 256
      %vm3818 = vcmp.lt.s32.totalorder %v3815, 0
      %v3819 = vsub.s32 0, %v3815
      %v3820 = vsel %vm3818, %v3819, %v3815
      %v3821 = vmul.u32.u64.compose %v3820, 3817748708
      %v3822 = vextract.low.u32 %v3821
      %v3823 = vextract.high.u32 %v3821
      %v3824 = vshrl.u32 %v3823, 4
      %v3825 = vmul.u32 %v3824, 18
      %v3826 = vsub.s32 %v3820, %v3825
      %v3827 = vsub.s32 0, %v3826
      %v3828 = vsel %vm3818, %v3827, %v3826
      %vm3829 = vcmp.lt.s32.totalorder %v3816, 0
      %v3830 = vsub.s32 0, %v3816
      %v3831 = vsel %vm3829, %v3830, %v3816
      %v3832 = vmul.u32.u64.compose %v3831, 3817748708
      %v3833 = vextract.low.u32 %v3832
      %v3834 = vextract.high.u32 %v3832
      %v3835 = vshrl.u32 %v3834, 4
      %v3836 = vmul.u32 %v3835, 18
      %v3837 = vsub.s32 %v3831, %v3836
      %v3838 = vsub.s32 0, %v3837
      %v3839 = vsel %vm3829, %v3838, %v3837
      %vm3840 = vcmp.lt.s32.totalorder %v3817, 0
      %v3841 = vsub.s32 0, %v3817
      %v3842 = vsel %vm3840, %v3841, %v3817
      %v3843 = vmul.u32.u64.compose %v3842, 3817748708
      %v3844 = vextract.low.u32 %v3843
      %v3845 = vextract.high.u32 %v3843
      %v3846 = vshrl.u32 %v3845, 4
      %v3847 = vmul.u32 %v3846, 18
      %v3848 = vsub.s32 %v3842, %v3847
      %v3849 = vsub.s32 0, %v3848
      %v3850 = vsel %vm3840, %v3849, %v3848
      %vm3851 = vcmp.ne.s32.totalorder %v3828, 0
      %vm3852 = vcmp.ne.s32.totalorder %v3839, 0
      %vm3853 = vcmp.ne.s32.totalorder %v3850, 0
      %vm3854 = vcmp.lt.s32.totalorder %v3828, 0
      %vm3855 = vcmp.lt.s32.totalorder %v3839, 0
      %vm3856 = vcmp.lt.s32.totalorder %v3850, 0
      %vm3857 = vmand %vm3854, %vm3851
      %vm3858 = vmand %vm3855, %vm3852
      %vm3859 = vmand %vm3856, %vm3853
      %v3860 = vadd.s32 %v3828, 18
      %v3861 = vadd.s32 %v3839, 18
      %v3862 = vadd.s32 %v3850, 18
      %v3863 = vsel %vm3857, %v3860, %v3828
      %v3864 = vsel %vm3858, %v3861, %v3839
      %v3865 = vsel %vm3859, %v3862, %v3850
      %vm3866 = vcmp.lt.s32.totalorder %v3863, 16
      %vm3867 = vcmp.lt.s32.totalorder %v3864, 16
      %vm3868 = vcmp.lt.s32.totalorder %v3865, 16
      %s3869 = smul.u32 %s21, 16
      %s3870 = ssub.s32 16, %s3869
      %s3871 = smul.u32 %s3870, 18
      %v3872 = vstv %s3871
      %vm3873 = vcmp.lt.s32.totalorder %v3815, %v3872
      %vm3874 = vcmp.lt.s32.totalorder %v3816, %v3872
      %vm3875 = vcmp.lt.s32.totalorder %v3817, %v3872
      %vm3876 = vmand %vm3866, %vm3873
      %vm3877 = vmand %vm3867, %vm3874
      %vm3878 = vmand %vm3868, %vm3875
      %v3879 = vsel %vm3876, 1, 0
      %v3880 = vsel %vm3877, 1, 0
      %v3881 = vsel %vm3878, 1, 0
      %v3882 = vcvt.s32.f32 %v3879
      %v3883 = vcvt.s32.f32 %v3880
      %v3884 = vcvt.s32.f32 %v3881
      %vm3885 = vcmask 261120
      %v3887 = vsel %vm3885, %v3884, 0
      %3889 = vmatprep.subr.mxu0 0.0
      %3890 = vmatpush1.msra.mxu0 %v3778
      %3891 = vmatprep.subr.mxu0 0.0
      %3892 = vmatpush1.msra.mxu0 %v3779
      %3893 = vmatprep.subr.mxu0 0.0
      %3894 = vmatpush1.msra.mxu0 %v3780
      %3895 = vmatprep.subr.mxu0 0.0
      %3896 = vmatpush1.msra.mxu0 %v3781
      %3897 = vmatprep.subr.mxu0 0.0
      %3898 = vmatpush1.msra.mxu0 %v3782
      %3899 = vmatprep.subr.mxu0 0.0
      %3900 = vmatpush1.msra.mxu0 %v3783
      %3901 = vmatprep.subr.mxu0 0.0
      %3902 = vmatpush1.msra.mxu0 %v3784
      %3903 = vmatprep.subr.mxu0 0.0
      %3904 = vmatpush1.msra.mxu0 %v3785
      %3905 = vmatprep.subr.mxu0 0.0
      %3906 = vmatpush1.msra.mxu0 %v3786
      %3907 = vmatprep.subr.mxu0 0.0
      %3908 = vmatpush1.msra.mxu0 %v3787
      %3909 = vmatprep.subr.mxu0 0.0
      %3910 = vmatpush1.msra.mxu0 %v3788
      %3911 = vmatprep.subr.mxu0 0.0
      %3912 = vmatpush1.msra.mxu0 %v3789
      %3913 = vmatprep.subr.mxu0 0.0
      %3914 = vmatpush1.msra.mxu0 %v3790
      %3915 = vmatprep.subr.mxu0 0.0
      %3916 = vmatpush1.msra.mxu0 %v3791
      %3917 = vmatprep.subr.mxu0 0.0
      %3918 = vmatpush1.msra.mxu0 %v3792
      %3919 = vmatprep.subr.mxu0 0.0
      %3920 = vmatpush1.msra.mxu0 %v3793
      %3921 = vmatprep.subr.mxu0 0.0
      %3922 = vmatpush1.msra.mxu0 %v3794
      %3923 = vmatprep.subr.mxu0 0.0
      %3924 = vmatpush1.msra.mxu0 %v3795
      %3925 = vmatprep.subr.mxu0 0.0
      %3926 = vmatpush1.msra.mxu0 %v3796
      %3927 = vmatprep.subr.mxu0 0.0
      %3928 = vmatpush1.msra.mxu0 %v3797
      %3929 = vmatprep.subr.mxu0 0.0
      %3930 = vmatpush1.msra.mxu0 %v3798
      %3931 = vmatprep.subr.mxu0 0.0
      %3932 = vmatpush1.msra.mxu0 %v3799
      %3933 = vmatprep.subr.mxu0 0.0
      %3934 = vmatpush1.msra.mxu0 %v3800
      %3935 = vmatprep.subr.mxu0 0.0
      %3936 = vmatpush1.msra.mxu0 %v3801
      %3937 = vmatprep.subr.mxu0 0.0
      %3938 = vmatpush1.msra.mxu0 %v3802
      %3939 = vmatprep.subr.mxu0 0.0
      %3940 = vmatpush1.msra.mxu0 %v3803
      %3941 = vmatprep.subr.mxu0 0.0
      %3942 = vmatpush1.msra.mxu0 %v3804
      %3943 = vmatprep.subr.mxu0 0.0
      %3944 = vmatpush1.msra.mxu0 %v3805
      %3945 = vmatprep.subr.mxu0 0.0
      %3946 = vmatpush1.msra.mxu0 %v3806
      %3947 = vmatprep.subr.mxu0 0.0
      %3948 = vmatpush1.msra.mxu0 %v3807
      %3949 = vmatprep.subr.mxu0 0.0
      %3950 = vmatpush1.msra.mxu0 %v3808
      %3951 = vmatprep.subr.mxu0 0.0
      %3952 = vmatpush1.msra.mxu0 %v3809
      %3953 = vmatprep.mubr.f32.mxu0 %v3883
      %3954 = vmatmul.mubr.f32.gmra.mrb[0].mxu0 %v3882
      %v3955 = vpop.f32.mrb[0].mxu0
      %v3956 = vadd.f32 0.0, %v3955
      %v3957 = vpop.f32.mrb[0].mxu0
      %3958 = vdwg.mxu0
      %3959 = vmatprep.subr.mxu0 0.0
      %3960 = vmatpush1.msra.mxu0 %v3810
      %3961 = vmatprep.subr.mxu0 0.0
      %3962 = vmatpush1.msra.mxu0 %v3811
      %3963 = vmatprep.subr.mxu0 0.0
      %3964 = vmatpush1.msra.mxu0 %v3812
      %3965 = vmatprep.subr.mxu0 0.0
      %3966 = vmatpush1.msra.mxu0 %v3813
      %3967 = vmatprep.subr.mxu0 0.0
      %3968 = vmatpush1.msra.mxu0 0.0
      %3969 = vmatprep.subr.mxu0 0.0
      %3970 = vmatpush1.msra.mxu0 0.0
      %3971 = vmatprep.subr.mxu0 0.0
      %3972 = vmatpush1.msra.mxu0 0.0
      %3973 = vmatprep.subr.mxu0 0.0
      %3974 = vmatpush1.msra.mxu0 0.0
      %3975 = vmatprep.subr.mxu0 0.0
      %3976 = vmatpush1.msra.mxu0 0.0
      %3977 = vmatprep.subr.mxu0 0.0
      %3978 = vmatpush1.msra.mxu0 0.0
      %3979 = vmatprep.subr.mxu0 0.0
      %3980 = vmatpush1.msra.mxu0 0.0
      %3981 = vmatprep.subr.mxu0 0.0
      %3982 = vmatpush1.msra.mxu0 0.0
      %3983 = vmatprep.subr.mxu0 0.0
      %3984 = vmatpush1.msra.mxu0 0.0
      %3985 = vmatprep.subr.mxu0 0.0
      %3986 = vmatpush1.msra.mxu0 0.0
      %3987 = vmatprep.subr.mxu0 0.0
      %3988 = vmatpush1.msra.mxu0 0.0
      %3989 = vmatprep.subr.mxu0 0.0
      %3990 = vmatpush1.msra.mxu0 0.0
      %3991 = vmatprep.subr.mxu0 0.0
      %3992 = vmatpush1.msra.mxu0 0.0
      %3993 = vmatprep.subr.mxu0 0.0
      %3994 = vmatpush1.msra.mxu0 0.0
      %3995 = vmatprep.subr.mxu0 0.0
      %3996 = vmatpush1.msra.mxu0 0.0
      %3997 = vmatprep.subr.mxu0 0.0
      %3998 = vmatpush1.msra.mxu0 0.0
      %3999 = vmatprep.subr.mxu0 0.0
      %4000 = vmatpush1.msra.mxu0 0.0
      %4001 = vmatprep.subr.mxu0 0.0
      %4002 = vmatpush1.msra.mxu0 0.0
      %4003 = vmatprep.subr.mxu0 0.0
      %4004 = vmatpush1.msra.mxu0 0.0
      %4005 = vmatprep.subr.mxu0 0.0
      %4006 = vmatpush1.msra.mxu0 0.0
      %4007 = vmatprep.subr.mxu0 0.0
      %4008 = vmatpush1.msra.mxu0 0.0
      %4009 = vmatprep.subr.mxu0 0.0
      %4010 = vmatpush1.msra.mxu0 0.0
      %4011 = vmatprep.subr.mxu0 0.0
      %4012 = vmatpush1.msra.mxu0 0.0
      %4013 = vmatprep.subr.mxu0 0.0
      %4014 = vmatpush1.msra.mxu0 0.0
      %4015 = vmatprep.subr.mxu0 0.0
      %4016 = vmatpush1.msra.mxu0 0.0
      %4017 = vmatprep.subr.mxu0 0.0
      %4018 = vmatpush1.msra.mxu0 0.0
      %4019 = vmatprep.subr.mxu0 0.0
      %4020 = vmatpush1.msra.mxu0 0.0
      %4021 = vmatprep.subr.mxu0 0.0
      %4022 = vmatpush1.msra.mxu0 0.0
      %4023 = vmatprep.mubr.f32.mxu0 0.0
      %4024 = vmatmul.mubr.f32.gmra.mrb[0].mxu0 %v3887
      %v4025 = vpop.f32.mrb[0].mxu0
      %v4026 = vadd.f32 %v3956, %v4025
      %v4027 = vpop.f32.mrb[0].mxu0
      %4028 = vdwg.mxu0
      %vm4029 = vcmask 122880
      %4030 = vst.msk [vmem:[%s250] sm:$0x1] %vm4029, %v4026
      %v4031 = vpack.c.bf16 %v3779, %v3778
      %v4032 = vpack.c.bf16 %v3781, %v3780
      %v4033 = vpack.c.bf16 %v3783, %v3782
      %v4034 = vpack.c.bf16 %v3785, %v3784
      %v4035 = vpack.c.bf16 %v3787, %v3786
      %v4036 = vpack.c.bf16 %v3789, %v3788
      %v4037 = vpack.c.bf16 %v3791, %v3790
      %v4038 = vpack.c.bf16 %v3793, %v3792
      %v4039 = vpack.c.bf16 %v3795, %v3794
      %v4040 = vpack.c.bf16 %v3797, %v3796
      %v4041 = vpack.c.bf16 %v3799, %v3798
      %v4042 = vpack.c.bf16 %v3801, %v3800
      %v4043 = vpack.c.bf16 %v3803, %v3802
      %v4044 = vpack.c.bf16 %v3805, %v3804
      %v4045 = vpack.c.bf16 %v3807, %v3806
      %v4046 = vpack.c.bf16 %v3809, %v3808
      %v4047 = vpack.c.bf16 %v3811, %v3810
      %v4048 = vpack.c.bf16 %v3813, %v3812
      %v4067 = vunpack.c.l.b16 %v4031
      %v4068 = vunpack.c.h.b16 %v4031
      %v4069 = vunpack.c.l.b16 %v4032
      %v4070 = vunpack.c.h.b16 %v4032
      %v4071 = vunpack.c.l.b16 %v4033
      %v4072 = vunpack.c.h.b16 %v4033
      %v4073 = vunpack.c.l.b16 %v4034
      %v4074 = vunpack.c.h.b16 %v4034
      %v4075 = vunpack.c.l.b16 %v4035
      %v4076 = vunpack.c.h.b16 %v4035
      %v4077 = vunpack.c.l.b16 %v4036
      %v4078 = vunpack.c.h.b16 %v4036
      %v4079 = vunpack.c.l.b16 %v4037
      %v4080 = vunpack.c.h.b16 %v4037
      %v4081 = vunpack.c.l.b16 %v4038
      %v4082 = vunpack.c.h.b16 %v4038
      %v4083 = vunpack.c.l.b16 %v4039
      %v4084 = vunpack.c.h.b16 %v4039
      %v4085 = vunpack.c.l.b16 %v4040
      %v4086 = vunpack.c.h.b16 %v4040
      %v4087 = vunpack.c.l.b16 %v4041
      %v4088 = vunpack.c.h.b16 %v4041
      %v4089 = vunpack.c.l.b16 %v4042
      %v4090 = vunpack.c.h.b16 %v4042
      %v4091 = vunpack.c.l.b16 %v4043
      %v4092 = vunpack.c.h.b16 %v4043
      %v4093 = vunpack.c.l.b16 %v4044
      %v4094 = vunpack.c.h.b16 %v4044
      %v4095 = vunpack.c.l.b16 %v4045
      %v4096 = vunpack.c.h.b16 %v4045
      %v4097 = vunpack.c.l.b16 %v4046
      %v4098 = vunpack.c.h.b16 %v4046
      %v4099 = vunpack.c.l.b16 %v4047
      %v4100 = vunpack.c.h.b16 %v4047
      %v4101 = vunpack.c.l.b16 %v4048
      %v4102 = vunpack.c.h.b16 %v4048
      %v4103 = vpack.c.b16 %v4067, %v4067
      %v4104 = vpack.c.b16 %v4068, %v4068
      %v4105 = vpack.c.b16 %v4069, %v4069
      %v4106 = vpack.c.b16 %v4070, %v4070
      %v4107 = vpack.c.b16 %v4071, %v4071
      %v4108 = vpack.c.b16 %v4072, %v4072
      %v4109 = vpack.c.b16 %v4073, %v4073
      %v4110 = vpack.c.b16 %v4074, %v4074
      %v4111 = vpack.c.b16 %v4075, %v4075
      %v4112 = vpack.c.b16 %v4076, %v4076
      %v4113 = vpack.c.b16 %v4077, %v4077
      %v4114 = vpack.c.b16 %v4078, %v4078
      %v4115 = vpack.c.b16 %v4079, %v4079
      %v4116 = vpack.c.b16 %v4080, %v4080
      %v4117 = vpack.c.b16 %v4081, %v4081
      %v4118 = vpack.c.b16 %v4082, %v4082
      %v4119 = vpack.c.b16 %v4083, %v4083
      %v4120 = vpack.c.b16 %v4084, %v4084
      %v4121 = vpack.c.b16 %v4085, %v4085
      %v4122 = vpack.c.b16 %v4086, %v4086
      %v4123 = vpack.c.b16 %v4087, %v4087
      %v4124 = vpack.c.b16 %v4088, %v4088
      %v4125 = vpack.c.b16 %v4089, %v4089
      %v4126 = vpack.c.b16 %v4090, %v4090
      %v4127 = vpack.c.b16 %v4091, %v4091
      %v4128 = vpack.c.b16 %v4092, %v4092
      %v4129 = vpack.c.b16 %v4093, %v4093
      %v4130 = vpack.c.b16 %v4094, %v4094
      %v4131 = vpack.c.b16 %v4095, %v4095
      %v4132 = vpack.c.b16 %v4096, %v4096
      %v4133 = vpack.c.b16 %v4097, %v4097
      %v4134 = vpack.c.b16 %v4098, %v4098
      %v4135 = vpack.c.b16 %v4099, %v4099
      %v4136 = vpack.c.b16 %v4100, %v4100
      %v4137 = vpack.c.b16 %v4101, %v4101
      %v4138 = vpack.c.b16 %v4102, %v4102
      %vm4175 = vcmask 125952
      %4176 = vst.msk [vmem:[%s244] sm:$0xf] %vm4175, %v4103
      %4177 = vst.msk [vmem:[%s244 + $0x4] sm:$0xf] %vm4175, %v4104
      %4178 = vst.msk [vmem:[%s244 + $0x8] sm:$0xf] %vm4175, %v4105
      %4179 = vst.msk [vmem:[%s244 + $0xc] sm:$0xf] %vm4175, %v4106
      %4180 = vst.msk [vmem:[%s244 + $0x10] sm:$0xf] %vm4175, %v4107
      %4181 = vst.msk [vmem:[%s244 + $0x14] sm:$0xf] %vm4175, %v4108
      %4182 = vst.msk [vmem:[%s244 + $0x18] sm:$0xf] %vm4175, %v4109
      %4183 = vst.msk [vmem:[%s244 + $0x1c] sm:$0xf] %vm4175, %v4110
      %4184 = vst.msk [vmem:[%s244 + $0x20] sm:$0xf] %vm4175, %v4111
      %4185 = vst.msk [vmem:[%s244 + $0x24] sm:$0xf] %vm4175, %v4112
      %4186 = vst.msk [vmem:[%s244 + $0x28] sm:$0xf] %vm4175, %v4113
      %4187 = vst.msk [vmem:[%s244 + $0x2c] sm:$0xf] %vm4175, %v4114
      %4188 = vst.msk [vmem:[%s244 + $0x30] sm:$0xf] %vm4175, %v4115
      %4189 = vst.msk [vmem:[%s244 + $0x34] sm:$0xf] %vm4175, %v4116
      %4190 = vst.msk [vmem:[%s244 + $0x38] sm:$0xf] %vm4175, %v4117
      %4191 = vst.msk [vmem:[%s244 + $0x3c] sm:$0xf] %vm4175, %v4118
      %4192 = vst.msk [vmem:[%s244 + $0x40] sm:$0xf] %vm4175, %v4119
      %4193 = vst.msk [vmem:[%s244 + $0x44] sm:$0xf] %vm4175, %v4120
      %4194 = vst.msk [vmem:[%s244 + $0x48] sm:$0xf] %vm4175, %v4121
      %4195 = vst.msk [vmem:[%s244 + $0x4c] sm:$0xf] %vm4175, %v4122
      %4196 = vst.msk [vmem:[%s244 + $0x50] sm:$0xf] %vm4175, %v4123
      %4197 = vst.msk [vmem:[%s244 + $0x54] sm:$0xf] %vm4175, %v4124
      %4198 = vst.msk [vmem:[%s244 + $0x58] sm:$0xf] %vm4175, %v4125
      %4199 = vst.msk [vmem:[%s244 + $0x5c] sm:$0xf] %vm4175, %v4126
      %4200 = vst.msk [vmem:[%s244 + $0x60] sm:$0xf] %vm4175, %v4127
      %4201 = vst.msk [vmem:[%s244 + $0x64] sm:$0xf] %vm4175, %v4128
      %4202 = vst.msk [vmem:[%s244 + $0x68] sm:$0xf] %vm4175, %v4129
      %4203 = vst.msk [vmem:[%s244 + $0x6c] sm:$0xf] %vm4175, %v4130
      %4204 = vst.msk [vmem:[%s244 + $0x70] sm:$0xf] %vm4175, %v4131
      %4205 = vst.msk [vmem:[%s244 + $0x74] sm:$0xf] %vm4175, %v4132
      %4206 = vst.msk [vmem:[%s244 + $0x78] sm:$0xf] %vm4175, %v4133
      %4207 = vst.msk [vmem:[%s244 + $0x7c] sm:$0xf] %vm4175, %v4134
      %4208 = vst.msk [vmem:[%s244 + $0x80] sm:$0xf] %vm4175, %v4135
      %4209 = vst.msk [vmem:[%s244 + $0x84] sm:$0xf] %vm4175, %v4136
      %4210 = vst.msk [vmem:[%s244 + $0x88] sm:$0xf] %vm4175, %v4137
      %4211 = vst.msk [vmem:[%s244 + $0x8c] sm:$0xf] %vm4175, %v4138
      %p4212 = scmp.lt.s32.totalorder %s20, 1
      %s4213 = scalar_select %p4212, %s20, 1
      %p4214 = scmp.lt.s32.totalorder %s21, 0
      %s4215 = scalar_select %p4214, %s21, 0
      %s4216 = smul.addr %s4215, 36
      %s4217 = smul.addr %s4213, 36
      %s4218 = sadd.s32 %s4216, %s4217
      %s4219 = smul.addr %s4218, 4
      %s4220 = scalar_lea.vmem %s3, %s4219
      %p4221 = scmp.lt.s32.totalorder %s20, 1
      %s4222 = scalar_select %p4221, %s20, 1
      %p4223 = scmp.lt.s32.totalorder %s21, 0
      %s4224 = scalar_select %p4223, %s21, 0
      %s4225 = sadd.s32 %s4224, %s4222
      %s4226 = scalar_lea.vmem %s4, %s4225
      // Predicated region
      $region33: #{efm_forward.2} parent=31 // pred_check
        %p4227 = pneg %p118
      $region34: #{efm_forward.2} parent=31 // pred_check_branch
        %4229 = sbr.rel (%p4227) target = $region36
      $region35: #{efm_forward.2} parent=31 // pred_region
        _
      $region36: #{efm_forward.2} parent=31 // pred_fallthru
        _
      // Predicated region
      $region37: #{efm_forward.2} parent=31 // pred_check
        %p4230 = pneg %p146
      $region38: #{efm_forward.2} parent=31 // pred_check_branch
        %4232 = sbr.rel (%p4230) target = $region40
      $region39: #{efm_forward.2} parent=31 // pred_region
        _
      $region40: #{efm_forward.2} parent=31 // pred_fallthru
        _
    $region32: #{efm_forward.2} parent=5 // pred_fallthru
      _
    %p4233 = scmp.le.s32.totalorder 2, %s11
    // Predicated region
    $region41: #{efm_forward.2} parent=5 // pred_check
      %p4234 = pneg %p4233
    $region42: #{efm_forward.2} parent=5 // pred_check_branch
      %4236 = sbr.rel (%p4234) target = $region44
    $region43: #{efm_forward.2} parent=5 // pred_region
      %s4237 = ssub.s32 %s11, 2
      // Predicated region
      $region45: #{efm_forward.2} parent=43 // pred_check
        %p4238 = pneg %p124
      $region46: #{efm_forward.2} parent=43 // pred_check_branch
        %4240 = sbr.rel (%p4238) target = $region48
      $region47: #{efm_forward.2} parent=43 // pred_region
        %p4241 = scmp.lt.s32.totalorder %s22, 1
        %s4242 = scalar_select %p4241, %s22, 1
        %p4243 = scmp.lt.s32.totalorder %s23, 0
        %s4244 = scalar_select %p4243, %s23, 0
        %s4245 = smul.addr %s4244, 36
        %s4246 = smul.addr %s4242, 36
        %s4247 = sadd.s32 %s4245, %s4246
        %s4248 = smul.addr %s4247, 4
        %s4249 = scalar_lea.vmem %s3, %s4248
      $region48: #{efm_forward.2} parent=43 // pred_fallthru
        _
      // Predicated region
      $region49: #{efm_forward.2} parent=43 // pred_check
        %p4250 = pneg %p152
      $region50: #{efm_forward.2} parent=43 // pred_check_branch
        %4252 = sbr.rel (%p4250) target = $region52
      $region51: #{efm_forward.2} parent=43 // pred_region
        %p4253 = scmp.lt.s32.totalorder %s22, 1
        %s4254 = scalar_select %p4253, %s22, 1
        %p4255 = scmp.lt.s32.totalorder %s23, 0
        %s4256 = scalar_select %p4255, %s23, 0
        %s4257 = sadd.s32 %s4256, %s4254
        %s4258 = scalar_lea.vmem %s4, %s4257
      $region52: #{efm_forward.2} parent=43 // pred_fallthru
        _
    $region44: #{efm_forward.2} parent=5 // pred_fallthru
      _
  $region6: #{efm_forward.2} parent=0 // loop_footer
    %s15 = sadd.s32 1, %s11
  $region7: #{efm_forward.2} parent=0 // loop_footer_branch
    %10 = sbr.rel target = $region3
  $region8: #{efm_forward.2} parent=0 // loop_exit
    _

</llo_original>
